<compile_context>
chip_gen: v6e
topology: v6e:2x2x1
jax: 0.10.0
libtpu: 0.0.40
codegen_flags: <defaults>
</compile_context>

<pallas_src>
import functools
import numpy as np

import jax
import jax.numpy as jnp
from jax.experimental import pallas as pl
from jax.experimental.pallas import tpu as pltpu

EPS = 1e-5


# ------------------------------ Pallas kernels ------------------------------

def _header_kernel(xblk_ref, w_ref, g_ref, b_ref, head_ref, ss_ref, *,
                   inv_n, eps):
    # Header ConvTranspose2d(latent, hidden, k=4) on a 1x1 latent == matmul,
    # fused with the BatchNorm batch-statistics computation ([scale; shift]).
    # The affine + ReLU is applied by the consumer (first core conv kernel).
    z = jnp.dot(xblk_ref[...], w_ref[...],
                preferred_element_type=jnp.float32)        # [N*16, hidden]
    head_ref[...] = z
    m = jnp.sum(z, axis=0, keepdims=True) * inv_n
    var = jnp.sum(z * z, axis=0, keepdims=True) * inv_n - m * m
    scale = g_ref[...] * jax.lax.rsqrt(var + eps)
    ss_ref[0:1, :] = scale
    ss_ref[1:2, :] = b_ref[...] - m * scale


def _bn_act_convT_kernel(x_ref, ss_ref, w_ref, o_ref, *, act):
    # Fused: BatchNorm-apply (+activation) of the previous layer output,
    # bf16 cast, then the per-pixel transposed-conv matmul
    #   [rows_tile, Cin] @ [Cin, 16*Cout]  ->  lane-dense f32 contributions.
    x = x_ref[...] * ss_ref[0:1, :] + ss_ref[1:2, :]
    if act == "relu":
        x = jnp.maximum(x, 0.0)
    else:  # tanh
        x = jnp.tanh(x)
    o_ref[...] = jnp.dot(x.astype(jnp.bfloat16), w_ref[...],
                         preferred_element_type=jnp.float32)


def _bn_stats_kernel(x_ref, g_ref, b_ref, o_ref, *, inv_n, eps):
    # Row-tiled reduction: accumulate per-channel sum / sum-of-squares into a
    # resident (2, C) output block, finalize into [scale; shift] on the last
    # grid step (training-mode BatchNorm, biased variance).
    @pl.when(pl.program_id(0) == 0)
    def _init():
        o_ref[...] = jnp.zeros_like(o_ref)

    x = x_ref[...]
    o_ref[0:1, :] += jnp.sum(x, axis=0, keepdims=True)
    o_ref[1:2, :] += jnp.sum(x * x, axis=0, keepdims=True)

    @pl.when(pl.program_id(0) == pl.num_programs(0) - 1)
    def _finalize():
        m = o_ref[0:1, :] * inv_n
        var = o_ref[1:2, :] * inv_n - m * m
        scale = g_ref[...] * jax.lax.rsqrt(var + eps)
        o_ref[0:1, :] = scale
        o_ref[1:2, :] = b_ref[...] - m * scale


def _bn_act_kernel(x_ref, ss_ref, o_ref, *, act):
    # Final BatchNorm-apply + activation on a lane-dense [rows, W*C] layout.
    y = x_ref[...] * ss_ref[0:1, :] + ss_ref[1:2, :]
    o_ref[...] = jnp.maximum(y, 0.0) if act == "relu" else jnp.tanh(y)


# ------------------------------ kernel wrappers ------------------------------

def _round_up(x, m):
    return (x + m - 1) // m * m


def _row_tile(rows, max_tile=512):
    # Biggest row tile (<= 512 rows, multiple of 8): amortizes per-grid-step
    # overhead and stays well inside v7x's 64 MiB VMEM when double-buffered
    # at real CANx256 sizes (K kept resident).
    return min(max_tile, _round_up(rows, 8))


def _pad_rows(a, rows_p):
    rows = a.shape[0]
    if rows_p == rows:
        return a
    return jnp.pad(a, ((0, rows_p - rows), (0, 0)))


def header_forward(x_nchw, wblk, gamma, beta):
    N, latent = x_nchw.shape[0], x_nchw.shape[1]
    hidden = wblk.shape[1]
    x2 = x_nchw.reshape(N, latent)
    # Block-diagonal LHS: row (n*16+s) holds x[n] in column-block s, so the
    # matmul directly produces NHWC-flat rows (n, ky, kx) with no in-kernel
    # reshape needed.
    eye = jnp.eye(16, dtype=x2.dtype)
    xblk = (eye[None, :, :, None] * x2[:, None, None, :]).reshape(
        N * 16, 16 * latent).astype(jnp.bfloat16)
    head_raw, ss = pl.pallas_call(
        functools.partial(_header_kernel, inv_n=1.0 / (N * 16), eps=EPS),
        out_shape=(jax.ShapeDtypeStruct((N * 16, hidden), jnp.float32),
                   jax.ShapeDtypeStruct((2, hidden), jnp.float32)),
    )(xblk, wblk, gamma, beta)
    return head_raw, ss


def bn_act_convT(x_raw, ss, wmat, *, act="relu"):
    rows, cin = x_raw.shape
    cout16 = wmat.shape[1]
    tr = _row_tile(rows)
    rows_p = _round_up(rows, tr)
    x_p = _pad_rows(x_raw, rows_p)
    out = pl.pallas_call(
        functools.partial(_bn_act_convT_kernel, act=act),
        grid=(rows_p // tr,),
        in_specs=[pl.BlockSpec((tr, cin), lambda r: (r, 0)),
                  pl.BlockSpec((2, cin), lambda r: (0, 0)),
                  pl.BlockSpec((cin, cout16), lambda r: (0, 0))],
        out_specs=pl.BlockSpec((tr, cout16), lambda r: (r, 0)),
        out_shape=jax.ShapeDtypeStruct((rows_p, cout16), jnp.float32),
        compiler_params=pltpu.CompilerParams(
            dimension_semantics=("parallel",)),
    )(x_p, ss, wmat)
    return out[:rows]


def bn_stats(y_flat, gamma, beta):
    rows, c = y_flat.shape
    tr = _row_tile(rows)
    rows_p = _round_up(rows, tr)
    y_p = _pad_rows(y_flat, rows_p)      # zero rows contribute 0 to the sums
    return pl.pallas_call(
        functools.partial(_bn_stats_kernel, inv_n=1.0 / rows, eps=EPS),
        grid=(rows_p // tr,),
        in_specs=[pl.BlockSpec((tr, c), lambda r: (r, 0)),
                  pl.BlockSpec((1, c), lambda r: (0, 0)),
                  pl.BlockSpec((1, c), lambda r: (0, 0))],
        out_specs=pl.BlockSpec((2, c), lambda r: (0, 0)),
        out_shape=jax.ShapeDtypeStruct((2, c), jnp.float32),
        compiler_params=pltpu.CompilerParams(
            dimension_semantics=("arbitrary",)),
    )(y_p, gamma, beta)


def bn_act_apply(y2, ss_cols, *, act):
    rows, cols = y2.shape
    tr = _row_tile(rows)
    rows_p = _round_up(rows, tr)
    y_p = _pad_rows(y2, rows_p)
    out = pl.pallas_call(
        functools.partial(_bn_act_kernel, act=act),
        grid=(rows_p // tr,),
        in_specs=[pl.BlockSpec((tr, cols), lambda r: (r, 0)),
                  pl.BlockSpec((2, cols), lambda r: (0, 0))],
        out_specs=pl.BlockSpec((tr, cols), lambda r: (r, 0)),
        out_shape=jax.ShapeDtypeStruct((rows_p, cols), jnp.float32),
        compiler_params=pltpu.CompilerParams(
            dimension_semantics=("parallel",)),
    )(y_p, ss_cols)
    return out[:rows]


# ------------------------------ JAX glue -------------------------------------

def _overlap_add(contrib, N, H, W, cout):
    # ConvTranspose2d(k=4, s=2, p=1) output from per-pixel contributions:
    #   contrib[n, iy, ix, ky, kx, co] -> out[n, 2*iy+ky-1, 2*ix+kx-1, co]
    # Scatter-free: each output parity (ry, rx) is the sum of 4 shifted
    # contribution slices; the 4 phases are then interleaved.
    # TODO(synk): overlap-add is plain XLA (shifted adds), not a Pallas kernel.
    c = contrib.reshape(N, H, W, 4, 4, cout)

    def shifted(a, dy, dx):   # b[:, q, p] = a[:, q+dy, p+dx] (zero-padded)
        a = jnp.pad(a, ((0, 0), (max(-dy, 0), max(dy, 0)),
                        (max(-dx, 0), max(dx, 0)), (0, 0)))
        return a[:, max(dy, 0):max(dy, 0) + H, max(dx, 0):max(dx, 0) + W, :]

    terms = {0: ((0, 1), (-1, 3)), 1: ((0, 2), (1, 0))}   # (shift, kernel idx)
    rows = []
    for ry in (0, 1):
        cols = []
        for rx in (0, 1):
            acc = None
            for dy, ky in terms[ry]:
                for dx, kx in terms[rx]:
                    t = shifted(c[:, :, :, ky, kx, :], dy, dx)
                    acc = t if acc is None else acc + t
            cols.append(acc)
        rows.append(jnp.stack(cols, axis=3))        # [N, H, W, 2(rx), C]
    y = jnp.stack(rows, axis=2)                     # [N, H, 2(ry), W, 2(rx), C]
    return y.reshape(N, 2 * H, 2 * W, cout)


def init_params(key, latent_dim, hidden, channel_list):
    # Raw parameters, same shapes as the PyTorch module (ConvTranspose2d
    # weights are [Cin, Cout, kH, kW]).
    params = {}
    k0, key = jax.random.split(key)
    params["header_w"] = 0.1 * jax.random.normal(
        k0, (latent_dim, hidden, 4, 4), jnp.float32)
    kg, kb, key = jax.random.split(key, 3)
    params["header_gamma"] = 1.0 + 0.1 * jax.random.normal(kg, (hidden,), jnp.float32)
    params["header_beta"] = 0.1 * jax.random.normal(kb, (hidden,), jnp.float32)
    params["stages"] = []
    for i in range(len(channel_list) - 1):
        cin, cout = int(channel_list[i]), int(channel_list[i + 1])
        kw, kg, kb, key = jax.random.split(key, 4)
        params["stages"].append(dict(
            w=0.1 * jax.random.normal(kw, (cin, cout, 4, 4), jnp.float32),
            gamma=1.0 + 0.1 * jax.random.normal(kg, (cout,), jnp.float32),
            beta=0.1 * jax.random.normal(kb, (cout,), jnp.float32)))
    return params


def prepare_params(params):
    # One-time weight preprocessing, hoisted out of the forward pass.
    latent, hidden = params["header_w"].shape[:2]
    # header weight -> [16*latent, hidden], row = (ky*4+kx)*latent + l
    wblk = jnp.transpose(params["header_w"], (2, 3, 0, 1)).reshape(
        16 * latent, hidden).astype(jnp.bfloat16)
    prep = {"header_wblk": wblk,
            "header_gamma": params["header_gamma"].reshape(1, hidden),
            "header_beta": params["header_beta"].reshape(1, hidden),
            "stages": []}
    for st in params["stages"]:
        cin, cout = st["w"].shape[:2]
        # stage weight -> [Cin, 16*Cout], column = (ky*4+kx)*Cout + co
        wmat = jnp.transpose(st["w"], (0, 2, 3, 1)).reshape(
            cin, 16 * cout).astype(jnp.bfloat16)
        prep["stages"].append(dict(
            wmat=wmat,
            gamma=st["gamma"].reshape(1, cout),
            beta=st["beta"].reshape(1, cout)))
    return prep


def can_generator_forward(prep, x_nchw):
    N = x_nchw.shape[0]
    # --- header: ConvTranspose(latent->hidden, k=4) + BN stats, one call ----
    h_raw, ss = header_forward(x_nchw, prep["header_wblk"],
                               prep["header_gamma"], prep["header_beta"])
    H = W = 4
    # --- core: [fused BN-apply+ReLU -> ConvT matmul] -> overlap-add -> stats -
    for st in prep["stages"]:
        cout = st["wmat"].shape[1] // 16
        contrib = bn_act_convT(h_raw, ss, st["wmat"], act="relu")
        y = _overlap_add(contrib, N, H, W, cout)
        H, W = 2 * H, 2 * W
        h_raw = y.reshape(N * H * W, cout)
        ss = bn_stats(h_raw, st["gamma"], st["beta"])
    # --- final BN-apply + Tanh (lane-dense [N*H, W*C] layout) ---------------
    cout = h_raw.shape[1]
    y2 = h_raw.reshape(N * H, W * cout)
    out2 = bn_act_apply(y2, jnp.tile(ss, (1, W)), act="tanh")
    return out2.reshape(N, H, W, cout).transpose(0, 3, 1, 2)     # NCHW
# TODO(synk): BatchNorm running-mean/var buffer updates (momentum=0.9) are
# training-state bookkeeping and do not affect the forward output; omitted.


# ------------------------------ numpy reference ------------------------------

def _np_convT(x, w):  # x: [N,Cin,H,W], w: [Cin,Cout,4,4]; stride=2, padding=1
    N, Cin, H, W = x.shape
    Cout = w.shape[1]
    full = np.zeros((N, Cout, 2 * H + 2, 2 * W + 2), np.float64)
    for iy in range(H):
        for ix in range(W):
            full[:, :, 2 * iy:2 * iy + 4, 2 * ix:2 * ix + 4] += np.einsum(
                "ni,iokl->nokl", x[:, :, iy, ix], w)
    return full[:, :, 1:1 + 2 * H, 1:1 + 2 * W]


def _np_bn_act(x, gamma, beta, act, eps=1e-5):  # x: [N,C,H,W]
    m = x.mean(axis=(0, 2, 3), keepdims=True)
    v = ((x - m) ** 2).mean(axis=(0, 2, 3), keepdims=True)
    y = (x - m) / np.sqrt(v + eps) * gamma.reshape(1, -1, 1, 1) \
        + beta.reshape(1, -1, 1, 1)
    return np.maximum(y, 0.0) if act == "relu" else np.tanh(y)


def reference_forward(params, x_nchw):
    x = np.asarray(x_nchw, np.float64)
    wh = np.asarray(params["header_w"], np.float64)
    head = np.einsum("nl,lchw->nchw", x[:, :, 0, 0], wh)
    h = _np_bn_act(head, np.asarray(params["header_gamma"]).ravel(),
                   np.asarray(params["header_beta"]).ravel(), "relu")
    n_stage = len(params["stages"])
    for i, st in enumerate(params["stages"]):
        y = _np_convT(h, np.asarray(st["w"], np.float64))
        act = "relu" if i != n_stage - 1 else "tanh"
        h = _np_bn_act(y, np.asarray(st["gamma"]).ravel(),
                       np.asarray(st["beta"]).ravel(), act)
    return h


# ------------------------------ main ------------------------------------------

if __name__ == "__main__":
    key = jax.random.PRNGKey(0)
    latent_dim, hidden, N = 16, 32, 2
    # small generator config (size 4 -> 8 -> 16 -> 32, channels 32 -> 16 -> 8 -> 3)
    config = {"size_list": [4, 8, 16, 32],
              "channel_list": [hidden, hidden // 2, hidden // 4, 3]}

    kx, kp = jax.random.split(key)
    x = jax.random.normal(kx, (N, latent_dim, 1, 1), jnp.float32)
    params = init_params(kp, latent_dim, hidden, config["channel_list"])
    prep = prepare_params(params)

    fwd = jax.jit(can_generator_forward)
    out = jax.block_until_ready(fwd(prep, x))
    assert out.shape == (N, 3, config["size_list"][-1], config["size_list"][-1])

    ref = reference_forward(params, np.asarray(x))
    # bf16 MXU inputs (f32 accumulation / f32 BN stats) -> slightly looser tol.
    np.testing.assert_allclose(np.asarray(out), ref, rtol=3e-2, atol=3e-2)

    print("KERNEL_OK")
</pallas_src>

<mosaic_0001>
module attributes {stable_mosaic.version = 11 : i64} {
  func.func @_header_kernel(%arg0: memref<32x256xbf16, #tpu.memory_space<vmem>>, %arg1: memref<256x32xbf16, #tpu.memory_space<vmem>>, %arg2: memref<1x32xf32, #tpu.memory_space<vmem>>, %arg3: memref<1x32xf32, #tpu.memory_space<vmem>>, %arg4: memref<32x32xf32, #tpu.memory_space<vmem>>, %arg5: memref<2x32xf32, #tpu.memory_space<vmem>>) attributes {dimension_semantics = [], scalar_prefetch = 0 : i64, scratch_operands = 0 : i64, tpu.core_type = #tpu.core_type<tc>} {
    %c0 = arith.constant 0 : index
    %c0_0 = arith.constant 0 : index
    %0 = vector.load %arg0[%c0, %c0_0] : memref<32x256xbf16, #tpu.memory_space<vmem>>, vector<32x256xbf16>
    %c0_1 = arith.constant 0 : index
    %c0_2 = arith.constant 0 : index
    %1 = vector.load %arg1[%c0_1, %c0_2] : memref<256x32xbf16, #tpu.memory_space<vmem>>, vector<256x32xbf16>
    %cst = arith.constant dense<0.000000e+00> : vector<32x32xf32>
    %2 = tpu.matmul %0, %1, %cst {dimension_numbers = #tpu.dot_dimension_numbers<[1], [0], [0], [1], [0, 0, 1, 1], [], []>} : vector<32x256xbf16>, vector<256x32xbf16>, vector<32x32xf32> -> vector<32x32xf32>
    %c0_3 = arith.constant 0 : index
    %c0_4 = arith.constant 0 : index
    %3 = vector.load %arg4[%c0_3, %c0_4] : memref<32x32xf32, #tpu.memory_space<vmem>>, vector<32x32xf32>
    tpu.vector_store %arg4[%c0_3, %c0_4], %2 {strides = array<i32>} : memref<32x32xf32, #tpu.memory_space<vmem>>, vector<32x32xf32>,
    %cst_5 = arith.constant dense<0.000000e+00> : vector<32xf32>
    %4 = vector.multi_reduction <add>, %2, %cst_5 [0] : vector<32x32xf32> to vector<32xf32>
    %5 = vector.shape_cast %4 : vector<32xf32> to vector<1x32xf32>
    %cst_6 = arith.constant 3.125000e-02 : f32
    %6 = vector.broadcast %cst_6 : f32 to vector<1x32xf32>
    %7 = arith.mulf %5, %6 : vector<1x32xf32>
    %8 = arith.mulf %2, %2 : vector<32x32xf32>
    %cst_7 = arith.constant dense<0.000000e+00> : vector<32xf32>
    %9 = vector.multi_reduction <add>, %8, %cst_7 [0] : vector<32x32xf32> to vector<32xf32>
    %10 = vector.shape_cast %9 : vector<32xf32> to vector<1x32xf32>
    %cst_8 = arith.constant 3.125000e-02 : f32
    %11 = vector.broadcast %cst_8 : f32 to vector<1x32xf32>
    %12 = arith.mulf %10, %11 : vector<1x32xf32>
    %13 = arith.mulf %7, %7 : vector<1x32xf32>
    %14 = arith.subf %12, %13 : vector<1x32xf32>
    %c0_9 = arith.constant 0 : index
    %c0_10 = arith.constant 0 : index
    %15 = vector.load %arg2[%c0_9, %c0_10] : memref<1x32xf32, #tpu.memory_space<vmem>>, vector<1x32xf32>
    %cst_11 = arith.constant 9.99999974E-6 : f32
    %16 = vector.broadcast %cst_11 : f32 to vector<1x32xf32>
    %17 = arith.addf %14, %16 : vector<1x32xf32>
    %18 = math.rsqrt %17 : vector<1x32xf32>
    %19 = arith.mulf %15, %18 : vector<1x32xf32>
    %c0_12 = arith.constant 0 : index
    %c0_13 = arith.constant 0 : index
    %20 = vector.load %arg5[%c0_12, %c0_13] : memref<2x32xf32, #tpu.memory_space<vmem>>, vector<1x32xf32>
    tpu.vector_store %arg5[%c0_12, %c0_13], %19 {strides = array<i32>} : memref<2x32xf32, #tpu.memory_space<vmem>>, vector<1x32xf32>,
    %c0_14 = arith.constant 0 : index
    %c0_15 = arith.constant 0 : index
    %21 = vector.load %arg3[%c0_14, %c0_15] : memref<1x32xf32, #tpu.memory_space<vmem>>, vector<1x32xf32>
    %22 = arith.mulf %7, %19 : vector<1x32xf32>
    %23 = arith.subf %21, %22 : vector<1x32xf32>
    %c1 = arith.constant 1 : index
    %c0_16 = arith.constant 0 : index
    %24 = vector.load %arg5[%c1, %c0_16] : memref<2x32xf32, #tpu.memory_space<vmem>>, vector<1x32xf32>
    tpu.vector_store %arg5[%c1, %c0_16], %23 {strides = array<i32>} : memref<2x32xf32, #tpu.memory_space<vmem>>, vector<1x32xf32>,
    return
  }
}

module attributes {stable_mosaic.version = 11 : i64} {
  func.func @_bn_act_convT_kernel(%arg0: i32, %arg1: memref<32x32xf32, #tpu.memory_space<vmem>>, %arg2: memref<2x32xf32, #tpu.memory_space<vmem>>, %arg3: memref<32x256xbf16, #tpu.memory_space<vmem>>, %arg4: memref<32x256xf32, #tpu.memory_space<vmem>>) attributes {dimension_semantics = [#tpu.dimension_semantics<parallel>], iteration_bounds = array<i64: 1>, scalar_prefetch = 0 : i64, scratch_operands = 0 : i64, tpu.core_type = #tpu.core_type<tc>, window_params = [{transform_indices = @transform_0, window_bounds = array<i64: 32, 32>}, {pipeline_mode = #tpu.pipeline_mode<synchronous>, transform_indices = @transform_1, window_bounds = array<i64: 2, 32>}, {pipeline_mode = #tpu.pipeline_mode<synchronous>, transform_indices = @transform_2, window_bounds = array<i64: 32, 256>}, {transform_indices = @transform_3, window_bounds = array<i64: 32, 256>}]} {
    %c0 = arith.constant 0 : index
    %c0_0 = arith.constant 0 : index
    %0 = vector.load %arg1[%c0, %c0_0] : memref<32x32xf32, #tpu.memory_space<vmem>>, vector<32x32xf32>
    %c0_1 = arith.constant 0 : index
    %c0_2 = arith.constant 0 : index
    %1 = vector.load %arg2[%c0_1, %c0_2] : memref<2x32xf32, #tpu.memory_space<vmem>>, vector<1x32xf32>
    %2 = vector.broadcast %1 : vector<1x32xf32> to vector<32x32xf32>
    %3 = arith.mulf %0, %2 : vector<32x32xf32>
    %c1 = arith.constant 1 : index
    %c0_3 = arith.constant 0 : index
    %4 = vector.load %arg2[%c1, %c0_3] : memref<2x32xf32, #tpu.memory_space<vmem>>, vector<1x32xf32>
    %5 = vector.broadcast %4 : vector<1x32xf32> to vector<32x32xf32>
    %6 = arith.addf %3, %5 : vector<32x32xf32>
    %cst = arith.constant 0.000000e+00 : f32
    %7 = vector.broadcast %cst : f32 to vector<32x32xf32>
    %8 = arith.maximumf %6, %7 : vector<32x32xf32>
    %9 = arith.truncf %8 : vector<32x32xf32> to vector<32x32xbf16>
    %c0_4 = arith.constant 0 : index
    %c0_5 = arith.constant 0 : index
    %10 = vector.load %arg3[%c0_4, %c0_5] : memref<32x256xbf16, #tpu.memory_space<vmem>>, vector<32x256xbf16>
    %cst_6 = arith.constant dense<0.000000e+00> : vector<32x256xf32>
    %11 = tpu.matmul %9, %10, %cst_6 {dimension_numbers = #tpu.dot_dimension_numbers<[1], [0], [0], [1], [0, 0, 1, 1], [], []>} : vector<32x32xbf16>, vector<32x256xbf16>, vector<32x256xf32> -> vector<32x256xf32>
    %c0_7 = arith.constant 0 : index
    %c0_8 = arith.constant 0 : index
    %12 = vector.load %arg4[%c0_7, %c0_8] : memref<32x256xf32, #tpu.memory_space<vmem>>, vector<32x256xf32>
    tpu.vector_store %arg4[%c0_7, %c0_8], %11 {strides = array<i32>} : memref<32x256xf32, #tpu.memory_space<vmem>>, vector<32x256xf32>,
    return
  }
  func.func @transform_0(%arg0: i32) -> (i32, i32) {
    %c0_i32 = arith.constant 0 : i32
    %c0_i32_0 = arith.constant 0 : i32
    return %arg0, %c0_i32 : i32, i32
  }
  func.func @transform_1(%arg0: i32) -> (i32, i32) {
    %c0_i32 = arith.constant 0 : i32
    %c0_i32_0 = arith.constant 0 : i32
    %c0_i32_1 = arith.constant 0 : i32
    return %c0_i32, %c0_i32_0 : i32, i32
  }
  func.func @transform_2(%arg0: i32) -> (i32, i32) {
    %c0_i32 = arith.constant 0 : i32
    %c0_i32_0 = arith.constant 0 : i32
    %c0_i32_1 = arith.constant 0 : i32
    return %c0_i32, %c0_i32_0 : i32, i32
  }
  func.func @transform_3(%arg0: i32) -> (i32, i32) {
    %c0_i32 = arith.constant 0 : i32
    %c0_i32_0 = arith.constant 0 : i32
    return %arg0, %c0_i32 : i32, i32
  }
}

module attributes {stable_mosaic.version = 11 : i64} {
  func.func @_bn_stats_kernel(%arg0: i32, %arg1: memref<128x16xf32, #tpu.memory_space<vmem>>, %arg2: memref<1x16xf32, #tpu.memory_space<vmem>>, %arg3: memref<1x16xf32, #tpu.memory_space<vmem>>, %arg4: memref<2x16xf32, #tpu.memory_space<vmem>>) attributes {dimension_semantics = [#tpu.dimension_semantics<arbitrary>], iteration_bounds = array<i64: 1>, scalar_prefetch = 0 : i64, scratch_operands = 0 : i64, tpu.core_type = #tpu.core_type<tc>, window_params = [{transform_indices = @transform_0, window_bounds = array<i64: 128, 16>}, {pipeline_mode = #tpu.pipeline_mode<synchronous>, transform_indices = @transform_1, window_bounds = array<i64: 1, 16>}, {pipeline_mode = #tpu.pipeline_mode<synchronous>, transform_indices = @transform_2, window_bounds = array<i64: 1, 16>}, {pipeline_mode = #tpu.pipeline_mode<synchronous>, transform_indices = @transform_3, window_bounds = array<i64: 2, 16>}]} {
    %c0_i32 = arith.constant 0 : i32
    %0 = arith.cmpi eq, %arg0, %c0_i32 : i32
    %1 = arith.extui %0 : i1 to i32
    %c0_i32_0 = arith.constant 0 : i32
    %2 = arith.cmpi ne, %1, %c0_i32_0 : i32
    scf.if %2 {
      %cst_12 = arith.constant 0.000000e+00 : f32
      %18 = vector.broadcast %cst_12 : f32 to vector<2x16xf32>
      %c0_13 = arith.constant 0 : index
      %c0_14 = arith.constant 0 : index
      %19 = vector.load %arg4[%c0_13, %c0_14] : memref<2x16xf32, #tpu.memory_space<vmem>>, vector<2x16xf32>
      tpu.vector_store %arg4[%c0_13, %c0_14], %18 {strides = array<i32>} : memref<2x16xf32, #tpu.memory_space<vmem>>, vector<2x16xf32>,
    } else {
    }
    %c0 = arith.constant 0 : index
    %c0_1 = arith.constant 0 : index
    %3 = vector.load %arg1[%c0, %c0_1] : memref<128x16xf32, #tpu.memory_space<vmem>>, vector<128x16xf32>
    %c0_2 = arith.constant 0 : index
    %c0_3 = arith.constant 0 : index
    %4 = vector.load %arg4[%c0_2, %c0_3] : memref<2x16xf32, #tpu.memory_space<vmem>>, vector<1x16xf32>
    %cst = arith.constant dense<0.000000e+00> : vector<16xf32>
    %5 = vector.multi_reduction <add>, %3, %cst [0] : vector<128x16xf32> to vector<16xf32>
    %6 = vector.shape_cast %5 : vector<16xf32> to vector<1x16xf32>
    %7 = arith.addf %4, %6 : vector<1x16xf32>
    %c0_4 = arith.constant 0 : index
    %c0_5 = arith.constant 0 : index
    %8 = vector.load %arg4[%c0_4, %c0_5] : memref<2x16xf32, #tpu.memory_space<vmem>>, vector<1x16xf32>
    tpu.vector_store %arg4[%c0_4, %c0_5], %7 {strides = array<i32>} : memref<2x16xf32, #tpu.memory_space<vmem>>, vector<1x16xf32>,
    %c1 = arith.constant 1 : index
    %c0_6 = arith.constant 0 : index
    %9 = vector.load %arg4[%c1, %c0_6] : memref<2x16xf32, #tpu.memory_space<vmem>>, vector<1x16xf32>
    %10 = arith.mulf %3, %3 : vector<128x16xf32>
    %cst_7 = arith.constant dense<0.000000e+00> : vector<16xf32>
    %11 = vector.multi_reduction <add>, %10, %cst_7 [0] : vector<128x16xf32> to vector<16xf32>
    %12 = vector.shape_cast %11 : vector<16xf32> to vector<1x16xf32>
    %13 = arith.addf %9, %12 : vector<1x16xf32>
    %c1_8 = arith.constant 1 : index
    %c0_9 = arith.constant 0 : index
    %14 = vector.load %arg4[%c1_8, %c0_9] : memref<2x16xf32, #tpu.memory_space<vmem>>, vector<1x16xf32>
    tpu.vector_store %arg4[%c1_8, %c0_9], %13 {strides = array<i32>} : memref<2x16xf32, #tpu.memory_space<vmem>>, vector<1x16xf32>,
    %c0_i32_10 = arith.constant 0 : i32
    %15 = arith.cmpi eq, %arg0, %c0_i32_10 : i32
    %16 = arith.extui %15 : i1 to i32
    %c0_i32_11 = arith.constant 0 : i32
    %17 = arith.cmpi ne, %16, %c0_i32_11 : i32
    scf.if %17 {
      %c0_12 = arith.constant 0 : index
      %c0_13 = arith.constant 0 : index
      %18 = vector.load %arg4[%c0_12, %c0_13] : memref<2x16xf32, #tpu.memory_space<vmem>>, vector<1x16xf32>
      %cst_14 = arith.constant 7.812500e-03 : f32
      %19 = vector.broadcast %cst_14 : f32 to vector<1x16xf32>
      %20 = arith.mulf %18, %19 : vector<1x16xf32>
      %c1_15 = arith.constant 1 : index
      %c0_16 = arith.constant 0 : index
      %21 = vector.load %arg4[%c1_15, %c0_16] : memref<2x16xf32, #tpu.memory_space<vmem>>, vector<1x16xf32>
      %cst_17 = arith.constant 7.812500e-03 : f32
      %22 = vector.broadcast %cst_17 : f32 to vector<1x16xf32>
      %23 = arith.mulf %21, %22 : vector<1x16xf32>
      %24 = arith.mulf %20, %20 : vector<1x16xf32>
      %25 = arith.subf %23, %24 : vector<1x16xf32>
      %c0_18 = arith.constant 0 : index
      %c0_19 = arith.constant 0 : index
      %26 = vector.load %arg2[%c0_18, %c0_19] : memref<1x16xf32, #tpu.memory_space<vmem>>, vector<1x16xf32>
      %cst_20 = arith.constant 9.99999974E-6 : f32
      %27 = vector.broadcast %cst_20 : f32 to vector<1x16xf32>
      %28 = arith.addf %25, %27 : vector<1x16xf32>
      %29 = math.rsqrt %28 : vector<1x16xf32>
      %30 = arith.mulf %26, %29 : vector<1x16xf32>
      %c0_21 = arith.constant 0 : index
      %c0_22 = arith.constant 0 : index
      %31 = vector.load %arg4[%c0_21, %c0_22] : memref<2x16xf32, #tpu.memory_space<vmem>>, vector<1x16xf32>
      tpu.vector_store %arg4[%c0_21, %c0_22], %30 {strides = array<i32>} : memref<2x16xf32, #tpu.memory_space<vmem>>, vector<1x16xf32>,
      %c0_23 = arith.constant 0 : index
      %c0_24 = arith.constant 0 : index
      %32 = vector.load %arg3[%c0_23, %c0_24] : memref<1x16xf32, #tpu.memory_space<vmem>>, vector<1x16xf32>
      %33 = arith.mulf %20, %30 : vector<1x16xf32>
      %34 = arith.subf %32, %33 : vector<1x16xf32>
      %c1_25 = arith.constant 1 : index
      %c0_26 = arith.constant 0 : index
      %35 = vector.load %arg4[%c1_25, %c0_26] : memref<2x16xf32, #tpu.memory_space<vmem>>, vector<1x16xf32>
      tpu.vector_store %arg4[%c1_25, %c0_26], %34 {strides = array<i32>} : memref<2x16xf32, #tpu.memory_space<vmem>>, vector<1x16xf32>,
    } else {
    }
    return
  }
  func.func @transform_0(%arg0: i32) -> (i32, i32) {
    %c0_i32 = arith.constant 0 : i32
    %c0_i32_0 = arith.constant 0 : i32
    return %arg0, %c0_i32 : i32, i32
  }
  func.func @transform_1(%arg0: i32) -> (i32, i32) {
    %c0_i32 = arith.constant 0 : i32
    %c0_i32_0 = arith.constant 0 : i32
    %c0_i32_1 = arith.constant 0 : i32
    return %c0_i32, %c0_i32_0 : i32, i32
  }
  func.func @transform_2(%arg0: i32) -> (i32, i32) {
    %c0_i32 = arith.constant 0 : i32
    %c0_i32_0 = arith.constant 0 : i32
    %c0_i32_1 = arith.constant 0 : i32
    return %c0_i32, %c0_i32_0 : i32, i32
  }
  func.func @transform_3(%arg0: i32) -> (i32, i32) {
    %c0_i32 = arith.constant 0 : i32
    %c0_i32_0 = arith.constant 0 : i32
    %c0_i32_1 = arith.constant 0 : i32
    return %c0_i32, %c0_i32_0 : i32, i32
  }
}

module attributes {stable_mosaic.version = 11 : i64} {
  func.func @_bn_act_convT_kernel(%arg0: i32, %arg1: memref<128x16xf32, #tpu.memory_space<vmem>>, %arg2: memref<2x16xf32, #tpu.memory_space<vmem>>, %arg3: memref<16x128xbf16, #tpu.memory_space<vmem>>, %arg4: memref<128x128xf32, #tpu.memory_space<vmem>>) attributes {dimension_semantics = [#tpu.dimension_semantics<parallel>], iteration_bounds = array<i64: 1>, scalar_prefetch = 0 : i64, scratch_operands = 0 : i64, tpu.core_type = #tpu.core_type<tc>, window_params = [{transform_indices = @transform_0, window_bounds = array<i64: 128, 16>}, {pipeline_mode = #tpu.pipeline_mode<synchronous>, transform_indices = @transform_1, window_bounds = array<i64: 2, 16>}, {pipeline_mode = #tpu.pipeline_mode<synchronous>, transform_indices = @transform_2, window_bounds = array<i64: 16, 128>}, {transform_indices = @transform_3, window_bounds = array<i64: 128, 128>}]} {
    %c0 = arith.constant 0 : index
    %c0_0 = arith.constant 0 : index
    %0 = vector.load %arg1[%c0, %c0_0] : memref<128x16xf32, #tpu.memory_space<vmem>>, vector<128x16xf32>
    %c0_1 = arith.constant 0 : index
    %c0_2 = arith.constant 0 : index
    %1 = vector.load %arg2[%c0_1, %c0_2] : memref<2x16xf32, #tpu.memory_space<vmem>>, vector<1x16xf32>
    %2 = vector.broadcast %1 : vector<1x16xf32> to vector<128x16xf32>
    %3 = arith.mulf %0, %2 : vector<128x16xf32>
    %c1 = arith.constant 1 : index
    %c0_3 = arith.constant 0 : index
    %4 = vector.load %arg2[%c1, %c0_3] : memref<2x16xf32, #tpu.memory_space<vmem>>, vector<1x16xf32>
    %5 = vector.broadcast %4 : vector<1x16xf32> to vector<128x16xf32>
    %6 = arith.addf %3, %5 : vector<128x16xf32>
    %cst = arith.constant 0.000000e+00 : f32
    %7 = vector.broadcast %cst : f32 to vector<128x16xf32>
    %8 = arith.maximumf %6, %7 : vector<128x16xf32>
    %9 = arith.truncf %8 : vector<128x16xf32> to vector<128x16xbf16>
    %c0_4 = arith.constant 0 : index
    %c0_5 = arith.constant 0 : index
    %10 = vector.load %arg3[%c0_4, %c0_5] : memref<16x128xbf16, #tpu.memory_space<vmem>>, vector<16x128xbf16>
    %cst_6 = arith.constant dense<0.000000e+00> : vector<128x128xf32>
    %11 = tpu.matmul %9, %10, %cst_6 {dimension_numbers = #tpu.dot_dimension_numbers<[1], [0], [0], [1], [0, 0, 1, 1], [], []>} : vector<128x16xbf16>, vector<16x128xbf16>, vector<128x128xf32> -> vector<128x128xf32>
    %c0_7 = arith.constant 0 : index
    %c0_8 = arith.constant 0 : index
    %12 = vector.load %arg4[%c0_7, %c0_8] : memref<128x128xf32, #tpu.memory_space<vmem>>, vector<128x128xf32>
    tpu.vector_store %arg4[%c0_7, %c0_8], %11 {strides = array<i32>} : memref<128x128xf32, #tpu.memory_space<vmem>>, vector<128x128xf32>,
    return
  }
  func.func @transform_0(%arg0: i32) -> (i32, i32) {
    %c0_i32 = arith.constant 0 : i32
    %c0_i32_0 = arith.constant 0 : i32
    return %arg0, %c0_i32 : i32, i32
  }
  func.func @transform_1(%arg0: i32) -> (i32, i32) {
    %c0_i32 = arith.constant 0 : i32
    %c0_i32_0 = arith.constant 0 : i32
    %c0_i32_1 = arith.constant 0 : i32
    return %c0_i32, %c0_i32_0 : i32, i32
  }
  func.func @transform_2(%arg0: i32) -> (i32, i32) {
    %c0_i32 = arith.constant 0 : i32
    %c0_i32_0 = arith.constant 0 : i32
    %c0_i32_1 = arith.constant 0 : i32
    return %c0_i32, %c0_i32_0 : i32, i32
  }
  func.func @transform_3(%arg0: i32) -> (i32, i32) {
    %c0_i32 = arith.constant 0 : i32
    %c0_i32_0 = arith.constant 0 : i32
    return %arg0, %c0_i32 : i32, i32
  }
}

module attributes {stable_mosaic.version = 11 : i64} {
  func.func @_bn_stats_kernel(%arg0: i32, %arg1: memref<512x8xf32, #tpu.memory_space<vmem>>, %arg2: memref<1x8xf32, #tpu.memory_space<vmem>>, %arg3: memref<1x8xf32, #tpu.memory_space<vmem>>, %arg4: memref<2x8xf32, #tpu.memory_space<vmem>>) attributes {dimension_semantics = [#tpu.dimension_semantics<arbitrary>], iteration_bounds = array<i64: 1>, scalar_prefetch = 0 : i64, scratch_operands = 0 : i64, tpu.core_type = #tpu.core_type<tc>, window_params = [{transform_indices = @transform_0, window_bounds = array<i64: 512, 8>}, {pipeline_mode = #tpu.pipeline_mode<synchronous>, transform_indices = @transform_1, window_bounds = array<i64: 1, 8>}, {pipeline_mode = #tpu.pipeline_mode<synchronous>, transform_indices = @transform_2, window_bounds = array<i64: 1, 8>}, {pipeline_mode = #tpu.pipeline_mode<synchronous>, transform_indices = @transform_3, window_bounds = array<i64: 2, 8>}]} {
    %c0_i32 = arith.constant 0 : i32
    %0 = arith.cmpi eq, %arg0, %c0_i32 : i32
    %1 = arith.extui %0 : i1 to i32
    %c0_i32_0 = arith.constant 0 : i32
    %2 = arith.cmpi ne, %1, %c0_i32_0 : i32
    scf.if %2 {
      %cst_12 = arith.constant 0.000000e+00 : f32
      %18 = vector.broadcast %cst_12 : f32 to vector<2x8xf32>
      %c0_13 = arith.constant 0 : index
      %c0_14 = arith.constant 0 : index
      %19 = vector.load %arg4[%c0_13, %c0_14] : memref<2x8xf32, #tpu.memory_space<vmem>>, vector<2x8xf32>
      tpu.vector_store %arg4[%c0_13, %c0_14], %18 {strides = array<i32>} : memref<2x8xf32, #tpu.memory_space<vmem>>, vector<2x8xf32>,
    } else {
    }
    %c0 = arith.constant 0 : index
    %c0_1 = arith.constant 0 : index
    %3 = vector.load %arg1[%c0, %c0_1] : memref<512x8xf32, #tpu.memory_space<vmem>>, vector<512x8xf32>
    %c0_2 = arith.constant 0 : index
    %c0_3 = arith.constant 0 : index
    %4 = vector.load %arg4[%c0_2, %c0_3] : memref<2x8xf32, #tpu.memory_space<vmem>>, vector<1x8xf32>
    %cst = arith.constant dense<0.000000e+00> : vector<8xf32>
    %5 = vector.multi_reduction <add>, %3, %cst [0] : vector<512x8xf32> to vector<8xf32>
    %6 = vector.shape_cast %5 : vector<8xf32> to vector<1x8xf32>
    %7 = arith.addf %4, %6 : vector<1x8xf32>
    %c0_4 = arith.constant 0 : index
    %c0_5 = arith.constant 0 : index
    %8 = vector.load %arg4[%c0_4, %c0_5] : memref<2x8xf32, #tpu.memory_space<vmem>>, vector<1x8xf32>
    tpu.vector_store %arg4[%c0_4, %c0_5], %7 {strides = array<i32>} : memref<2x8xf32, #tpu.memory_space<vmem>>, vector<1x8xf32>,
    %c1 = arith.constant 1 : index
    %c0_6 = arith.constant 0 : index
    %9 = vector.load %arg4[%c1, %c0_6] : memref<2x8xf32, #tpu.memory_space<vmem>>, vector<1x8xf32>
    %10 = arith.mulf %3, %3 : vector<512x8xf32>
    %cst_7 = arith.constant dense<0.000000e+00> : vector<8xf32>
    %11 = vector.multi_reduction <add>, %10, %cst_7 [0] : vector<512x8xf32> to vector<8xf32>
    %12 = vector.shape_cast %11 : vector<8xf32> to vector<1x8xf32>
    %13 = arith.addf %9, %12 : vector<1x8xf32>
    %c1_8 = arith.constant 1 : index
    %c0_9 = arith.constant 0 : index
    %14 = vector.load %arg4[%c1_8, %c0_9] : memref<2x8xf32, #tpu.memory_space<vmem>>, vector<1x8xf32>
    tpu.vector_store %arg4[%c1_8, %c0_9], %13 {strides = array<i32>} : memref<2x8xf32, #tpu.memory_space<vmem>>, vector<1x8xf32>,
    %c0_i32_10 = arith.constant 0 : i32
    %15 = arith.cmpi eq, %arg0, %c0_i32_10 : i32
    %16 = arith.extui %15 : i1 to i32
    %c0_i32_11 = arith.constant 0 : i32
    %17 = arith.cmpi ne, %16, %c0_i32_11 : i32
    scf.if %17 {
      %c0_12 = arith.constant 0 : index
      %c0_13 = arith.constant 0 : index
      %18 = vector.load %arg4[%c0_12, %c0_13] : memref<2x8xf32, #tpu.memory_space<vmem>>, vector<1x8xf32>
      %cst_14 = arith.constant 0.001953125 : f32
      %19 = vector.broadcast %cst_14 : f32 to vector<1x8xf32>
      %20 = arith.mulf %18, %19 : vector<1x8xf32>
      %c1_15 = arith.constant 1 : index
      %c0_16 = arith.constant 0 : index
      %21 = vector.load %arg4[%c1_15, %c0_16] : memref<2x8xf32, #tpu.memory_space<vmem>>, vector<1x8xf32>
      %cst_17 = arith.constant 0.001953125 : f32
      %22 = vector.broadcast %cst_17 : f32 to vector<1x8xf32>
      %23 = arith.mulf %21, %22 : vector<1x8xf32>
      %24 = arith.mulf %20, %20 : vector<1x8xf32>
      %25 = arith.subf %23, %24 : vector<1x8xf32>
      %c0_18 = arith.constant 0 : index
      %c0_19 = arith.constant 0 : index
      %26 = vector.load %arg2[%c0_18, %c0_19] : memref<1x8xf32, #tpu.memory_space<vmem>>, vector<1x8xf32>
      %cst_20 = arith.constant 9.99999974E-6 : f32
      %27 = vector.broadcast %cst_20 : f32 to vector<1x8xf32>
      %28 = arith.addf %25, %27 : vector<1x8xf32>
      %29 = math.rsqrt %28 : vector<1x8xf32>
      %30 = arith.mulf %26, %29 : vector<1x8xf32>
      %c0_21 = arith.constant 0 : index
      %c0_22 = arith.constant 0 : index
      %31 = vector.load %arg4[%c0_21, %c0_22] : memref<2x8xf32, #tpu.memory_space<vmem>>, vector<1x8xf32>
      tpu.vector_store %arg4[%c0_21, %c0_22], %30 {strides = array<i32>} : memref<2x8xf32, #tpu.memory_space<vmem>>, vector<1x8xf32>,
      %c0_23 = arith.constant 0 : index
      %c0_24 = arith.constant 0 : index
      %32 = vector.load %arg3[%c0_23, %c0_24] : memref<1x8xf32, #tpu.memory_space<vmem>>, vector<1x8xf32>
      %33 = arith.mulf %20, %30 : vector<1x8xf32>
      %34 = arith.subf %32, %33 : vector<1x8xf32>
      %c1_25 = arith.constant 1 : index
      %c0_26 = arith.constant 0 : index
      %35 = vector.load %arg4[%c1_25, %c0_26] : memref<2x8xf32, #tpu.memory_space<vmem>>, vector<1x8xf32>
      tpu.vector_store %arg4[%c1_25, %c0_26], %34 {strides = array<i32>} : memref<2x8xf32, #tpu.memory_space<vmem>>, vector<1x8xf32>,
    } else {
    }
    return
  }
  func.func @transform_0(%arg0: i32) -> (i32, i32) {
    %c0_i32 = arith.constant 0 : i32
    %c0_i32_0 = arith.constant 0 : i32
    return %arg0, %c0_i32 : i32, i32
  }
  func.func @transform_1(%arg0: i32) -> (i32, i32) {
    %c0_i32 = arith.constant 0 : i32
    %c0_i32_0 = arith.constant 0 : i32
    %c0_i32_1 = arith.constant 0 : i32
    return %c0_i32, %c0_i32_0 : i32, i32
  }
  func.func @transform_2(%arg0: i32) -> (i32, i32) {
    %c0_i32 = arith.constant 0 : i32
    %c0_i32_0 = arith.constant 0 : i32
    %c0_i32_1 = arith.constant 0 : i32
    return %c0_i32, %c0_i32_0 : i32, i32
  }
  func.func @transform_3(%arg0: i32) -> (i32, i32) {
    %c0_i32 = arith.constant 0 : i32
    %c0_i32_0 = arith.constant 0 : i32
    %c0_i32_1 = arith.constant 0 : i32
    return %c0_i32, %c0_i32_0 : i32, i32
  }
}

module attributes {stable_mosaic.version = 11 : i64} {
  func.func @_bn_act_convT_kernel(%arg0: i32, %arg1: memref<512x8xf32, #tpu.memory_space<vmem>>, %arg2: memref<2x8xf32, #tpu.memory_space<vmem>>, %arg3: memref<8x48xbf16, #tpu.memory_space<vmem>>, %arg4: memref<512x48xf32, #tpu.memory_space<vmem>>) attributes {dimension_semantics = [#tpu.dimension_semantics<parallel>], iteration_bounds = array<i64: 1>, scalar_prefetch = 0 : i64, scratch_operands = 0 : i64, tpu.core_type = #tpu.core_type<tc>, window_params = [{transform_indices = @transform_0, window_bounds = array<i64: 512, 8>}, {pipeline_mode = #tpu.pipeline_mode<synchronous>, transform_indices = @transform_1, window_bounds = array<i64: 2, 8>}, {pipeline_mode = #tpu.pipeline_mode<synchronous>, transform_indices = @transform_2, window_bounds = array<i64: 8, 48>}, {transform_indices = @transform_3, window_bounds = array<i64: 512, 48>}]} {
    %c0 = arith.constant 0 : index
    %c0_0 = arith.constant 0 : index
    %0 = vector.load %arg1[%c0, %c0_0] : memref<512x8xf32, #tpu.memory_space<vmem>>, vector<512x8xf32>
    %c0_1 = arith.constant 0 : index
    %c0_2 = arith.constant 0 : index
    %1 = vector.load %arg2[%c0_1, %c0_2] : memref<2x8xf32, #tpu.memory_space<vmem>>, vector<1x8xf32>
    %2 = vector.broadcast %1 : vector<1x8xf32> to vector<512x8xf32>
    %3 = arith.mulf %0, %2 : vector<512x8xf32>
    %c1 = arith.constant 1 : index
    %c0_3 = arith.constant 0 : index
    %4 = vector.load %arg2[%c1, %c0_3] : memref<2x8xf32, #tpu.memory_space<vmem>>, vector<1x8xf32>
    %5 = vector.broadcast %4 : vector<1x8xf32> to vector<512x8xf32>
    %6 = arith.addf %3, %5 : vector<512x8xf32>
    %cst = arith.constant 0.000000e+00 : f32
    %7 = vector.broadcast %cst : f32 to vector<512x8xf32>
    %8 = arith.maximumf %6, %7 : vector<512x8xf32>
    %9 = arith.truncf %8 : vector<512x8xf32> to vector<512x8xbf16>
    %c0_4 = arith.constant 0 : index
    %c0_5 = arith.constant 0 : index
    %10 = vector.load %arg3[%c0_4, %c0_5] : memref<8x48xbf16, #tpu.memory_space<vmem>>, vector<8x48xbf16>
    %cst_6 = arith.constant dense<0.000000e+00> : vector<512x48xf32>
    %11 = tpu.matmul %9, %10, %cst_6 {dimension_numbers = #tpu.dot_dimension_numbers<[1], [0], [0], [1], [0, 0, 1, 1], [], []>} : vector<512x8xbf16>, vector<8x48xbf16>, vector<512x48xf32> -> vector<512x48xf32>
    %c0_7 = arith.constant 0 : index
    %c0_8 = arith.constant 0 : index
    %12 = vector.load %arg4[%c0_7, %c0_8] : memref<512x48xf32, #tpu.memory_space<vmem>>, vector<512x48xf32>
    tpu.vector_store %arg4[%c0_7, %c0_8], %11 {strides = array<i32>} : memref<512x48xf32, #tpu.memory_space<vmem>>, vector<512x48xf32>,
    return
  }
  func.func @transform_0(%arg0: i32) -> (i32, i32) {
    %c0_i32 = arith.constant 0 : i32
    %c0_i32_0 = arith.constant 0 : i32
    return %arg0, %c0_i32 : i32, i32
  }
  func.func @transform_1(%arg0: i32) -> (i32, i32) {
    %c0_i32 = arith.constant 0 : i32
    %c0_i32_0 = arith.constant 0 : i32
    %c0_i32_1 = arith.constant 0 : i32
    return %c0_i32, %c0_i32_0 : i32, i32
  }
  func.func @transform_2(%arg0: i32) -> (i32, i32) {
    %c0_i32 = arith.constant 0 : i32
    %c0_i32_0 = arith.constant 0 : i32
    %c0_i32_1 = arith.constant 0 : i32
    return %c0_i32, %c0_i32_0 : i32, i32
  }
  func.func @transform_3(%arg0: i32) -> (i32, i32) {
    %c0_i32 = arith.constant 0 : i32
    %c0_i32_0 = arith.constant 0 : i32
    return %arg0, %c0_i32 : i32, i32
  }
}

module attributes {stable_mosaic.version = 11 : i64} {
  func.func @_bn_stats_kernel(%arg0: i32, %arg1: memref<512x3xf32, #tpu.memory_space<vmem>>, %arg2: memref<1x3xf32, #tpu.memory_space<vmem>>, %arg3: memref<1x3xf32, #tpu.memory_space<vmem>>, %arg4: memref<2x3xf32, #tpu.memory_space<vmem>>) attributes {dimension_semantics = [#tpu.dimension_semantics<arbitrary>], iteration_bounds = array<i64: 4>, scalar_prefetch = 0 : i64, scratch_operands = 0 : i64, tpu.core_type = #tpu.core_type<tc>, window_params = [{transform_indices = @transform_0, window_bounds = array<i64: 512, 3>}, {pipeline_mode = #tpu.pipeline_mode<synchronous>, transform_indices = @transform_1, window_bounds = array<i64: 1, 3>}, {pipeline_mode = #tpu.pipeline_mode<synchronous>, transform_indices = @transform_2, window_bounds = array<i64: 1, 3>}, {pipeline_mode = #tpu.pipeline_mode<synchronous>, transform_indices = @transform_3, window_bounds = array<i64: 2, 3>}]} {
    %c0_i32 = arith.constant 0 : i32
    %0 = arith.cmpi eq, %arg0, %c0_i32 : i32
    %1 = arith.extui %0 : i1 to i32
    %c0_i32_0 = arith.constant 0 : i32
    %2 = arith.cmpi ne, %1, %c0_i32_0 : i32
    scf.if %2 {
      %cst_11 = arith.constant 0.000000e+00 : f32
      %18 = vector.broadcast %cst_11 : f32 to vector<2x3xf32>
      %c0_12 = arith.constant 0 : index
      %c0_13 = arith.constant 0 : index
      %19 = vector.load %arg4[%c0_12, %c0_13] : memref<2x3xf32, #tpu.memory_space<vmem>>, vector<2x3xf32>
      tpu.vector_store %arg4[%c0_12, %c0_13], %18 {strides = array<i32>} : memref<2x3xf32, #tpu.memory_space<vmem>>, vector<2x3xf32>,
    } else {
    }
    %c0 = arith.constant 0 : index
    %c0_1 = arith.constant 0 : index
    %3 = vector.load %arg1[%c0, %c0_1] : memref<512x3xf32, #tpu.memory_space<vmem>>, vector<512x3xf32>
    %c0_2 = arith.constant 0 : index
    %c0_3 = arith.constant 0 : index
    %4 = vector.load %arg4[%c0_2, %c0_3] : memref<2x3xf32, #tpu.memory_space<vmem>>, vector<1x3xf32>
    %cst = arith.constant dense<0.000000e+00> : vector<3xf32>
    %5 = vector.multi_reduction <add>, %3, %cst [0] : vector<512x3xf32> to vector<3xf32>
    %6 = vector.shape_cast %5 : vector<3xf32> to vector<1x3xf32>
    %7 = arith.addf %4, %6 : vector<1x3xf32>
    %c0_4 = arith.constant 0 : index
    %c0_5 = arith.constant 0 : index
    %8 = vector.load %arg4[%c0_4, %c0_5] : memref<2x3xf32, #tpu.memory_space<vmem>>, vector<1x3xf32>
    tpu.vector_store %arg4[%c0_4, %c0_5], %7 {strides = array<i32>} : memref<2x3xf32, #tpu.memory_space<vmem>>, vector<1x3xf32>,
    %c1 = arith.constant 1 : index
    %c0_6 = arith.constant 0 : index
    %9 = vector.load %arg4[%c1, %c0_6] : memref<2x3xf32, #tpu.memory_space<vmem>>, vector<1x3xf32>
    %10 = arith.mulf %3, %3 : vector<512x3xf32>
    %cst_7 = arith.constant dense<0.000000e+00> : vector<3xf32>
    %11 = vector.multi_reduction <add>, %10, %cst_7 [0] : vector<512x3xf32> to vector<3xf32>
    %12 = vector.shape_cast %11 : vector<3xf32> to vector<1x3xf32>
    %13 = arith.addf %9, %12 : vector<1x3xf32>
    %c1_8 = arith.constant 1 : index
    %c0_9 = arith.constant 0 : index
    %14 = vector.load %arg4[%c1_8, %c0_9] : memref<2x3xf32, #tpu.memory_space<vmem>>, vector<1x3xf32>
    tpu.vector_store %arg4[%c1_8, %c0_9], %13 {strides = array<i32>} : memref<2x3xf32, #tpu.memory_space<vmem>>, vector<1x3xf32>,
    %c3_i32 = arith.constant 3 : i32
    %15 = arith.cmpi eq, %arg0, %c3_i32 : i32
    %16 = arith.extui %15 : i1 to i32
    %c0_i32_10 = arith.constant 0 : i32
    %17 = arith.cmpi ne, %16, %c0_i32_10 : i32
    scf.if %17 {
      %c0_11 = arith.constant 0 : index
      %c0_12 = arith.constant 0 : index
      %18 = vector.load %arg4[%c0_11, %c0_12] : memref<2x3xf32, #tpu.memory_space<vmem>>, vector<1x3xf32>
      %cst_13 = arith.constant 4.8828125E-4 : f32
      %19 = vector.broadcast %cst_13 : f32 to vector<1x3xf32>
      %20 = arith.mulf %18, %19 : vector<1x3xf32>
      %c1_14 = arith.constant 1 : index
      %c0_15 = arith.constant 0 : index
      %21 = vector.load %arg4[%c1_14, %c0_15] : memref<2x3xf32, #tpu.memory_space<vmem>>, vector<1x3xf32>
      %cst_16 = arith.constant 4.8828125E-4 : f32
      %22 = vector.broadcast %cst_16 : f32 to vector<1x3xf32>
      %23 = arith.mulf %21, %22 : vector<1x3xf32>
      %24 = arith.mulf %20, %20 : vector<1x3xf32>
      %25 = arith.subf %23, %24 : vector<1x3xf32>
      %c0_17 = arith.constant 0 : index
      %c0_18 = arith.constant 0 : index
      %26 = vector.load %arg2[%c0_17, %c0_18] : memref<1x3xf32, #tpu.memory_space<vmem>>, vector<1x3xf32>
      %cst_19 = arith.constant 9.99999974E-6 : f32
      %27 = vector.broadcast %cst_19 : f32 to vector<1x3xf32>
      %28 = arith.addf %25, %27 : vector<1x3xf32>
      %29 = math.rsqrt %28 : vector<1x3xf32>
      %30 = arith.mulf %26, %29 : vector<1x3xf32>
      %c0_20 = arith.constant 0 : index
      %c0_21 = arith.constant 0 : index
      %31 = vector.load %arg4[%c0_20, %c0_21] : memref<2x3xf32, #tpu.memory_space<vmem>>, vector<1x3xf32>
      tpu.vector_store %arg4[%c0_20, %c0_21], %30 {strides = array<i32>} : memref<2x3xf32, #tpu.memory_space<vmem>>, vector<1x3xf32>,
      %c0_22 = arith.constant 0 : index
      %c0_23 = arith.constant 0 : index
      %32 = vector.load %arg3[%c0_22, %c0_23] : memref<1x3xf32, #tpu.memory_space<vmem>>, vector<1x3xf32>
      %33 = arith.mulf %20, %30 : vector<1x3xf32>
      %34 = arith.subf %32, %33 : vector<1x3xf32>
      %c1_24 = arith.constant 1 : index
      %c0_25 = arith.constant 0 : index
      %35 = vector.load %arg4[%c1_24, %c0_25] : memref<2x3xf32, #tpu.memory_space<vmem>>, vector<1x3xf32>
      tpu.vector_store %arg4[%c1_24, %c0_25], %34 {strides = array<i32>} : memref<2x3xf32, #tpu.memory_space<vmem>>, vector<1x3xf32>,
    } else {
    }
    return
  }
  func.func @transform_0(%arg0: i32) -> (i32, i32) {
    %c0_i32 = arith.constant 0 : i32
    %c0_i32_0 = arith.constant 0 : i32
    return %arg0, %c0_i32 : i32, i32
  }
  func.func @transform_1(%arg0: i32) -> (i32, i32) {
    %c0_i32 = arith.constant 0 : i32
    %c0_i32_0 = arith.constant 0 : i32
    %c0_i32_1 = arith.constant 0 : i32
    return %c0_i32, %c0_i32_0 : i32, i32
  }
  func.func @transform_2(%arg0: i32) -> (i32, i32) {
    %c0_i32 = arith.constant 0 : i32
    %c0_i32_0 = arith.constant 0 : i32
    %c0_i32_1 = arith.constant 0 : i32
    return %c0_i32, %c0_i32_0 : i32, i32
  }
  func.func @transform_3(%arg0: i32) -> (i32, i32) {
    %c0_i32 = arith.constant 0 : i32
    %c0_i32_0 = arith.constant 0 : i32
    %c0_i32_1 = arith.constant 0 : i32
    return %c0_i32, %c0_i32_0 : i32, i32
  }
}

module attributes {stable_mosaic.version = 11 : i64} {
  func.func @_bn_act_kernel(%arg0: i32, %arg1: memref<64x96xf32, #tpu.memory_space<vmem>>, %arg2: memref<2x96xf32, #tpu.memory_space<vmem>>, %arg3: memref<64x96xf32, #tpu.memory_space<vmem>>) attributes {dimension_semantics = [#tpu.dimension_semantics<parallel>], iteration_bounds = array<i64: 1>, scalar_prefetch = 0 : i64, scratch_operands = 0 : i64, tpu.core_type = #tpu.core_type<tc>, window_params = [{transform_indices = @transform_0, window_bounds = array<i64: 64, 96>}, {pipeline_mode = #tpu.pipeline_mode<synchronous>, transform_indices = @transform_1, window_bounds = array<i64: 2, 96>}, {transform_indices = @transform_2, window_bounds = array<i64: 64, 96>}]} {
    %c0 = arith.constant 0 : index
    %c0_0 = arith.constant 0 : index
    %0 = vector.load %arg1[%c0, %c0_0] : memref<64x96xf32, #tpu.memory_space<vmem>>, vector<64x96xf32>
    %c0_1 = arith.constant 0 : index
    %c0_2 = arith.constant 0 : index
    %1 = vector.load %arg2[%c0_1, %c0_2] : memref<2x96xf32, #tpu.memory_space<vmem>>, vector<1x96xf32>
    %2 = vector.broadcast %1 : vector<1x96xf32> to vector<64x96xf32>
    %3 = arith.mulf %0, %2 : vector<64x96xf32>
    %c1 = arith.constant 1 : index
    %c0_3 = arith.constant 0 : index
    %4 = vector.load %arg2[%c1, %c0_3] : memref<2x96xf32, #tpu.memory_space<vmem>>, vector<1x96xf32>
    %5 = vector.broadcast %4 : vector<1x96xf32> to vector<64x96xf32>
    %6 = arith.addf %3, %5 : vector<64x96xf32>
    %7 = math.tanh %6 : vector<64x96xf32>
    %c0_4 = arith.constant 0 : index
    %c0_5 = arith.constant 0 : index
    %8 = vector.load %arg3[%c0_4, %c0_5] : memref<64x96xf32, #tpu.memory_space<vmem>>, vector<64x96xf32>
    tpu.vector_store %arg3[%c0_4, %c0_5], %7 {strides = array<i32>} : memref<64x96xf32, #tpu.memory_space<vmem>>, vector<64x96xf32>,
    return
  }
  func.func @transform_0(%arg0: i32) -> (i32, i32) {
    %c0_i32 = arith.constant 0 : i32
    %c0_i32_0 = arith.constant 0 : i32
    return %arg0, %c0_i32 : i32, i32
  }
  func.func @transform_1(%arg0: i32) -> (i32, i32) {
    %c0_i32 = arith.constant 0 : i32
    %c0_i32_0 = arith.constant 0 : i32
    %c0_i32_1 = arith.constant 0 : i32
    return %c0_i32, %c0_i32_0 : i32, i32
  }
  func.func @transform_2(%arg0: i32) -> (i32, i32) {
    %c0_i32 = arith.constant 0 : i32
    %c0_i32_0 = arith.constant 0 : i32
    return %arg0, %c0_i32 : i32, i32
  }
}

</mosaic_0001>

<llo_original>
// kernel: can_generator_forward.8
$region0: #{can_generator_forward.8}
  #allocation0 [shape = 'u32[]', space=smem, size = 0x4, offset = 0x4, fixed_abs, tag = 'smem constant byte address 0x4 - core index']
  #allocation1 [shape = 'u32[144,128]{1,0:T(1,128)}', space=vmem, size = 0x12000, scoped, tag = 'internal scratch']
  %s0 = inlined_call_operand.vmem [shape: bf16[32,256], index: 0, kind: input, shape index: {}]
  %s1 = inlined_call_operand.vmem [shape: bf16[256,32], index: 1, kind: input, shape index: {}]
  %s2 = inlined_call_operand.vmem [shape: f32[1,32], index: 2, kind: input, shape index: {}]
  %s3 = inlined_call_operand.vmem [shape: f32[1,32], index: 3, kind: input, shape index: {}]
  %s4 = inlined_call_operand.vmem [shape: f32[32,32], index: 4, kind: output, shape index: {0}]
  %s5 = inlined_call_operand.vmem [shape: f32[2,32], index: 5, kind: output, shape index: {1}]
  %6 = xla_tuple %s4, %s5
  %s7 = sld [smem:[#allocation0]]
  $region34: #{can_generator_forward.8} parent=0
    _
  %s9 = ssub.s32 1, %s7
  %s10 = scalar_select 0, %s9, %s7
  // Predicated region
  $region2: #{can_generator_forward.8} parent=0 // pred_check
    _
  $region3: #{can_generator_forward.8} parent=0 // pred_check_branch
    %12 = sbr.rel (0) target = $region5
  $region4: #{can_generator_forward.8} parent=0 // pred_region
    _
  $region5: #{can_generator_forward.8} parent=0 // pred_fallthru
    _
  // Predicated region
  $region6: #{can_generator_forward.8} parent=0 // pred_check
    _
  $region7: #{can_generator_forward.8} parent=0 // pred_check_branch
    %14 = sbr.rel (0) target = $region9
  $region8: #{can_generator_forward.8} parent=0 // pred_region
    _
  $region9: #{can_generator_forward.8} parent=0 // pred_fallthru
    _
  // Predicated region
  $region10: #{can_generator_forward.8} parent=0 // pred_check
    _
  $region11: #{can_generator_forward.8} parent=0 // pred_check_branch
    %16 = sbr.rel (0) target = $region13
  $region12: #{can_generator_forward.8} parent=0 // pred_region
    _
  $region13: #{can_generator_forward.8} parent=0 // pred_fallthru
    _
  // Predicated region
  $region14: #{can_generator_forward.8} parent=0 // pred_check
    _
  $region15: #{can_generator_forward.8} parent=0 // pred_check_branch
    %18 = sbr.rel (0) target = $region17
  $region16: #{can_generator_forward.8} parent=0 // pred_region
    _
  $region17: #{can_generator_forward.8} parent=0 // pred_fallthru
    _
  %v20 = vld [vmem:[%s0] sm:$0xff]
  %v21 = vld [vmem:[%s0 + $0x8] sm:$0xff]
  %v22 = vld [vmem:[%s0 + $0x10] sm:$0xff]
  %v23 = vld [vmem:[%s0 + $0x18] sm:$0xff]
  %v24 = vld [vmem:[%s1] sm:$0xf]
  %v25 = vld [vmem:[%s1 + $0x4] sm:$0xf]
  %v26 = vld [vmem:[%s1 + $0x8] sm:$0xf]
  %v27 = vld [vmem:[%s1 + $0xc] sm:$0xf]
  %v28 = vld [vmem:[%s1 + $0x10] sm:$0xf]
  %v29 = vld [vmem:[%s1 + $0x14] sm:$0xf]
  %v30 = vld [vmem:[%s1 + $0x18] sm:$0xf]
  %v31 = vld [vmem:[%s1 + $0x1c] sm:$0xf]
  %v32 = vld [vmem:[%s1 + $0x20] sm:$0xf]
  %v33 = vld [vmem:[%s1 + $0x24] sm:$0xf]
  %v34 = vld [vmem:[%s1 + $0x28] sm:$0xf]
  %v35 = vld [vmem:[%s1 + $0x2c] sm:$0xf]
  %v36 = vld [vmem:[%s1 + $0x30] sm:$0xf]
  %v37 = vld [vmem:[%s1 + $0x34] sm:$0xf]
  %v38 = vld [vmem:[%s1 + $0x38] sm:$0xf]
  %v39 = vld [vmem:[%s1 + $0x3c] sm:$0xf]
  %v40 = vld [vmem:[%s1 + $0x40] sm:$0xf]
  %v41 = vld [vmem:[%s1 + $0x44] sm:$0xf]
  %v42 = vld [vmem:[%s1 + $0x48] sm:$0xf]
  %v43 = vld [vmem:[%s1 + $0x4c] sm:$0xf]
  %v44 = vld [vmem:[%s1 + $0x50] sm:$0xf]
  %v45 = vld [vmem:[%s1 + $0x54] sm:$0xf]
  %v46 = vld [vmem:[%s1 + $0x58] sm:$0xf]
  %v47 = vld [vmem:[%s1 + $0x5c] sm:$0xf]
  %v48 = vld [vmem:[%s1 + $0x60] sm:$0xf]
  %v49 = vld [vmem:[%s1 + $0x64] sm:$0xf]
  %v50 = vld [vmem:[%s1 + $0x68] sm:$0xf]
  %v51 = vld [vmem:[%s1 + $0x6c] sm:$0xf]
  %v52 = vld [vmem:[%s1 + $0x70] sm:$0xf]
  %v53 = vld [vmem:[%s1 + $0x74] sm:$0xf]
  %v54 = vld [vmem:[%s1 + $0x78] sm:$0xf]
  %v55 = vld [vmem:[%s1 + $0x7c] sm:$0xf]
  %v60 = vunpack.c.l.b16 %v20
  %v61 = vunpack.c.h.b16 %v20
  %v62 = vunpack.c.l.b16 %v21
  %v63 = vunpack.c.h.b16 %v21
  %v64 = vunpack.c.l.b16 %v22
  %v65 = vunpack.c.h.b16 %v22
  %v66 = vunpack.c.l.b16 %v23
  %v67 = vunpack.c.h.b16 %v23
  %v68 = vpack.c.b16 %v62, %v60
  %v69 = vpack.c.b16 %v63, %v61
  %v70 = vpack.c.b16 %v66, %v64
  %v71 = vpack.c.b16 %v67, %v65
  %v108 = vunpack.c.l.b16 %v24
  %v109 = vunpack.c.l.b16 %v25
  %v110 = vunpack.c.l.b16 %v26
  %v111 = vunpack.c.l.b16 %v27
  %v112 = vunpack.c.l.b16 %v28
  %v113 = vunpack.c.l.b16 %v29
  %v114 = vunpack.c.l.b16 %v30
  %v115 = vunpack.c.l.b16 %v31
  %v116 = vunpack.c.l.b16 %v32
  %v117 = vunpack.c.l.b16 %v33
  %v118 = vunpack.c.l.b16 %v34
  %v119 = vunpack.c.l.b16 %v35
  %v120 = vunpack.c.l.b16 %v36
  %v121 = vunpack.c.l.b16 %v37
  %v122 = vunpack.c.l.b16 %v38
  %v123 = vunpack.c.l.b16 %v39
  %v124 = vunpack.c.l.b16 %v40
  %v125 = vunpack.c.l.b16 %v41
  %v126 = vunpack.c.l.b16 %v42
  %v127 = vunpack.c.l.b16 %v43
  %v128 = vunpack.c.l.b16 %v44
  %v129 = vunpack.c.l.b16 %v45
  %v130 = vunpack.c.l.b16 %v46
  %v131 = vunpack.c.l.b16 %v47
  %v132 = vunpack.c.l.b16 %v48
  %v133 = vunpack.c.l.b16 %v49
  %v134 = vunpack.c.l.b16 %v50
  %v135 = vunpack.c.l.b16 %v51
  %v136 = vunpack.c.l.b16 %v52
  %v137 = vunpack.c.l.b16 %v53
  %v138 = vunpack.c.l.b16 %v54
  %v139 = vunpack.c.l.b16 %v55
  %v140 = vpack.c.b16 %v109, %v108
  %v141 = vpack.c.b16 %v111, %v110
  %v142 = vpack.c.b16 %v113, %v112
  %v143 = vpack.c.b16 %v115, %v114
  %v144 = vpack.c.b16 %v117, %v116
  %v145 = vpack.c.b16 %v119, %v118
  %v146 = vpack.c.b16 %v121, %v120
  %v147 = vpack.c.b16 %v123, %v122
  %v148 = vpack.c.b16 %v125, %v124
  %v149 = vpack.c.b16 %v127, %v126
  %v150 = vpack.c.b16 %v129, %v128
  %v151 = vpack.c.b16 %v131, %v130
  %v152 = vpack.c.b16 %v133, %v132
  %v153 = vpack.c.b16 %v135, %v134
  %v154 = vpack.c.b16 %v137, %v136
  %v155 = vpack.c.b16 %v139, %v138
  %172 = vmatprep.subr.bf16.mxu0 0
  %173 = vmatpush1.bf16.msra.mxu0 %v147
  %174 = vmatprep.subr.bf16.mxu0 0
  %175 = vmatpush1.bf16.msra.mxu0 %v146
  %176 = vmatprep.subr.bf16.mxu0 0
  %177 = vmatpush1.bf16.msra.mxu0 %v145
  %178 = vmatprep.subr.bf16.mxu0 0
  %179 = vmatpush1.bf16.msra.mxu0 %v144
  %180 = vmatprep.subr.bf16.mxu0 0
  %181 = vmatpush1.bf16.msra.mxu0 %v143
  %182 = vmatprep.subr.bf16.mxu0 0
  %183 = vmatpush1.bf16.msra.mxu0 %v142
  %184 = vmatprep.subr.bf16.mxu0 0
  %185 = vmatpush1.bf16.msra.mxu0 %v141
  %186 = vmatprep.subr.bf16.mxu0 0
  %187 = vmatpush1.bf16.msra.mxu0 %v140
  %188 = vmatprep.subr.bf16.mxu0 0
  %189 = vmatpush2.bf16.msra.mxu0 %v155
  %190 = vmatprep.subr.bf16.mxu0 0
  %191 = vmatpush2.bf16.msra.mxu0 %v154
  %192 = vmatprep.subr.bf16.mxu0 0
  %193 = vmatpush2.bf16.msra.mxu0 %v153
  %194 = vmatprep.subr.bf16.mxu0 0
  %195 = vmatpush2.bf16.msra.mxu0 %v152
  %196 = vmatprep.subr.bf16.mxu0 0
  %197 = vmatpush2.bf16.msra.mxu0 %v151
  %198 = vmatprep.subr.bf16.mxu0 0
  %199 = vmatpush2.bf16.msra.mxu0 %v150
  %200 = vmatprep.subr.bf16.mxu0 0
  %201 = vmatpush2.bf16.msra.mxu0 %v149
  %202 = vmatprep.subr.bf16.mxu0 0
  %203 = vmatpush2.bf16.msra.mxu0 %v148
  %204 = vmatprep.mubr.bf16.mxu0 %v69
  %205 = vmatmul.mubr.bf16.gmra.mxu0 %v68
  %v206 = vpop.f32.mrf.mxu0
  %v207 = vadd.f32 0.0, %v206
  %v208 = vpop.f32.mrf.mxu0
  %v209 = vpop.f32.mrf.mxu0
  %v210 = vadd.f32 0.0, %v209
  %v211 = vpop.f32.mrf.mxu0
  %212 = vmatprep.mubr.bf16.mxu0 %v71
  %213 = vmatmul.mubr.bf16.gmra.mxu0 %v70
  %v214 = vpop.f32.mrf.mxu0
  %v215 = vadd.f32 0.0, %v214
  %v216 = vpop.f32.mrf.mxu0
  %v217 = vpop.f32.mrf.mxu0
  %v218 = vadd.f32 0.0, %v217
  %v219 = vpop.f32.mrf.mxu0
  %220 = vdwg.mxu0
  %vm221 = vcmask 261120
  %222 = vst.msk [vmem:[%s4] sm:$0xff] %vm221, %v207
  %223 = vst.msk [vmem:[%s4 + $0x8] sm:$0xff] %vm221, %v210
  %224 = vst.msk [vmem:[%s4 + $0x10] sm:$0xff] %vm221, %v215
  %225 = vst.msk [vmem:[%s4 + $0x18] sm:$0xff] %vm221, %v218
  %v226 = vsel %vm221, %v207, 0.0
  %v227 = vsel %vm221, %v210, 0.0
  %v228 = vadd.f32 %v226, %v227
  %v229 = vsel %vm221, %v215, 0.0
  %v230 = vadd.f32 %v228, %v229
  %v231 = vsel %vm221, %v218, 0.0
  %v232 = vadd.f32 %v230, %v231
  %v233 = vrot.slane %v232, 4
  %v234 = vadd.f32 %v232, %v233
  %v235 = vrot.slane %v234, 2
  %v236 = vadd.f32 %v234, %v235
  %v237 = vrot.slane %v236, 1
  %v238 = vadd.f32 %v236, %v237
  %v239 = vmul.f32 %v238, 0.03125
  %v240 = vmul.f32 %v207, %v207
  %v241 = vmul.f32 %v210, %v210
  %v242 = vmul.f32 %v215, %v215
  %v243 = vmul.f32 %v218, %v218
  %v244 = vsel %vm221, %v240, 0.0
  %v245 = vsel %vm221, %v241, 0.0
  %v246 = vadd.f32 %v244, %v245
  %v247 = vsel %vm221, %v242, 0.0
  %v248 = vadd.f32 %v246, %v247
  %v249 = vsel %vm221, %v243, 0.0
  %v250 = vadd.f32 %v248, %v249
  %v251 = vrot.slane %v250, 4
  %v252 = vadd.f32 %v250, %v251
  %v253 = vrot.slane %v252, 2
  %v254 = vadd.f32 %v252, %v253
  %v255 = vrot.slane %v254, 1
  %v256 = vadd.f32 %v254, %v255
  %v257 = vmul.f32 %v256, 0.03125
  %v258 = vmul.f32 %v239, %v239
  %v259 = vsub.f32 %v257, %v258
  %v260 = vld [vmem:[%s2] sm:$0x1]
  %v261 = vadd.f32 %v259, 1e-05
  %v262 = vrsqrt.pop %v261
  %v263 = vmul.f32 %v260, %v262
  %vm264 = vcmask 253952
  %265 = vst.msk [vmem:[%s5] sm:$0x1] %vm264, %v263
  %v266 = vld [vmem:[%s3] sm:$0x1]
  %v267 = vmul.f32 %v239, %v263
  %v268 = vsub.f32 %v266, %v267
  %269 = vst.msk [vmem:[%s5 + $0x1] sm:$0x1] %vm264, %v268
  // Predicated region
  $region18: #{can_generator_forward.8} parent=0 // pred_check
    _
  $region19: #{can_generator_forward.8} parent=0 // pred_check_branch
    %271 = sbr.rel (0) target = $region21
  $region20: #{can_generator_forward.8} parent=0 // pred_region
    _
  $region21: #{can_generator_forward.8} parent=0 // pred_fallthru
    _
  // Predicated region
  $region22: #{can_generator_forward.8} parent=0 // pred_check
    _
  $region23: #{can_generator_forward.8} parent=0 // pred_check_branch
    %273 = sbr.rel (0) target = $region25
  $region24: #{can_generator_forward.8} parent=0 // pred_region
    _
  $region25: #{can_generator_forward.8} parent=0 // pred_fallthru
    _
  // Predicated region
  $region26: #{can_generator_forward.8} parent=0 // pred_check
    _
  $region27: #{can_generator_forward.8} parent=0 // pred_check_branch
    %275 = sbr.rel (0) target = $region29
  $region28: #{can_generator_forward.8} parent=0 // pred_region
    _
  $region29: #{can_generator_forward.8} parent=0 // pred_fallthru
    _
  // Predicated region
  $region30: #{can_generator_forward.8} parent=0 // pred_check
    _
  $region31: #{can_generator_forward.8} parent=0 // pred_check_branch
    %277 = sbr.rel (0) target = $region33
  $region32: #{can_generator_forward.8} parent=0 // pred_region
    _
  $region33: #{can_generator_forward.8} parent=0 // pred_fallthru
    _

// kernel: can_generator_forward.9
$region0: #{can_generator_forward.9}
  #allocation0 [shape = 'u32[]', space=smem, size = 0x4, offset = 0x4, fixed_abs, tag = 'smem constant byte address 0x4 - core index']
  #allocation1 [shape = 'u32[144,128]{1,0:T(1,128)}', space=vmem, size = 0x12000, scoped, tag = 'internal scratch']
  %s0 = inlined_call_operand.vmem [shape: f32[32,32], index: 0, kind: input, shape index: {}]
  %s1 = inlined_call_operand.vmem [shape: f32[2,32], index: 1, kind: input, shape index: {}]
  %s2 = inlined_call_operand.vmem [shape: bf16[32,256], index: 2, kind: input, shape index: {}]
  %s3 = inlined_call_operand.vmem [shape: f32[32,256], index: 3, kind: output, shape index: {}]
  %s4 = sld [smem:[#allocation0]]
  $region22: #{can_generator_forward.9} parent=0
    _
  %s6 = ssub.s32 1, %s4
  %s7 = scalar_select 0, %s6, %s4
  // Predicated region
  $region2: #{can_generator_forward.9} parent=0 // pred_check
    _
  $region3: #{can_generator_forward.9} parent=0 // pred_check_branch
    %9 = sbr.rel (0) target = $region5
  $region4: #{can_generator_forward.9} parent=0 // pred_region
    _
  $region5: #{can_generator_forward.9} parent=0 // pred_fallthru
    _
  // Predicated region
  $region6: #{can_generator_forward.9} parent=0 // pred_check
    _
  $region7: #{can_generator_forward.9} parent=0 // pred_check_branch
    %11 = sbr.rel (0) target = $region9
  $region8: #{can_generator_forward.9} parent=0 // pred_region
    _
  $region9: #{can_generator_forward.9} parent=0 // pred_fallthru
    _
  // Predicated region
  $region10: #{can_generator_forward.9} parent=0 // pred_check
    _
  $region11: #{can_generator_forward.9} parent=0 // pred_check_branch
    %13 = sbr.rel (0) target = $region13
  $region12: #{can_generator_forward.9} parent=0 // pred_region
    _
  $region13: #{can_generator_forward.9} parent=0 // pred_fallthru
    _
  %v15 = vld [vmem:[%s0] sm:$0xff]
  %v16 = vld [vmem:[%s0 + $0x8] sm:$0xff]
  %v17 = vld [vmem:[%s0 + $0x10] sm:$0xff]
  %v18 = vld [vmem:[%s0 + $0x18] sm:$0xff]
  %v19 = vld [vmem:[%s1] sm:$0x1]
  %v20 = vlaneseq
  %v21 = vshrl.u32 %v20, 7
  %v22 = vsub.s32 0, %v21
  %v23 = vrot.slane %v19, %v22
  %v24 = vmul.f32 %v15, %v23
  %v25 = vmul.f32 %v16, %v23
  %v26 = vmul.f32 %v17, %v23
  %v27 = vmul.f32 %v18, %v23
  %v28 = vld [vmem:[%s1 + $0x1] sm:$0x1]
  %v29 = vlaneseq
  %v30 = vshrl.u32 %v29, 7
  %v31 = vsub.s32 0, %v30
  %v32 = vrot.slane %v28, %v31
  %v33 = vadd.f32 %v24, %v32
  %v34 = vadd.f32 %v25, %v32
  %v35 = vadd.f32 %v26, %v32
  %v36 = vadd.f32 %v27, %v32
  %v37 = vmax.f32 %v33, 0.0
  %v38 = vmax.f32 %v34, 0.0
  %v39 = vmax.f32 %v35, 0.0
  %v40 = vmax.f32 %v36, 0.0
  %v41 = vpack.c.bf16 %v38, %v37
  %v42 = vpack.c.bf16 %v40, %v39
  %v43 = vld [vmem:[%s2] sm:$0xff]
  %v44 = vld [vmem:[%s2 + $0x8] sm:$0xff]
  %v45 = vld [vmem:[%s2 + $0x10] sm:$0xff]
  %v46 = vld [vmem:[%s2 + $0x18] sm:$0xff]
  %v51 = vunpack.c.l.b16 %v43
  %v52 = vunpack.c.h.b16 %v43
  %v53 = vunpack.c.l.b16 %v44
  %v54 = vunpack.c.h.b16 %v44
  %v55 = vunpack.c.l.b16 %v45
  %v56 = vunpack.c.h.b16 %v45
  %v57 = vunpack.c.l.b16 %v46
  %v58 = vunpack.c.h.b16 %v46
  %v59 = vpack.c.b16 %v53, %v51
  %v60 = vpack.c.b16 %v54, %v52
  %v61 = vpack.c.b16 %v57, %v55
  %v62 = vpack.c.b16 %v58, %v56
  %vm67 = vcmask 261120
  %v69 = vsel %vm67, %v41, 0
  %v72 = vsel %vm67, %v42, 0
  %74 = vmatprep.subr.bf16.mxu0 0
  %75 = vmatpush1.bf16.msra.mxu0 0
  %76 = vmatprep.subr.bf16.mxu0 0
  %77 = vmatpush1.bf16.msra.mxu0 0
  %78 = vmatprep.subr.bf16.mxu0 0
  %79 = vmatpush1.bf16.msra.mxu0 0
  %80 = vmatprep.subr.bf16.mxu0 0
  %81 = vmatpush1.bf16.msra.mxu0 0
  %82 = vmatprep.subr.bf16.mxu0 0
  %83 = vmatpush1.bf16.msra.mxu0 0
  %84 = vmatprep.subr.bf16.mxu0 0
  %85 = vmatpush1.bf16.msra.mxu0 0
  %86 = vmatprep.subr.bf16.mxu0 %v62
  %87 = vmatpush1.bf16.msra.mxu0 %v61
  %88 = vmatprep.subr.bf16.mxu0 %v60
  %89 = vmatpush1.bf16.msra.mxu0 %v59
  %90 = vmatprep.subr.bf16.mxu0 0
  %91 = vmatpush2.bf16.msra.mxu0 0
  %92 = vmatprep.subr.bf16.mxu0 0
  %93 = vmatpush2.bf16.msra.mxu0 0
  %94 = vmatprep.subr.bf16.mxu0 0
  %95 = vmatpush2.bf16.msra.mxu0 0
  %96 = vmatprep.subr.bf16.mxu0 0
  %97 = vmatpush2.bf16.msra.mxu0 0
  %98 = vmatprep.subr.bf16.mxu0 0
  %99 = vmatpush2.bf16.msra.mxu0 0
  %100 = vmatprep.subr.bf16.mxu0 0
  %101 = vmatpush2.bf16.msra.mxu0 0
  %102 = vmatprep.subr.bf16.mxu0 0
  %103 = vmatpush2.bf16.msra.mxu0 0
  %104 = vmatprep.subr.bf16.mxu0 0
  %105 = vmatpush2.bf16.msra.mxu0 0
  %106 = vmatprep.mubr.bf16.mxu0 0
  %107 = vmatmul.mubr.bf16.gmra.mxu0 %v69
  %v108 = vpop.f32.mrf.mxu0
  %v109 = vadd.f32 0.0, %v108
  %v110 = vpop.f32.mrf.mxu0
  %v111 = vadd.f32 0.0, %v110
  %v112 = vpop.f32.mrf.mxu0
  %v113 = vadd.f32 0.0, %v112
  %v114 = vpop.f32.mrf.mxu0
  %v115 = vadd.f32 0.0, %v114
  %116 = vmatprep.mubr.bf16.mxu0 0
  %117 = vmatmul.mubr.bf16.gmra.mxu0 %v72
  %v118 = vpop.f32.mrf.mxu0
  %v119 = vadd.f32 0.0, %v118
  %v120 = vpop.f32.mrf.mxu0
  %v121 = vadd.f32 0.0, %v120
  %v122 = vpop.f32.mrf.mxu0
  %v123 = vadd.f32 0.0, %v122
  %v124 = vpop.f32.mrf.mxu0
  %v125 = vadd.f32 0.0, %v124
  %126 = vdwg.mxu0
  %127 = vst [vmem:[%s3] sm:$0xff] %v109
  %128 = vst [vmem:[%s3 + $0x8] sm:$0xff] %v111
  %129 = vst [vmem:[%s3 + $0x10] sm:$0xff] %v113
  %130 = vst [vmem:[%s3 + $0x18] sm:$0xff] %v115
  %131 = vst [vmem:[%s3 + $0x20] sm:$0xff] %v119
  %132 = vst [vmem:[%s3 + $0x28] sm:$0xff] %v121
  %133 = vst [vmem:[%s3 + $0x30] sm:$0xff] %v123
  %134 = vst [vmem:[%s3 + $0x38] sm:$0xff] %v125
  // Predicated region
  $region14: #{can_generator_forward.9} parent=0 // pred_check
    _
  $region15: #{can_generator_forward.9} parent=0 // pred_check_branch
    %136 = sbr.rel (0) target = $region17
  $region16: #{can_generator_forward.9} parent=0 // pred_region
    _
  $region17: #{can_generator_forward.9} parent=0 // pred_fallthru
    _
  // Predicated region
  $region18: #{can_generator_forward.9} parent=0 // pred_check
    _
  $region19: #{can_generator_forward.9} parent=0 // pred_check_branch
    %138 = sbr.rel (0) target = $region21
  $region20: #{can_generator_forward.9} parent=0 // pred_region
    _
  $region21: #{can_generator_forward.9} parent=0 // pred_fallthru
    _

// kernel: can_generator_forward.10
$region0: #{can_generator_forward.10}
  #allocation0 [shape = 'u32[]', space=smem, size = 0x4, offset = 0x4, fixed_abs, tag = 'smem constant byte address 0x4 - core index']
  #allocation1 [shape = 'u32[144,128]{1,0:T(1,128)}', space=vmem, size = 0x12000, scoped, tag = 'internal scratch']
  %s0 = inlined_call_operand.vmem [shape: f32[128,16], index: 0, kind: input, shape index: {}]
  %s1 = inlined_call_operand.vmem [shape: f32[1,16], index: 1, kind: input, shape index: {}]
  %s2 = inlined_call_operand.vmem [shape: f32[1,16], index: 2, kind: input, shape index: {}]
  %s3 = inlined_call_operand.vmem [shape: f32[2,16], index: 3, kind: output, shape index: {}]
  %s4 = sld [smem:[#allocation0]]
  $region30: #{can_generator_forward.10} parent=0
    _
  %s6 = ssub.s32 1, %s4
  %s7 = scalar_select 0, %s6, %s4
  // Predicated region
  $region2: #{can_generator_forward.10} parent=0 // pred_check
    _
  $region3: #{can_generator_forward.10} parent=0 // pred_check_branch
    %9 = sbr.rel (0) target = $region5
  $region4: #{can_generator_forward.10} parent=0 // pred_region
    _
  $region5: #{can_generator_forward.10} parent=0 // pred_fallthru
    _
  // Predicated region
  $region6: #{can_generator_forward.10} parent=0 // pred_check
    _
  $region7: #{can_generator_forward.10} parent=0 // pred_check_branch
    %11 = sbr.rel (0) target = $region9
  $region8: #{can_generator_forward.10} parent=0 // pred_region
    _
  $region9: #{can_generator_forward.10} parent=0 // pred_fallthru
    _
  // Predicated region
  $region10: #{can_generator_forward.10} parent=0 // pred_check
    _
  $region11: #{can_generator_forward.10} parent=0 // pred_check_branch
    %13 = sbr.rel (0) target = $region13
  $region12: #{can_generator_forward.10} parent=0 // pred_region
    _
  $region13: #{can_generator_forward.10} parent=0 // pred_fallthru
    _
  %p14 = scmp.eq.s32.totalorder 0, 0
  // Predicated region
  $region14: #{can_generator_forward.10} parent=0 // pred_check
    %p15 = pneg %p14
  $region15: #{can_generator_forward.10} parent=0 // pred_check_branch
    %17 = sbr.rel (%p15) target = $region17
  $region16: #{can_generator_forward.10} parent=0 // pred_region
    %vm18 = vcmask 123904
    %19 = vst.msk [vmem:[%s3] sm:$0x3] %vm18, 0.0
  $region17: #{can_generator_forward.10} parent=0 // pred_fallthru
    _
  %v20 = vld [vmem:[%s0] sm:$0xff]
  %v21 = vld [vmem:[%s0 + $0x8] sm:$0xff]
  %v22 = vld [vmem:[%s0 + $0x10] sm:$0xff]
  %v23 = vld [vmem:[%s0 + $0x18] sm:$0xff]
  %v24 = vld [vmem:[%s0 + $0x20] sm:$0xff]
  %v25 = vld [vmem:[%s0 + $0x28] sm:$0xff]
  %v26 = vld [vmem:[%s0 + $0x30] sm:$0xff]
  %v27 = vld [vmem:[%s0 + $0x38] sm:$0xff]
  %v28 = vld [vmem:[%s0 + $0x40] sm:$0xff]
  %v29 = vld [vmem:[%s0 + $0x48] sm:$0xff]
  %v30 = vld [vmem:[%s0 + $0x50] sm:$0xff]
  %v31 = vld [vmem:[%s0 + $0x58] sm:$0xff]
  %v32 = vld [vmem:[%s0 + $0x60] sm:$0xff]
  %v33 = vld [vmem:[%s0 + $0x68] sm:$0xff]
  %v34 = vld [vmem:[%s0 + $0x70] sm:$0xff]
  %v35 = vld [vmem:[%s0 + $0x78] sm:$0xff]
  %v36 = vld [vmem:[%s3] sm:$0x1]
  %vm37 = vcmask 130048
  %v38 = vsel %vm37, %v20, 0.0
  %v39 = vsel %vm37, %v21, 0.0
  %v40 = vadd.f32 %v38, %v39
  %v41 = vsel %vm37, %v22, 0.0
  %v42 = vadd.f32 %v40, %v41
  %v43 = vsel %vm37, %v23, 0.0
  %v44 = vadd.f32 %v42, %v43
  %v45 = vsel %vm37, %v24, 0.0
  %v46 = vadd.f32 %v44, %v45
  %v47 = vsel %vm37, %v25, 0.0
  %v48 = vadd.f32 %v46, %v47
  %v49 = vsel %vm37, %v26, 0.0
  %v50 = vadd.f32 %v48, %v49
  %v51 = vsel %vm37, %v27, 0.0
  %v52 = vadd.f32 %v50, %v51
  %v53 = vsel %vm37, %v28, 0.0
  %v54 = vadd.f32 %v52, %v53
  %v55 = vsel %vm37, %v29, 0.0
  %v56 = vadd.f32 %v54, %v55
  %v57 = vsel %vm37, %v30, 0.0
  %v58 = vadd.f32 %v56, %v57
  %v59 = vsel %vm37, %v31, 0.0
  %v60 = vadd.f32 %v58, %v59
  %v61 = vsel %vm37, %v32, 0.0
  %v62 = vadd.f32 %v60, %v61
  %v63 = vsel %vm37, %v33, 0.0
  %v64 = vadd.f32 %v62, %v63
  %v65 = vsel %vm37, %v34, 0.0
  %v66 = vadd.f32 %v64, %v65
  %v67 = vsel %vm37, %v35, 0.0
  %v68 = vadd.f32 %v66, %v67
  %v69 = vrot.slane %v68, 4
  %v70 = vadd.f32 %v68, %v69
  %v71 = vrot.slane %v70, 2
  %v72 = vadd.f32 %v70, %v71
  %v73 = vrot.slane %v72, 1
  %v74 = vadd.f32 %v72, %v73
  %v75 = vadd.f32 %v36, %v74
  %vm76 = vcmask 122880
  %77 = vst.msk [vmem:[%s3] sm:$0x1] %vm76, %v75
  %v78 = vld [vmem:[%s3 + $0x1] sm:$0x1]
  %v79 = vmul.f32 %v20, %v20
  %v80 = vmul.f32 %v21, %v21
  %v81 = vmul.f32 %v22, %v22
  %v82 = vmul.f32 %v23, %v23
  %v83 = vmul.f32 %v24, %v24
  %v84 = vmul.f32 %v25, %v25
  %v85 = vmul.f32 %v26, %v26
  %v86 = vmul.f32 %v27, %v27
  %v87 = vmul.f32 %v28, %v28
  %v88 = vmul.f32 %v29, %v29
  %v89 = vmul.f32 %v30, %v30
  %v90 = vmul.f32 %v31, %v31
  %v91 = vmul.f32 %v32, %v32
  %v92 = vmul.f32 %v33, %v33
  %v93 = vmul.f32 %v34, %v34
  %v94 = vmul.f32 %v35, %v35
  %v95 = vsel %vm37, %v79, 0.0
  %v96 = vsel %vm37, %v80, 0.0
  %v97 = vadd.f32 %v95, %v96
  %v98 = vsel %vm37, %v81, 0.0
  %v99 = vadd.f32 %v97, %v98
  %v100 = vsel %vm37, %v82, 0.0
  %v101 = vadd.f32 %v99, %v100
  %v102 = vsel %vm37, %v83, 0.0
  %v103 = vadd.f32 %v101, %v102
  %v104 = vsel %vm37, %v84, 0.0
  %v105 = vadd.f32 %v103, %v104
  %v106 = vsel %vm37, %v85, 0.0
  %v107 = vadd.f32 %v105, %v106
  %v108 = vsel %vm37, %v86, 0.0
  %v109 = vadd.f32 %v107, %v108
  %v110 = vsel %vm37, %v87, 0.0
  %v111 = vadd.f32 %v109, %v110
  %v112 = vsel %vm37, %v88, 0.0
  %v113 = vadd.f32 %v111, %v112
  %v114 = vsel %vm37, %v89, 0.0
  %v115 = vadd.f32 %v113, %v114
  %v116 = vsel %vm37, %v90, 0.0
  %v117 = vadd.f32 %v115, %v116
  %v118 = vsel %vm37, %v91, 0.0
  %v119 = vadd.f32 %v117, %v118
  %v120 = vsel %vm37, %v92, 0.0
  %v121 = vadd.f32 %v119, %v120
  %v122 = vsel %vm37, %v93, 0.0
  %v123 = vadd.f32 %v121, %v122
  %v124 = vsel %vm37, %v94, 0.0
  %v125 = vadd.f32 %v123, %v124
  %v126 = vrot.slane %v125, 4
  %v127 = vadd.f32 %v125, %v126
  %v128 = vrot.slane %v127, 2
  %v129 = vadd.f32 %v127, %v128
  %v130 = vrot.slane %v129, 1
  %v131 = vadd.f32 %v129, %v130
  %v132 = vadd.f32 %v78, %v131
  %133 = vst.msk [vmem:[%s3 + $0x1] sm:$0x1] %vm76, %v132
  // Predicated region
  $region18: #{can_generator_forward.10} parent=0 // pred_check
    %p134 = pneg %p14
  $region19: #{can_generator_forward.10} parent=0 // pred_check_branch
    %136 = sbr.rel (%p134) target = $region21
  $region20: #{can_generator_forward.10} parent=0 // pred_region
    %v137 = vld [vmem:[%s3] sm:$0x1]
    %v138 = vmul.f32 %v137, 0.0078125
    %v139 = vld [vmem:[%s3 + $0x1] sm:$0x1]
    %v140 = vmul.f32 %v139, 0.0078125
    %v141 = vmul.f32 %v138, %v138
    %v142 = vsub.f32 %v140, %v141
    %v143 = vld [vmem:[%s1] sm:$0x1]
    %v144 = vadd.f32 %v142, 1e-05
    %v145 = vrsqrt.pop %v144
    %v146 = vmul.f32 %v143, %v145
    %147 = vst.msk [vmem:[%s3] sm:$0x1] %vm76, %v146
    %v148 = vld [vmem:[%s2] sm:$0x1]
    %v149 = vmul.f32 %v138, %v146
    %v150 = vsub.f32 %v148, %v149
    %151 = vst.msk [vmem:[%s3 + $0x1] sm:$0x1] %vm76, %v150
  $region21: #{can_generator_forward.10} parent=0 // pred_fallthru
    _
  // Predicated region
  $region22: #{can_generator_forward.10} parent=0 // pred_check
    _
  $region23: #{can_generator_forward.10} parent=0 // pred_check_branch
    %153 = sbr.rel (0) target = $region25
  $region24: #{can_generator_forward.10} parent=0 // pred_region
    _
  $region25: #{can_generator_forward.10} parent=0 // pred_fallthru
    _
  // Predicated region
  $region26: #{can_generator_forward.10} parent=0 // pred_check
    _
  $region27: #{can_generator_forward.10} parent=0 // pred_check_branch
    %155 = sbr.rel (0) target = $region29
  $region28: #{can_generator_forward.10} parent=0 // pred_region
    _
  $region29: #{can_generator_forward.10} parent=0 // pred_fallthru
    _

// kernel: can_generator_forward.11
$region0: #{can_generator_forward.11}
  #allocation0 [shape = 'u32[]', space=smem, size = 0x4, offset = 0x4, fixed_abs, tag = 'smem constant byte address 0x4 - core index']
  #allocation1 [shape = 'u32[144,128]{1,0:T(1,128)}', space=vmem, size = 0x12000, scoped, tag = 'internal scratch']
  %s0 = inlined_call_operand.vmem [shape: f32[128,16], index: 0, kind: input, shape index: {}]
  %s1 = inlined_call_operand.vmem [shape: f32[2,16], index: 1, kind: input, shape index: {}]
  %s2 = inlined_call_operand.vmem [shape: bf16[16,128], index: 2, kind: input, shape index: {}]
  %s3 = inlined_call_operand.vmem [shape: f32[128,128], index: 3, kind: output, shape index: {}]
  %s4 = sld [smem:[#allocation0]]
  $region22: #{can_generator_forward.11} parent=0
    _
  %s6 = ssub.s32 1, %s4
  %s7 = scalar_select 0, %s6, %s4
  // Predicated region
  $region2: #{can_generator_forward.11} parent=0 // pred_check
    _
  $region3: #{can_generator_forward.11} parent=0 // pred_check_branch
    %9 = sbr.rel (0) target = $region5
  $region4: #{can_generator_forward.11} parent=0 // pred_region
    _
  $region5: #{can_generator_forward.11} parent=0 // pred_fallthru
    _
  // Predicated region
  $region6: #{can_generator_forward.11} parent=0 // pred_check
    _
  $region7: #{can_generator_forward.11} parent=0 // pred_check_branch
    %11 = sbr.rel (0) target = $region9
  $region8: #{can_generator_forward.11} parent=0 // pred_region
    _
  $region9: #{can_generator_forward.11} parent=0 // pred_fallthru
    _
  // Predicated region
  $region10: #{can_generator_forward.11} parent=0 // pred_check
    _
  $region11: #{can_generator_forward.11} parent=0 // pred_check_branch
    %13 = sbr.rel (0) target = $region13
  $region12: #{can_generator_forward.11} parent=0 // pred_region
    _
  $region13: #{can_generator_forward.11} parent=0 // pred_fallthru
    _
  %v15 = vld [vmem:[%s0] sm:$0xff]
  %v16 = vld [vmem:[%s0 + $0x8] sm:$0xff]
  %v17 = vld [vmem:[%s0 + $0x10] sm:$0xff]
  %v18 = vld [vmem:[%s0 + $0x18] sm:$0xff]
  %v19 = vld [vmem:[%s0 + $0x20] sm:$0xff]
  %v20 = vld [vmem:[%s0 + $0x28] sm:$0xff]
  %v21 = vld [vmem:[%s0 + $0x30] sm:$0xff]
  %v22 = vld [vmem:[%s0 + $0x38] sm:$0xff]
  %v23 = vld [vmem:[%s0 + $0x40] sm:$0xff]
  %v24 = vld [vmem:[%s0 + $0x48] sm:$0xff]
  %v25 = vld [vmem:[%s0 + $0x50] sm:$0xff]
  %v26 = vld [vmem:[%s0 + $0x58] sm:$0xff]
  %v27 = vld [vmem:[%s0 + $0x60] sm:$0xff]
  %v28 = vld [vmem:[%s0 + $0x68] sm:$0xff]
  %v29 = vld [vmem:[%s0 + $0x70] sm:$0xff]
  %v30 = vld [vmem:[%s0 + $0x78] sm:$0xff]
  %v31 = vld [vmem:[%s1] sm:$0x1]
  %v32 = vlaneseq
  %v33 = vshrl.u32 %v32, 7
  %v34 = vsub.s32 0, %v33
  %v35 = vrot.slane %v31, %v34
  %v36 = vmul.f32 %v15, %v35
  %v37 = vmul.f32 %v16, %v35
  %v38 = vmul.f32 %v17, %v35
  %v39 = vmul.f32 %v18, %v35
  %v40 = vmul.f32 %v19, %v35
  %v41 = vmul.f32 %v20, %v35
  %v42 = vmul.f32 %v21, %v35
  %v43 = vmul.f32 %v22, %v35
  %v44 = vmul.f32 %v23, %v35
  %v45 = vmul.f32 %v24, %v35
  %v46 = vmul.f32 %v25, %v35
  %v47 = vmul.f32 %v26, %v35
  %v48 = vmul.f32 %v27, %v35
  %v49 = vmul.f32 %v28, %v35
  %v50 = vmul.f32 %v29, %v35
  %v51 = vmul.f32 %v30, %v35
  %v52 = vld [vmem:[%s1 + $0x1] sm:$0x1]
  %v53 = vlaneseq
  %v54 = vshrl.u32 %v53, 7
  %v55 = vsub.s32 0, %v54
  %v56 = vrot.slane %v52, %v55
  %v57 = vadd.f32 %v36, %v56
  %v58 = vadd.f32 %v37, %v56
  %v59 = vadd.f32 %v38, %v56
  %v60 = vadd.f32 %v39, %v56
  %v61 = vadd.f32 %v40, %v56
  %v62 = vadd.f32 %v41, %v56
  %v63 = vadd.f32 %v42, %v56
  %v64 = vadd.f32 %v43, %v56
  %v65 = vadd.f32 %v44, %v56
  %v66 = vadd.f32 %v45, %v56
  %v67 = vadd.f32 %v46, %v56
  %v68 = vadd.f32 %v47, %v56
  %v69 = vadd.f32 %v48, %v56
  %v70 = vadd.f32 %v49, %v56
  %v71 = vadd.f32 %v50, %v56
  %v72 = vadd.f32 %v51, %v56
  %v73 = vmax.f32 %v57, 0.0
  %v74 = vmax.f32 %v58, 0.0
  %v75 = vmax.f32 %v59, 0.0
  %v76 = vmax.f32 %v60, 0.0
  %v77 = vmax.f32 %v61, 0.0
  %v78 = vmax.f32 %v62, 0.0
  %v79 = vmax.f32 %v63, 0.0
  %v80 = vmax.f32 %v64, 0.0
  %v81 = vmax.f32 %v65, 0.0
  %v82 = vmax.f32 %v66, 0.0
  %v83 = vmax.f32 %v67, 0.0
  %v84 = vmax.f32 %v68, 0.0
  %v85 = vmax.f32 %v69, 0.0
  %v86 = vmax.f32 %v70, 0.0
  %v87 = vmax.f32 %v71, 0.0
  %v88 = vmax.f32 %v72, 0.0
  %v89 = vpack.c.bf16 %v74, %v73
  %v90 = vpack.c.bf16 %v76, %v75
  %v91 = vpack.c.bf16 %v78, %v77
  %v92 = vpack.c.bf16 %v80, %v79
  %v93 = vpack.c.bf16 %v82, %v81
  %v94 = vpack.c.bf16 %v84, %v83
  %v95 = vpack.c.bf16 %v86, %v85
  %v96 = vpack.c.bf16 %v88, %v87
  %v97 = vld [vmem:[%s2] sm:$0xf]
  %v98 = vld [vmem:[%s2 + $0x4] sm:$0xf]
  %v101 = vunpack.c.l.b16 %v97
  %v102 = vunpack.c.l.b16 %v98
  %v103 = vpack.c.b16 %v102, %v101
  %vm105 = vcmask 130048
  %v107 = vsel %vm105, %v89, 0
  %v110 = vsel %vm105, %v90, 0
  %v113 = vsel %vm105, %v91, 0
  %v116 = vsel %vm105, %v92, 0
  %v119 = vsel %vm105, %v93, 0
  %v122 = vsel %vm105, %v94, 0
  %v125 = vsel %vm105, %v95, 0
  %v128 = vsel %vm105, %v96, 0
  %130 = vmatprep.subr.bf16.mxu0 0
  %131 = vmatpush1.bf16.msra.mxu0 0
  %132 = vmatprep.subr.bf16.mxu0 0
  %133 = vmatpush1.bf16.msra.mxu0 0
  %134 = vmatprep.subr.bf16.mxu0 0
  %135 = vmatpush1.bf16.msra.mxu0 0
  %136 = vmatprep.subr.bf16.mxu0 0
  %137 = vmatpush1.bf16.msra.mxu0 0
  %138 = vmatprep.subr.bf16.mxu0 0
  %139 = vmatpush1.bf16.msra.mxu0 0
  %140 = vmatprep.subr.bf16.mxu0 0
  %141 = vmatpush1.bf16.msra.mxu0 0
  %142 = vmatprep.subr.bf16.mxu0 0
  %143 = vmatpush1.bf16.msra.mxu0 0
  %144 = vmatprep.subr.bf16.mxu0 0
  %145 = vmatpush1.bf16.msra.mxu0 %v103
  %146 = vmatprep.subr.bf16.mxu0 0
  %147 = vmatpush2.bf16.msra.mxu0 0
  %148 = vmatprep.subr.bf16.mxu0 0
  %149 = vmatpush2.bf16.msra.mxu0 0
  %150 = vmatprep.subr.bf16.mxu0 0
  %151 = vmatpush2.bf16.msra.mxu0 0
  %152 = vmatprep.subr.bf16.mxu0 0
  %153 = vmatpush2.bf16.msra.mxu0 0
  %154 = vmatprep.subr.bf16.mxu0 0
  %155 = vmatpush2.bf16.msra.mxu0 0
  %156 = vmatprep.subr.bf16.mxu0 0
  %157 = vmatpush2.bf16.msra.mxu0 0
  %158 = vmatprep.subr.bf16.mxu0 0
  %159 = vmatpush2.bf16.msra.mxu0 0
  %160 = vmatprep.subr.bf16.mxu0 0
  %161 = vmatpush2.bf16.msra.mxu0 0
  %162 = vmatprep.mubr.bf16.mxu0 0
  %163 = vmatmul.mubr.bf16.gmra.mxu0 %v107
  %v164 = vpop.f32.mrf.mxu0
  %v165 = vadd.f32 0.0, %v164
  %v166 = vpop.f32.mrf.mxu0
  %v167 = vpop.f32.mrf.mxu0
  %v168 = vadd.f32 0.0, %v167
  %v169 = vpop.f32.mrf.mxu0
  %170 = vmatprep.mubr.bf16.mxu0 0
  %171 = vmatmul.mubr.bf16.gmra.mxu0 %v110
  %v172 = vpop.f32.mrf.mxu0
  %v173 = vadd.f32 0.0, %v172
  %v174 = vpop.f32.mrf.mxu0
  %v175 = vpop.f32.mrf.mxu0
  %v176 = vadd.f32 0.0, %v175
  %v177 = vpop.f32.mrf.mxu0
  %178 = vmatprep.mubr.bf16.mxu0 0
  %179 = vmatmul.mubr.bf16.gmra.mxu0 %v113
  %v180 = vpop.f32.mrf.mxu0
  %v181 = vadd.f32 0.0, %v180
  %v182 = vpop.f32.mrf.mxu0
  %v183 = vpop.f32.mrf.mxu0
  %v184 = vadd.f32 0.0, %v183
  %v185 = vpop.f32.mrf.mxu0
  %186 = vmatprep.mubr.bf16.mxu0 0
  %187 = vmatmul.mubr.bf16.gmra.mxu0 %v116
  %v188 = vpop.f32.mrf.mxu0
  %v189 = vadd.f32 0.0, %v188
  %v190 = vpop.f32.mrf.mxu0
  %v191 = vpop.f32.mrf.mxu0
  %v192 = vadd.f32 0.0, %v191
  %v193 = vpop.f32.mrf.mxu0
  %194 = vmatprep.mubr.bf16.mxu0 0
  %195 = vmatmul.mubr.bf16.gmra.mxu0 %v119
  %v196 = vpop.f32.mrf.mxu0
  %v197 = vadd.f32 0.0, %v196
  %v198 = vpop.f32.mrf.mxu0
  %v199 = vpop.f32.mrf.mxu0
  %v200 = vadd.f32 0.0, %v199
  %v201 = vpop.f32.mrf.mxu0
  %202 = vmatprep.mubr.bf16.mxu0 0
  %203 = vmatmul.mubr.bf16.gmra.mxu0 %v122
  %v204 = vpop.f32.mrf.mxu0
  %v205 = vadd.f32 0.0, %v204
  %v206 = vpop.f32.mrf.mxu0
  %v207 = vpop.f32.mrf.mxu0
  %v208 = vadd.f32 0.0, %v207
  %v209 = vpop.f32.mrf.mxu0
  %210 = vmatprep.mubr.bf16.mxu0 0
  %211 = vmatmul.mubr.bf16.gmra.mxu0 %v125
  %v212 = vpop.f32.mrf.mxu0
  %v213 = vadd.f32 0.0, %v212
  %v214 = vpop.f32.mrf.mxu0
  %v215 = vpop.f32.mrf.mxu0
  %v216 = vadd.f32 0.0, %v215
  %v217 = vpop.f32.mrf.mxu0
  %218 = vmatprep.mubr.bf16.mxu0 0
  %219 = vmatmul.mubr.bf16.gmra.mxu0 %v128
  %v220 = vpop.f32.mrf.mxu0
  %v221 = vadd.f32 0.0, %v220
  %v222 = vpop.f32.mrf.mxu0
  %v223 = vpop.f32.mrf.mxu0
  %v224 = vadd.f32 0.0, %v223
  %v225 = vpop.f32.mrf.mxu0
  %226 = vdwg.mxu0
  %227 = vst [vmem:[%s3] sm:$0xff] %v165
  %228 = vst [vmem:[%s3 + $0x8] sm:$0xff] %v168
  %229 = vst [vmem:[%s3 + $0x10] sm:$0xff] %v173
  %230 = vst [vmem:[%s3 + $0x18] sm:$0xff] %v176
  %231 = vst [vmem:[%s3 + $0x20] sm:$0xff] %v181
  %232 = vst [vmem:[%s3 + $0x28] sm:$0xff] %v184
  %233 = vst [vmem:[%s3 + $0x30] sm:$0xff] %v189
  %234 = vst [vmem:[%s3 + $0x38] sm:$0xff] %v192
  %235 = vst [vmem:[%s3 + $0x40] sm:$0xff] %v197
  %236 = vst [vmem:[%s3 + $0x48] sm:$0xff] %v200
  %237 = vst [vmem:[%s3 + $0x50] sm:$0xff] %v205
  %238 = vst [vmem:[%s3 + $0x58] sm:$0xff] %v208
  %239 = vst [vmem:[%s3 + $0x60] sm:$0xff] %v213
  %240 = vst [vmem:[%s3 + $0x68] sm:$0xff] %v216
  %241 = vst [vmem:[%s3 + $0x70] sm:$0xff] %v221
  %242 = vst [vmem:[%s3 + $0x78] sm:$0xff] %v224
  // Predicated region
  $region14: #{can_generator_forward.11} parent=0 // pred_check
    _
  $region15: #{can_generator_forward.11} parent=0 // pred_check_branch
    %244 = sbr.rel (0) target = $region17
  $region16: #{can_generator_forward.11} parent=0 // pred_region
    _
  $region17: #{can_generator_forward.11} parent=0 // pred_fallthru
    _
  // Predicated region
  $region18: #{can_generator_forward.11} parent=0 // pred_check
    _
  $region19: #{can_generator_forward.11} parent=0 // pred_check_branch
    %246 = sbr.rel (0) target = $region21
  $region20: #{can_generator_forward.11} parent=0 // pred_region
    _
  $region21: #{can_generator_forward.11} parent=0 // pred_fallthru
    _

// kernel: can_generator_forward.12
$region0: #{can_generator_forward.12}
  #allocation0 [shape = 'u32[]', space=smem, size = 0x4, offset = 0x4, fixed_abs, tag = 'smem constant byte address 0x4 - core index']
  #allocation1 [shape = 'u32[144,128]{1,0:T(1,128)}', space=vmem, size = 0x12000, scoped, tag = 'internal scratch']
  %s0 = inlined_call_operand.vmem [shape: f32[512,8], index: 0, kind: input, shape index: {}]
  %s1 = inlined_call_operand.vmem [shape: f32[1,8], index: 1, kind: input, shape index: {}]
  %s2 = inlined_call_operand.vmem [shape: f32[1,8], index: 2, kind: input, shape index: {}]
  %s3 = inlined_call_operand.vmem [shape: f32[2,8], index: 3, kind: output, shape index: {}]
  %s4 = sld [smem:[#allocation0]]
  $region30: #{can_generator_forward.12} parent=0
    _
  %s6 = ssub.s32 1, %s4
  %s7 = scalar_select 0, %s6, %s4
  // Predicated region
  $region2: #{can_generator_forward.12} parent=0 // pred_check
    _
  $region3: #{can_generator_forward.12} parent=0 // pred_check_branch
    %9 = sbr.rel (0) target = $region5
  $region4: #{can_generator_forward.12} parent=0 // pred_region
    _
  $region5: #{can_generator_forward.12} parent=0 // pred_fallthru
    _
  // Predicated region
  $region6: #{can_generator_forward.12} parent=0 // pred_check
    _
  $region7: #{can_generator_forward.12} parent=0 // pred_check_branch
    %11 = sbr.rel (0) target = $region9
  $region8: #{can_generator_forward.12} parent=0 // pred_region
    _
  $region9: #{can_generator_forward.12} parent=0 // pred_fallthru
    _
  // Predicated region
  $region10: #{can_generator_forward.12} parent=0 // pred_check
    _
  $region11: #{can_generator_forward.12} parent=0 // pred_check_branch
    %13 = sbr.rel (0) target = $region13
  $region12: #{can_generator_forward.12} parent=0 // pred_region
    _
  $region13: #{can_generator_forward.12} parent=0 // pred_fallthru
    _
  %p14 = scmp.eq.s32.totalorder 0, 0
  // Predicated region
  $region14: #{can_generator_forward.12} parent=0 // pred_check
    %p15 = pneg %p14
  $region15: #{can_generator_forward.12} parent=0 // pred_check_branch
    %17 = sbr.rel (%p15) target = $region17
  $region16: #{can_generator_forward.12} parent=0 // pred_region
    %vm18 = vcmask 58368
    %19 = vst.msk [vmem:[%s3] sm:$0x3] %vm18, 0.0
  $region17: #{can_generator_forward.12} parent=0 // pred_fallthru
    _
  %v20 = vld [vmem:[%s0] sm:$0xff]
  %v21 = vld [vmem:[%s0 + $0x8] sm:$0xff]
  %v22 = vld [vmem:[%s0 + $0x10] sm:$0xff]
  %v23 = vld [vmem:[%s0 + $0x18] sm:$0xff]
  %v24 = vld [vmem:[%s0 + $0x20] sm:$0xff]
  %v25 = vld [vmem:[%s0 + $0x28] sm:$0xff]
  %v26 = vld [vmem:[%s0 + $0x30] sm:$0xff]
  %v27 = vld [vmem:[%s0 + $0x38] sm:$0xff]
  %v28 = vld [vmem:[%s0 + $0x40] sm:$0xff]
  %v29 = vld [vmem:[%s0 + $0x48] sm:$0xff]
  %v30 = vld [vmem:[%s0 + $0x50] sm:$0xff]
  %v31 = vld [vmem:[%s0 + $0x58] sm:$0xff]
  %v32 = vld [vmem:[%s0 + $0x60] sm:$0xff]
  %v33 = vld [vmem:[%s0 + $0x68] sm:$0xff]
  %v34 = vld [vmem:[%s0 + $0x70] sm:$0xff]
  %v35 = vld [vmem:[%s0 + $0x78] sm:$0xff]
  %v36 = vld [vmem:[%s0 + $0x80] sm:$0xff]
  %v37 = vld [vmem:[%s0 + $0x88] sm:$0xff]
  %v38 = vld [vmem:[%s0 + $0x90] sm:$0xff]
  %v39 = vld [vmem:[%s0 + $0x98] sm:$0xff]
  %v40 = vld [vmem:[%s0 + $0xa0] sm:$0xff]
  %v41 = vld [vmem:[%s0 + $0xa8] sm:$0xff]
  %v42 = vld [vmem:[%s0 + $0xb0] sm:$0xff]
  %v43 = vld [vmem:[%s0 + $0xb8] sm:$0xff]
  %v44 = vld [vmem:[%s0 + $0xc0] sm:$0xff]
  %v45 = vld [vmem:[%s0 + $0xc8] sm:$0xff]
  %v46 = vld [vmem:[%s0 + $0xd0] sm:$0xff]
  %v47 = vld [vmem:[%s0 + $0xd8] sm:$0xff]
  %v48 = vld [vmem:[%s0 + $0xe0] sm:$0xff]
  %v49 = vld [vmem:[%s0 + $0xe8] sm:$0xff]
  %v50 = vld [vmem:[%s0 + $0xf0] sm:$0xff]
  %v51 = vld [vmem:[%s0 + $0xf8] sm:$0xff]
  %v52 = vld [vmem:[%s0 + $0x100] sm:$0xff]
  %v53 = vld [vmem:[%s0 + $0x108] sm:$0xff]
  %v54 = vld [vmem:[%s0 + $0x110] sm:$0xff]
  %v55 = vld [vmem:[%s0 + $0x118] sm:$0xff]
  %v56 = vld [vmem:[%s0 + $0x120] sm:$0xff]
  %v57 = vld [vmem:[%s0 + $0x128] sm:$0xff]
  %v58 = vld [vmem:[%s0 + $0x130] sm:$0xff]
  %v59 = vld [vmem:[%s0 + $0x138] sm:$0xff]
  %v60 = vld [vmem:[%s0 + $0x140] sm:$0xff]
  %v61 = vld [vmem:[%s0 + $0x148] sm:$0xff]
  %v62 = vld [vmem:[%s0 + $0x150] sm:$0xff]
  %v63 = vld [vmem:[%s0 + $0x158] sm:$0xff]
  %v64 = vld [vmem:[%s0 + $0x160] sm:$0xff]
  %v65 = vld [vmem:[%s0 + $0x168] sm:$0xff]
  %v66 = vld [vmem:[%s0 + $0x170] sm:$0xff]
  %v67 = vld [vmem:[%s0 + $0x178] sm:$0xff]
  %v68 = vld [vmem:[%s0 + $0x180] sm:$0xff]
  %v69 = vld [vmem:[%s0 + $0x188] sm:$0xff]
  %v70 = vld [vmem:[%s0 + $0x190] sm:$0xff]
  %v71 = vld [vmem:[%s0 + $0x198] sm:$0xff]
  %v72 = vld [vmem:[%s0 + $0x1a0] sm:$0xff]
  %v73 = vld [vmem:[%s0 + $0x1a8] sm:$0xff]
  %v74 = vld [vmem:[%s0 + $0x1b0] sm:$0xff]
  %v75 = vld [vmem:[%s0 + $0x1b8] sm:$0xff]
  %v76 = vld [vmem:[%s0 + $0x1c0] sm:$0xff]
  %v77 = vld [vmem:[%s0 + $0x1c8] sm:$0xff]
  %v78 = vld [vmem:[%s0 + $0x1d0] sm:$0xff]
  %v79 = vld [vmem:[%s0 + $0x1d8] sm:$0xff]
  %v80 = vld [vmem:[%s0 + $0x1e0] sm:$0xff]
  %v81 = vld [vmem:[%s0 + $0x1e8] sm:$0xff]
  %v82 = vld [vmem:[%s0 + $0x1f0] sm:$0xff]
  %v83 = vld [vmem:[%s0 + $0x1f8] sm:$0xff]
  %v84 = vld [vmem:[%s3] sm:$0x1]
  %vm85 = vcmask 64512
  %v86 = vsel %vm85, %v20, 0.0
  %v87 = vsel %vm85, %v21, 0.0
  %v88 = vadd.f32 %v86, %v87
  %v89 = vsel %vm85, %v22, 0.0
  %v90 = vadd.f32 %v88, %v89
  %v91 = vsel %vm85, %v23, 0.0
  %v92 = vadd.f32 %v90, %v91
  %v93 = vsel %vm85, %v24, 0.0
  %v94 = vadd.f32 %v92, %v93
  %v95 = vsel %vm85, %v25, 0.0
  %v96 = vadd.f32 %v94, %v95
  %v97 = vsel %vm85, %v26, 0.0
  %v98 = vadd.f32 %v96, %v97
  %v99 = vsel %vm85, %v27, 0.0
  %v100 = vadd.f32 %v98, %v99
  %v101 = vsel %vm85, %v28, 0.0
  %v102 = vadd.f32 %v100, %v101
  %v103 = vsel %vm85, %v29, 0.0
  %v104 = vadd.f32 %v102, %v103
  %v105 = vsel %vm85, %v30, 0.0
  %v106 = vadd.f32 %v104, %v105
  %v107 = vsel %vm85, %v31, 0.0
  %v108 = vadd.f32 %v106, %v107
  %v109 = vsel %vm85, %v32, 0.0
  %v110 = vadd.f32 %v108, %v109
  %v111 = vsel %vm85, %v33, 0.0
  %v112 = vadd.f32 %v110, %v111
  %v113 = vsel %vm85, %v34, 0.0
  %v114 = vadd.f32 %v112, %v113
  %v115 = vsel %vm85, %v35, 0.0
  %v116 = vadd.f32 %v114, %v115
  %v117 = vsel %vm85, %v36, 0.0
  %v118 = vadd.f32 %v116, %v117
  %v119 = vsel %vm85, %v37, 0.0
  %v120 = vadd.f32 %v118, %v119
  %v121 = vsel %vm85, %v38, 0.0
  %v122 = vadd.f32 %v120, %v121
  %v123 = vsel %vm85, %v39, 0.0
  %v124 = vadd.f32 %v122, %v123
  %v125 = vsel %vm85, %v40, 0.0
  %v126 = vadd.f32 %v124, %v125
  %v127 = vsel %vm85, %v41, 0.0
  %v128 = vadd.f32 %v126, %v127
  %v129 = vsel %vm85, %v42, 0.0
  %v130 = vadd.f32 %v128, %v129
  %v131 = vsel %vm85, %v43, 0.0
  %v132 = vadd.f32 %v130, %v131
  %v133 = vsel %vm85, %v44, 0.0
  %v134 = vadd.f32 %v132, %v133
  %v135 = vsel %vm85, %v45, 0.0
  %v136 = vadd.f32 %v134, %v135
  %v137 = vsel %vm85, %v46, 0.0
  %v138 = vadd.f32 %v136, %v137
  %v139 = vsel %vm85, %v47, 0.0
  %v140 = vadd.f32 %v138, %v139
  %v141 = vsel %vm85, %v48, 0.0
  %v142 = vadd.f32 %v140, %v141
  %v143 = vsel %vm85, %v49, 0.0
  %v144 = vadd.f32 %v142, %v143
  %v145 = vsel %vm85, %v50, 0.0
  %v146 = vadd.f32 %v144, %v145
  %v147 = vsel %vm85, %v51, 0.0
  %v148 = vadd.f32 %v146, %v147
  %v149 = vsel %vm85, %v52, 0.0
  %v150 = vadd.f32 %v148, %v149
  %v151 = vsel %vm85, %v53, 0.0
  %v152 = vadd.f32 %v150, %v151
  %v153 = vsel %vm85, %v54, 0.0
  %v154 = vadd.f32 %v152, %v153
  %v155 = vsel %vm85, %v55, 0.0
  %v156 = vadd.f32 %v154, %v155
  %v157 = vsel %vm85, %v56, 0.0
  %v158 = vadd.f32 %v156, %v157
  %v159 = vsel %vm85, %v57, 0.0
  %v160 = vadd.f32 %v158, %v159
  %v161 = vsel %vm85, %v58, 0.0
  %v162 = vadd.f32 %v160, %v161
  %v163 = vsel %vm85, %v59, 0.0
  %v164 = vadd.f32 %v162, %v163
  %v165 = vsel %vm85, %v60, 0.0
  %v166 = vadd.f32 %v164, %v165
  %v167 = vsel %vm85, %v61, 0.0
  %v168 = vadd.f32 %v166, %v167
  %v169 = vsel %vm85, %v62, 0.0
  %v170 = vadd.f32 %v168, %v169
  %v171 = vsel %vm85, %v63, 0.0
  %v172 = vadd.f32 %v170, %v171
  %v173 = vsel %vm85, %v64, 0.0
  %v174 = vadd.f32 %v172, %v173
  %v175 = vsel %vm85, %v65, 0.0
  %v176 = vadd.f32 %v174, %v175
  %v177 = vsel %vm85, %v66, 0.0
  %v178 = vadd.f32 %v176, %v177
  %v179 = vsel %vm85, %v67, 0.0
  %v180 = vadd.f32 %v178, %v179
  %v181 = vsel %vm85, %v68, 0.0
  %v182 = vadd.f32 %v180, %v181
  %v183 = vsel %vm85, %v69, 0.0
  %v184 = vadd.f32 %v182, %v183
  %v185 = vsel %vm85, %v70, 0.0
  %v186 = vadd.f32 %v184, %v185
  %v187 = vsel %vm85, %v71, 0.0
  %v188 = vadd.f32 %v186, %v187
  %v189 = vsel %vm85, %v72, 0.0
  %v190 = vadd.f32 %v188, %v189
  %v191 = vsel %vm85, %v73, 0.0
  %v192 = vadd.f32 %v190, %v191
  %v193 = vsel %vm85, %v74, 0.0
  %v194 = vadd.f32 %v192, %v193
  %v195 = vsel %vm85, %v75, 0.0
  %v196 = vadd.f32 %v194, %v195
  %v197 = vsel %vm85, %v76, 0.0
  %v198 = vadd.f32 %v196, %v197
  %v199 = vsel %vm85, %v77, 0.0
  %v200 = vadd.f32 %v198, %v199
  %v201 = vsel %vm85, %v78, 0.0
  %v202 = vadd.f32 %v200, %v201
  %v203 = vsel %vm85, %v79, 0.0
  %v204 = vadd.f32 %v202, %v203
  %v205 = vsel %vm85, %v80, 0.0
  %v206 = vadd.f32 %v204, %v205
  %v207 = vsel %vm85, %v81, 0.0
  %v208 = vadd.f32 %v206, %v207
  %v209 = vsel %vm85, %v82, 0.0
  %v210 = vadd.f32 %v208, %v209
  %v211 = vsel %vm85, %v83, 0.0
  %v212 = vadd.f32 %v210, %v211
  %v213 = vrot.slane %v212, 4
  %v214 = vadd.f32 %v212, %v213
  %v215 = vrot.slane %v214, 2
  %v216 = vadd.f32 %v214, %v215
  %v217 = vrot.slane %v216, 1
  %v218 = vadd.f32 %v216, %v217
  %v219 = vadd.f32 %v84, %v218
  %vm220 = vcmask 57344
  %221 = vst.msk [vmem:[%s3] sm:$0x1] %vm220, %v219
  %v222 = vld [vmem:[%s3 + $0x1] sm:$0x1]
  %v223 = vmul.f32 %v20, %v20
  %v224 = vmul.f32 %v21, %v21
  %v225 = vmul.f32 %v22, %v22
  %v226 = vmul.f32 %v23, %v23
  %v227 = vmul.f32 %v24, %v24
  %v228 = vmul.f32 %v25, %v25
  %v229 = vmul.f32 %v26, %v26
  %v230 = vmul.f32 %v27, %v27
  %v231 = vmul.f32 %v28, %v28
  %v232 = vmul.f32 %v29, %v29
  %v233 = vmul.f32 %v30, %v30
  %v234 = vmul.f32 %v31, %v31
  %v235 = vmul.f32 %v32, %v32
  %v236 = vmul.f32 %v33, %v33
  %v237 = vmul.f32 %v34, %v34
  %v238 = vmul.f32 %v35, %v35
  %v239 = vmul.f32 %v36, %v36
  %v240 = vmul.f32 %v37, %v37
  %v241 = vmul.f32 %v38, %v38
  %v242 = vmul.f32 %v39, %v39
  %v243 = vmul.f32 %v40, %v40
  %v244 = vmul.f32 %v41, %v41
  %v245 = vmul.f32 %v42, %v42
  %v246 = vmul.f32 %v43, %v43
  %v247 = vmul.f32 %v44, %v44
  %v248 = vmul.f32 %v45, %v45
  %v249 = vmul.f32 %v46, %v46
  %v250 = vmul.f32 %v47, %v47
  %v251 = vmul.f32 %v48, %v48
  %v252 = vmul.f32 %v49, %v49
  %v253 = vmul.f32 %v50, %v50
  %v254 = vmul.f32 %v51, %v51
  %v255 = vmul.f32 %v52, %v52
  %v256 = vmul.f32 %v53, %v53
  %v257 = vmul.f32 %v54, %v54
  %v258 = vmul.f32 %v55, %v55
  %v259 = vmul.f32 %v56, %v56
  %v260 = vmul.f32 %v57, %v57
  %v261 = vmul.f32 %v58, %v58
  %v262 = vmul.f32 %v59, %v59
  %v263 = vmul.f32 %v60, %v60
  %v264 = vmul.f32 %v61, %v61
  %v265 = vmul.f32 %v62, %v62
  %v266 = vmul.f32 %v63, %v63
  %v267 = vmul.f32 %v64, %v64
  %v268 = vmul.f32 %v65, %v65
  %v269 = vmul.f32 %v66, %v66
  %v270 = vmul.f32 %v67, %v67
  %v271 = vmul.f32 %v68, %v68
  %v272 = vmul.f32 %v69, %v69
  %v273 = vmul.f32 %v70, %v70
  %v274 = vmul.f32 %v71, %v71
  %v275 = vmul.f32 %v72, %v72
  %v276 = vmul.f32 %v73, %v73
  %v277 = vmul.f32 %v74, %v74
  %v278 = vmul.f32 %v75, %v75
  %v279 = vmul.f32 %v76, %v76
  %v280 = vmul.f32 %v77, %v77
  %v281 = vmul.f32 %v78, %v78
  %v282 = vmul.f32 %v79, %v79
  %v283 = vmul.f32 %v80, %v80
  %v284 = vmul.f32 %v81, %v81
  %v285 = vmul.f32 %v82, %v82
  %v286 = vmul.f32 %v83, %v83
  %v287 = vsel %vm85, %v223, 0.0
  %v288 = vsel %vm85, %v224, 0.0
  %v289 = vadd.f32 %v287, %v288
  %v290 = vsel %vm85, %v225, 0.0
  %v291 = vadd.f32 %v289, %v290
  %v292 = vsel %vm85, %v226, 0.0
  %v293 = vadd.f32 %v291, %v292
  %v294 = vsel %vm85, %v227, 0.0
  %v295 = vadd.f32 %v293, %v294
  %v296 = vsel %vm85, %v228, 0.0
  %v297 = vadd.f32 %v295, %v296
  %v298 = vsel %vm85, %v229, 0.0
  %v299 = vadd.f32 %v297, %v298
  %v300 = vsel %vm85, %v230, 0.0
  %v301 = vadd.f32 %v299, %v300
  %v302 = vsel %vm85, %v231, 0.0
  %v303 = vadd.f32 %v301, %v302
  %v304 = vsel %vm85, %v232, 0.0
  %v305 = vadd.f32 %v303, %v304
  %v306 = vsel %vm85, %v233, 0.0
  %v307 = vadd.f32 %v305, %v306
  %v308 = vsel %vm85, %v234, 0.0
  %v309 = vadd.f32 %v307, %v308
  %v310 = vsel %vm85, %v235, 0.0
  %v311 = vadd.f32 %v309, %v310
  %v312 = vsel %vm85, %v236, 0.0
  %v313 = vadd.f32 %v311, %v312
  %v314 = vsel %vm85, %v237, 0.0
  %v315 = vadd.f32 %v313, %v314
  %v316 = vsel %vm85, %v238, 0.0
  %v317 = vadd.f32 %v315, %v316
  %v318 = vsel %vm85, %v239, 0.0
  %v319 = vadd.f32 %v317, %v318
  %v320 = vsel %vm85, %v240, 0.0
  %v321 = vadd.f32 %v319, %v320
  %v322 = vsel %vm85, %v241, 0.0
  %v323 = vadd.f32 %v321, %v322
  %v324 = vsel %vm85, %v242, 0.0
  %v325 = vadd.f32 %v323, %v324
  %v326 = vsel %vm85, %v243, 0.0
  %v327 = vadd.f32 %v325, %v326
  %v328 = vsel %vm85, %v244, 0.0
  %v329 = vadd.f32 %v327, %v328
  %v330 = vsel %vm85, %v245, 0.0
  %v331 = vadd.f32 %v329, %v330
  %v332 = vsel %vm85, %v246, 0.0
  %v333 = vadd.f32 %v331, %v332
  %v334 = vsel %vm85, %v247, 0.0
  %v335 = vadd.f32 %v333, %v334
  %v336 = vsel %vm85, %v248, 0.0
  %v337 = vadd.f32 %v335, %v336
  %v338 = vsel %vm85, %v249, 0.0
  %v339 = vadd.f32 %v337, %v338
  %v340 = vsel %vm85, %v250, 0.0
  %v341 = vadd.f32 %v339, %v340
  %v342 = vsel %vm85, %v251, 0.0
  %v343 = vadd.f32 %v341, %v342
  %v344 = vsel %vm85, %v252, 0.0
  %v345 = vadd.f32 %v343, %v344
  %v346 = vsel %vm85, %v253, 0.0
  %v347 = vadd.f32 %v345, %v346
  %v348 = vsel %vm85, %v254, 0.0
  %v349 = vadd.f32 %v347, %v348
  %v350 = vsel %vm85, %v255, 0.0
  %v351 = vadd.f32 %v349, %v350
  %v352 = vsel %vm85, %v256, 0.0
  %v353 = vadd.f32 %v351, %v352
  %v354 = vsel %vm85, %v257, 0.0
  %v355 = vadd.f32 %v353, %v354
  %v356 = vsel %vm85, %v258, 0.0
  %v357 = vadd.f32 %v355, %v356
  %v358 = vsel %vm85, %v259, 0.0
  %v359 = vadd.f32 %v357, %v358
  %v360 = vsel %vm85, %v260, 0.0
  %v361 = vadd.f32 %v359, %v360
  %v362 = vsel %vm85, %v261, 0.0
  %v363 = vadd.f32 %v361, %v362
  %v364 = vsel %vm85, %v262, 0.0
  %v365 = vadd.f32 %v363, %v364
  %v366 = vsel %vm85, %v263, 0.0
  %v367 = vadd.f32 %v365, %v366
  %v368 = vsel %vm85, %v264, 0.0
  %v369 = vadd.f32 %v367, %v368
  %v370 = vsel %vm85, %v265, 0.0
  %v371 = vadd.f32 %v369, %v370
  %v372 = vsel %vm85, %v266, 0.0
  %v373 = vadd.f32 %v371, %v372
  %v374 = vsel %vm85, %v267, 0.0
  %v375 = vadd.f32 %v373, %v374
  %v376 = vsel %vm85, %v268, 0.0
  %v377 = vadd.f32 %v375, %v376
  %v378 = vsel %vm85, %v269, 0.0
  %v379 = vadd.f32 %v377, %v378
  %v380 = vsel %vm85, %v270, 0.0
  %v381 = vadd.f32 %v379, %v380
  %v382 = vsel %vm85, %v271, 0.0
  %v383 = vadd.f32 %v381, %v382
  %v384 = vsel %vm85, %v272, 0.0
  %v385 = vadd.f32 %v383, %v384
  %v386 = vsel %vm85, %v273, 0.0
  %v387 = vadd.f32 %v385, %v386
  %v388 = vsel %vm85, %v274, 0.0
  %v389 = vadd.f32 %v387, %v388
  %v390 = vsel %vm85, %v275, 0.0
  %v391 = vadd.f32 %v389, %v390
  %v392 = vsel %vm85, %v276, 0.0
  %v393 = vadd.f32 %v391, %v392
  %v394 = vsel %vm85, %v277, 0.0
  %v395 = vadd.f32 %v393, %v394
  %v396 = vsel %vm85, %v278, 0.0
  %v397 = vadd.f32 %v395, %v396
  %v398 = vsel %vm85, %v279, 0.0
  %v399 = vadd.f32 %v397, %v398
  %v400 = vsel %vm85, %v280, 0.0
  %v401 = vadd.f32 %v399, %v400
  %v402 = vsel %vm85, %v281, 0.0
  %v403 = vadd.f32 %v401, %v402
  %v404 = vsel %vm85, %v282, 0.0
  %v405 = vadd.f32 %v403, %v404
  %v406 = vsel %vm85, %v283, 0.0
  %v407 = vadd.f32 %v405, %v406
  %v408 = vsel %vm85, %v284, 0.0
  %v409 = vadd.f32 %v407, %v408
  %v410 = vsel %vm85, %v285, 0.0
  %v411 = vadd.f32 %v409, %v410
  %v412 = vsel %vm85, %v286, 0.0
  %v413 = vadd.f32 %v411, %v412
  %v414 = vrot.slane %v413, 4
  %v415 = vadd.f32 %v413, %v414
  %v416 = vrot.slane %v415, 2
  %v417 = vadd.f32 %v415, %v416
  %v418 = vrot.slane %v417, 1
  %v419 = vadd.f32 %v417, %v418
  %v420 = vadd.f32 %v222, %v419
  %421 = vst.msk [vmem:[%s3 + $0x1] sm:$0x1] %vm220, %v420
  // Predicated region
  $region18: #{can_generator_forward.12} parent=0 // pred_check
    %p422 = pneg %p14
  $region19: #{can_generator_forward.12} parent=0 // pred_check_branch
    %424 = sbr.rel (%p422) target = $region21
  $region20: #{can_generator_forward.12} parent=0 // pred_region
    %v425 = vld [vmem:[%s3] sm:$0x1]
    %v426 = vmul.f32 %v425, 0.001953125
    %v427 = vld [vmem:[%s3 + $0x1] sm:$0x1]
    %v428 = vmul.f32 %v427, 0.001953125
    %v429 = vmul.f32 %v426, %v426
    %v430 = vsub.f32 %v428, %v429
    %v431 = vld [vmem:[%s1] sm:$0x1]
    %v432 = vadd.f32 %v430, 1e-05
    %v433 = vrsqrt.pop %v432
    %v434 = vmul.f32 %v431, %v433
    %435 = vst.msk [vmem:[%s3] sm:$0x1] %vm220, %v434
    %v436 = vld [vmem:[%s2] sm:$0x1]
    %v437 = vmul.f32 %v426, %v434
    %v438 = vsub.f32 %v436, %v437
    %439 = vst.msk [vmem:[%s3 + $0x1] sm:$0x1] %vm220, %v438
  $region21: #{can_generator_forward.12} parent=0 // pred_fallthru
    _
  // Predicated region
  $region22: #{can_generator_forward.12} parent=0 // pred_check
    _
  $region23: #{can_generator_forward.12} parent=0 // pred_check_branch
    %441 = sbr.rel (0) target = $region25
  $region24: #{can_generator_forward.12} parent=0 // pred_region
    _
  $region25: #{can_generator_forward.12} parent=0 // pred_fallthru
    _
  // Predicated region
  $region26: #{can_generator_forward.12} parent=0 // pred_check
    _
  $region27: #{can_generator_forward.12} parent=0 // pred_check_branch
    %443 = sbr.rel (0) target = $region29
  $region28: #{can_generator_forward.12} parent=0 // pred_region
    _
  $region29: #{can_generator_forward.12} parent=0 // pred_fallthru
    _

// kernel: can_generator_forward.13
$region0: #{can_generator_forward.13}
  #allocation0 [shape = 'u32[]', space=smem, size = 0x4, offset = 0x4, fixed_abs, tag = 'smem constant byte address 0x4 - core index']
  #allocation1 [shape = 'u32[144,128]{1,0:T(1,128)}', space=vmem, size = 0x12000, scoped, tag = 'internal scratch']
  %s0 = inlined_call_operand.vmem [shape: f32[512,8], index: 0, kind: input, shape index: {}]
  %s1 = inlined_call_operand.vmem [shape: f32[2,8], index: 1, kind: input, shape index: {}]
  %s2 = inlined_call_operand.vmem [shape: bf16[8,48], index: 2, kind: input, shape index: {}]
  %s3 = inlined_call_operand.vmem [shape: f32[512,48], index: 3, kind: output, shape index: {}]
  %s4 = sld [smem:[#allocation0]]
  $region22: #{can_generator_forward.13} parent=0
    _
  %s6 = ssub.s32 1, %s4
  %s7 = scalar_select 0, %s6, %s4
  // Predicated region
  $region2: #{can_generator_forward.13} parent=0 // pred_check
    _
  $region3: #{can_generator_forward.13} parent=0 // pred_check_branch
    %9 = sbr.rel (0) target = $region5
  $region4: #{can_generator_forward.13} parent=0 // pred_region
    _
  $region5: #{can_generator_forward.13} parent=0 // pred_fallthru
    _
  // Predicated region
  $region6: #{can_generator_forward.13} parent=0 // pred_check
    _
  $region7: #{can_generator_forward.13} parent=0 // pred_check_branch
    %11 = sbr.rel (0) target = $region9
  $region8: #{can_generator_forward.13} parent=0 // pred_region
    _
  $region9: #{can_generator_forward.13} parent=0 // pred_fallthru
    _
  // Predicated region
  $region10: #{can_generator_forward.13} parent=0 // pred_check
    _
  $region11: #{can_generator_forward.13} parent=0 // pred_check_branch
    %13 = sbr.rel (0) target = $region13
  $region12: #{can_generator_forward.13} parent=0 // pred_region
    _
  $region13: #{can_generator_forward.13} parent=0 // pred_fallthru
    _
  %v15 = vld [vmem:[%s0] sm:$0xff]
  %v16 = vld [vmem:[%s0 + $0x8] sm:$0xff]
  %v17 = vld [vmem:[%s0 + $0x10] sm:$0xff]
  %v18 = vld [vmem:[%s0 + $0x18] sm:$0xff]
  %v19 = vld [vmem:[%s0 + $0x20] sm:$0xff]
  %v20 = vld [vmem:[%s0 + $0x28] sm:$0xff]
  %v21 = vld [vmem:[%s0 + $0x30] sm:$0xff]
  %v22 = vld [vmem:[%s0 + $0x38] sm:$0xff]
  %v23 = vld [vmem:[%s0 + $0x40] sm:$0xff]
  %v24 = vld [vmem:[%s0 + $0x48] sm:$0xff]
  %v25 = vld [vmem:[%s0 + $0x50] sm:$0xff]
  %v26 = vld [vmem:[%s0 + $0x58] sm:$0xff]
  %v27 = vld [vmem:[%s0 + $0x60] sm:$0xff]
  %v28 = vld [vmem:[%s0 + $0x68] sm:$0xff]
  %v29 = vld [vmem:[%s0 + $0x70] sm:$0xff]
  %v30 = vld [vmem:[%s0 + $0x78] sm:$0xff]
  %v31 = vld [vmem:[%s0 + $0x80] sm:$0xff]
  %v32 = vld [vmem:[%s0 + $0x88] sm:$0xff]
  %v33 = vld [vmem:[%s0 + $0x90] sm:$0xff]
  %v34 = vld [vmem:[%s0 + $0x98] sm:$0xff]
  %v35 = vld [vmem:[%s0 + $0xa0] sm:$0xff]
  %v36 = vld [vmem:[%s0 + $0xa8] sm:$0xff]
  %v37 = vld [vmem:[%s0 + $0xb0] sm:$0xff]
  %v38 = vld [vmem:[%s0 + $0xb8] sm:$0xff]
  %v39 = vld [vmem:[%s0 + $0xc0] sm:$0xff]
  %v40 = vld [vmem:[%s0 + $0xc8] sm:$0xff]
  %v41 = vld [vmem:[%s0 + $0xd0] sm:$0xff]
  %v42 = vld [vmem:[%s0 + $0xd8] sm:$0xff]
  %v43 = vld [vmem:[%s0 + $0xe0] sm:$0xff]
  %v44 = vld [vmem:[%s0 + $0xe8] sm:$0xff]
  %v45 = vld [vmem:[%s0 + $0xf0] sm:$0xff]
  %v46 = vld [vmem:[%s0 + $0xf8] sm:$0xff]
  %v47 = vld [vmem:[%s0 + $0x100] sm:$0xff]
  %v48 = vld [vmem:[%s0 + $0x108] sm:$0xff]
  %v49 = vld [vmem:[%s0 + $0x110] sm:$0xff]
  %v50 = vld [vmem:[%s0 + $0x118] sm:$0xff]
  %v51 = vld [vmem:[%s0 + $0x120] sm:$0xff]
  %v52 = vld [vmem:[%s0 + $0x128] sm:$0xff]
  %v53 = vld [vmem:[%s0 + $0x130] sm:$0xff]
  %v54 = vld [vmem:[%s0 + $0x138] sm:$0xff]
  %v55 = vld [vmem:[%s0 + $0x140] sm:$0xff]
  %v56 = vld [vmem:[%s0 + $0x148] sm:$0xff]
  %v57 = vld [vmem:[%s0 + $0x150] sm:$0xff]
  %v58 = vld [vmem:[%s0 + $0x158] sm:$0xff]
  %v59 = vld [vmem:[%s0 + $0x160] sm:$0xff]
  %v60 = vld [vmem:[%s0 + $0x168] sm:$0xff]
  %v61 = vld [vmem:[%s0 + $0x170] sm:$0xff]
  %v62 = vld [vmem:[%s0 + $0x178] sm:$0xff]
  %v63 = vld [vmem:[%s0 + $0x180] sm:$0xff]
  %v64 = vld [vmem:[%s0 + $0x188] sm:$0xff]
  %v65 = vld [vmem:[%s0 + $0x190] sm:$0xff]
  %v66 = vld [vmem:[%s0 + $0x198] sm:$0xff]
  %v67 = vld [vmem:[%s0 + $0x1a0] sm:$0xff]
  %v68 = vld [vmem:[%s0 + $0x1a8] sm:$0xff]
  %v69 = vld [vmem:[%s0 + $0x1b0] sm:$0xff]
  %v70 = vld [vmem:[%s0 + $0x1b8] sm:$0xff]
  %v71 = vld [vmem:[%s0 + $0x1c0] sm:$0xff]
  %v72 = vld [vmem:[%s0 + $0x1c8] sm:$0xff]
  %v73 = vld [vmem:[%s0 + $0x1d0] sm:$0xff]
  %v74 = vld [vmem:[%s0 + $0x1d8] sm:$0xff]
  %v75 = vld [vmem:[%s0 + $0x1e0] sm:$0xff]
  %v76 = vld [vmem:[%s0 + $0x1e8] sm:$0xff]
  %v77 = vld [vmem:[%s0 + $0x1f0] sm:$0xff]
  %v78 = vld [vmem:[%s0 + $0x1f8] sm:$0xff]
  %v79 = vld [vmem:[%s1] sm:$0x1]
  %v80 = vlaneseq
  %v81 = vshrl.u32 %v80, 7
  %v82 = vsub.s32 0, %v81
  %v83 = vrot.slane %v79, %v82
  %v84 = vmul.f32 %v15, %v83
  %v85 = vmul.f32 %v16, %v83
  %v86 = vmul.f32 %v17, %v83
  %v87 = vmul.f32 %v18, %v83
  %v88 = vmul.f32 %v19, %v83
  %v89 = vmul.f32 %v20, %v83
  %v90 = vmul.f32 %v21, %v83
  %v91 = vmul.f32 %v22, %v83
  %v92 = vmul.f32 %v23, %v83
  %v93 = vmul.f32 %v24, %v83
  %v94 = vmul.f32 %v25, %v83
  %v95 = vmul.f32 %v26, %v83
  %v96 = vmul.f32 %v27, %v83
  %v97 = vmul.f32 %v28, %v83
  %v98 = vmul.f32 %v29, %v83
  %v99 = vmul.f32 %v30, %v83
  %v100 = vmul.f32 %v31, %v83
  %v101 = vmul.f32 %v32, %v83
  %v102 = vmul.f32 %v33, %v83
  %v103 = vmul.f32 %v34, %v83
  %v104 = vmul.f32 %v35, %v83
  %v105 = vmul.f32 %v36, %v83
  %v106 = vmul.f32 %v37, %v83
  %v107 = vmul.f32 %v38, %v83
  %v108 = vmul.f32 %v39, %v83
  %v109 = vmul.f32 %v40, %v83
  %v110 = vmul.f32 %v41, %v83
  %v111 = vmul.f32 %v42, %v83
  %v112 = vmul.f32 %v43, %v83
  %v113 = vmul.f32 %v44, %v83
  %v114 = vmul.f32 %v45, %v83
  %v115 = vmul.f32 %v46, %v83
  %v116 = vmul.f32 %v47, %v83
  %v117 = vmul.f32 %v48, %v83
  %v118 = vmul.f32 %v49, %v83
  %v119 = vmul.f32 %v50, %v83
  %v120 = vmul.f32 %v51, %v83
  %v121 = vmul.f32 %v52, %v83
  %v122 = vmul.f32 %v53, %v83
  %v123 = vmul.f32 %v54, %v83
  %v124 = vmul.f32 %v55, %v83
  %v125 = vmul.f32 %v56, %v83
  %v126 = vmul.f32 %v57, %v83
  %v127 = vmul.f32 %v58, %v83
  %v128 = vmul.f32 %v59, %v83
  %v129 = vmul.f32 %v60, %v83
  %v130 = vmul.f32 %v61, %v83
  %v131 = vmul.f32 %v62, %v83
  %v132 = vmul.f32 %v63, %v83
  %v133 = vmul.f32 %v64, %v83
  %v134 = vmul.f32 %v65, %v83
  %v135 = vmul.f32 %v66, %v83
  %v136 = vmul.f32 %v67, %v83
  %v137 = vmul.f32 %v68, %v83
  %v138 = vmul.f32 %v69, %v83
  %v139 = vmul.f32 %v70, %v83
  %v140 = vmul.f32 %v71, %v83
  %v141 = vmul.f32 %v72, %v83
  %v142 = vmul.f32 %v73, %v83
  %v143 = vmul.f32 %v74, %v83
  %v144 = vmul.f32 %v75, %v83
  %v145 = vmul.f32 %v76, %v83
  %v146 = vmul.f32 %v77, %v83
  %v147 = vmul.f32 %v78, %v83
  %v148 = vld [vmem:[%s1 + $0x1] sm:$0x1]
  %v149 = vlaneseq
  %v150 = vshrl.u32 %v149, 7
  %v151 = vsub.s32 0, %v150
  %v152 = vrot.slane %v148, %v151
  %v153 = vadd.f32 %v84, %v152
  %v154 = vadd.f32 %v85, %v152
  %v155 = vadd.f32 %v86, %v152
  %v156 = vadd.f32 %v87, %v152
  %v157 = vadd.f32 %v88, %v152
  %v158 = vadd.f32 %v89, %v152
  %v159 = vadd.f32 %v90, %v152
  %v160 = vadd.f32 %v91, %v152
  %v161 = vadd.f32 %v92, %v152
  %v162 = vadd.f32 %v93, %v152
  %v163 = vadd.f32 %v94, %v152
  %v164 = vadd.f32 %v95, %v152
  %v165 = vadd.f32 %v96, %v152
  %v166 = vadd.f32 %v97, %v152
  %v167 = vadd.f32 %v98, %v152
  %v168 = vadd.f32 %v99, %v152
  %v169 = vadd.f32 %v100, %v152
  %v170 = vadd.f32 %v101, %v152
  %v171 = vadd.f32 %v102, %v152
  %v172 = vadd.f32 %v103, %v152
  %v173 = vadd.f32 %v104, %v152
  %v174 = vadd.f32 %v105, %v152
  %v175 = vadd.f32 %v106, %v152
  %v176 = vadd.f32 %v107, %v152
  %v177 = vadd.f32 %v108, %v152
  %v178 = vadd.f32 %v109, %v152
  %v179 = vadd.f32 %v110, %v152
  %v180 = vadd.f32 %v111, %v152
  %v181 = vadd.f32 %v112, %v152
  %v182 = vadd.f32 %v113, %v152
  %v183 = vadd.f32 %v114, %v152
  %v184 = vadd.f32 %v115, %v152
  %v185 = vadd.f32 %v116, %v152
  %v186 = vadd.f32 %v117, %v152
  %v187 = vadd.f32 %v118, %v152
  %v188 = vadd.f32 %v119, %v152
  %v189 = vadd.f32 %v120, %v152
  %v190 = vadd.f32 %v121, %v152
  %v191 = vadd.f32 %v122, %v152
  %v192 = vadd.f32 %v123, %v152
  %v193 = vadd.f32 %v124, %v152
  %v194 = vadd.f32 %v125, %v152
  %v195 = vadd.f32 %v126, %v152
  %v196 = vadd.f32 %v127, %v152
  %v197 = vadd.f32 %v128, %v152
  %v198 = vadd.f32 %v129, %v152
  %v199 = vadd.f32 %v130, %v152
  %v200 = vadd.f32 %v131, %v152
  %v201 = vadd.f32 %v132, %v152
  %v202 = vadd.f32 %v133, %v152
  %v203 = vadd.f32 %v134, %v152
  %v204 = vadd.f32 %v135, %v152
  %v205 = vadd.f32 %v136, %v152
  %v206 = vadd.f32 %v137, %v152
  %v207 = vadd.f32 %v138, %v152
  %v208 = vadd.f32 %v139, %v152
  %v209 = vadd.f32 %v140, %v152
  %v210 = vadd.f32 %v141, %v152
  %v211 = vadd.f32 %v142, %v152
  %v212 = vadd.f32 %v143, %v152
  %v213 = vadd.f32 %v144, %v152
  %v214 = vadd.f32 %v145, %v152
  %v215 = vadd.f32 %v146, %v152
  %v216 = vadd.f32 %v147, %v152
  %v217 = vmax.f32 %v153, 0.0
  %v218 = vmax.f32 %v154, 0.0
  %v219 = vmax.f32 %v155, 0.0
  %v220 = vmax.f32 %v156, 0.0
  %v221 = vmax.f32 %v157, 0.0
  %v222 = vmax.f32 %v158, 0.0
  %v223 = vmax.f32 %v159, 0.0
  %v224 = vmax.f32 %v160, 0.0
  %v225 = vmax.f32 %v161, 0.0
  %v226 = vmax.f32 %v162, 0.0
  %v227 = vmax.f32 %v163, 0.0
  %v228 = vmax.f32 %v164, 0.0
  %v229 = vmax.f32 %v165, 0.0
  %v230 = vmax.f32 %v166, 0.0
  %v231 = vmax.f32 %v167, 0.0
  %v232 = vmax.f32 %v168, 0.0
  %v233 = vmax.f32 %v169, 0.0
  %v234 = vmax.f32 %v170, 0.0
  %v235 = vmax.f32 %v171, 0.0
  %v236 = vmax.f32 %v172, 0.0
  %v237 = vmax.f32 %v173, 0.0
  %v238 = vmax.f32 %v174, 0.0
  %v239 = vmax.f32 %v175, 0.0
  %v240 = vmax.f32 %v176, 0.0
  %v241 = vmax.f32 %v177, 0.0
  %v242 = vmax.f32 %v178, 0.0
  %v243 = vmax.f32 %v179, 0.0
  %v244 = vmax.f32 %v180, 0.0
  %v245 = vmax.f32 %v181, 0.0
  %v246 = vmax.f32 %v182, 0.0
  %v247 = vmax.f32 %v183, 0.0
  %v248 = vmax.f32 %v184, 0.0
  %v249 = vmax.f32 %v185, 0.0
  %v250 = vmax.f32 %v186, 0.0
  %v251 = vmax.f32 %v187, 0.0
  %v252 = vmax.f32 %v188, 0.0
  %v253 = vmax.f32 %v189, 0.0
  %v254 = vmax.f32 %v190, 0.0
  %v255 = vmax.f32 %v191, 0.0
  %v256 = vmax.f32 %v192, 0.0
  %v257 = vmax.f32 %v193, 0.0
  %v258 = vmax.f32 %v194, 0.0
  %v259 = vmax.f32 %v195, 0.0
  %v260 = vmax.f32 %v196, 0.0
  %v261 = vmax.f32 %v197, 0.0
  %v262 = vmax.f32 %v198, 0.0
  %v263 = vmax.f32 %v199, 0.0
  %v264 = vmax.f32 %v200, 0.0
  %v265 = vmax.f32 %v201, 0.0
  %v266 = vmax.f32 %v202, 0.0
  %v267 = vmax.f32 %v203, 0.0
  %v268 = vmax.f32 %v204, 0.0
  %v269 = vmax.f32 %v205, 0.0
  %v270 = vmax.f32 %v206, 0.0
  %v271 = vmax.f32 %v207, 0.0
  %v272 = vmax.f32 %v208, 0.0
  %v273 = vmax.f32 %v209, 0.0
  %v274 = vmax.f32 %v210, 0.0
  %v275 = vmax.f32 %v211, 0.0
  %v276 = vmax.f32 %v212, 0.0
  %v277 = vmax.f32 %v213, 0.0
  %v278 = vmax.f32 %v214, 0.0
  %v279 = vmax.f32 %v215, 0.0
  %v280 = vmax.f32 %v216, 0.0
  %v281 = vpack.c.bf16 %v218, %v217
  %v282 = vpack.c.bf16 %v220, %v219
  %v283 = vpack.c.bf16 %v222, %v221
  %v284 = vpack.c.bf16 %v224, %v223
  %v285 = vpack.c.bf16 %v226, %v225
  %v286 = vpack.c.bf16 %v228, %v227
  %v287 = vpack.c.bf16 %v230, %v229
  %v288 = vpack.c.bf16 %v232, %v231
  %v289 = vpack.c.bf16 %v234, %v233
  %v290 = vpack.c.bf16 %v236, %v235
  %v291 = vpack.c.bf16 %v238, %v237
  %v292 = vpack.c.bf16 %v240, %v239
  %v293 = vpack.c.bf16 %v242, %v241
  %v294 = vpack.c.bf16 %v244, %v243
  %v295 = vpack.c.bf16 %v246, %v245
  %v296 = vpack.c.bf16 %v248, %v247
  %v297 = vpack.c.bf16 %v250, %v249
  %v298 = vpack.c.bf16 %v252, %v251
  %v299 = vpack.c.bf16 %v254, %v253
  %v300 = vpack.c.bf16 %v256, %v255
  %v301 = vpack.c.bf16 %v258, %v257
  %v302 = vpack.c.bf16 %v260, %v259
  %v303 = vpack.c.bf16 %v262, %v261
  %v304 = vpack.c.bf16 %v264, %v263
  %v305 = vpack.c.bf16 %v266, %v265
  %v306 = vpack.c.bf16 %v268, %v267
  %v307 = vpack.c.bf16 %v270, %v269
  %v308 = vpack.c.bf16 %v272, %v271
  %v309 = vpack.c.bf16 %v274, %v273
  %v310 = vpack.c.bf16 %v276, %v275
  %v311 = vpack.c.bf16 %v278, %v277
  %v312 = vpack.c.bf16 %v280, %v279
  %v313 = vld [vmem:[%s2] sm:$0xf]
  %vm314 = vcmask 64512
  %v316 = vsel %vm314, %v281, 0
  %v319 = vsel %vm314, %v282, 0
  %v322 = vsel %vm314, %v283, 0
  %v325 = vsel %vm314, %v284, 0
  %v328 = vsel %vm314, %v285, 0
  %v331 = vsel %vm314, %v286, 0
  %v334 = vsel %vm314, %v287, 0
  %v337 = vsel %vm314, %v288, 0
  %v340 = vsel %vm314, %v289, 0
  %v343 = vsel %vm314, %v290, 0
  %v346 = vsel %vm314, %v291, 0
  %v349 = vsel %vm314, %v292, 0
  %v352 = vsel %vm314, %v293, 0
  %v355 = vsel %vm314, %v294, 0
  %v358 = vsel %vm314, %v295, 0
  %v361 = vsel %vm314, %v296, 0
  %v364 = vsel %vm314, %v297, 0
  %v367 = vsel %vm314, %v298, 0
  %v370 = vsel %vm314, %v299, 0
  %v373 = vsel %vm314, %v300, 0
  %v376 = vsel %vm314, %v301, 0
  %v379 = vsel %vm314, %v302, 0
  %v382 = vsel %vm314, %v303, 0
  %v385 = vsel %vm314, %v304, 0
  %v388 = vsel %vm314, %v305, 0
  %v391 = vsel %vm314, %v306, 0
  %v394 = vsel %vm314, %v307, 0
  %v397 = vsel %vm314, %v308, 0
  %v400 = vsel %vm314, %v309, 0
  %v403 = vsel %vm314, %v310, 0
  %v406 = vsel %vm314, %v311, 0
  %v409 = vsel %vm314, %v312, 0
  %vm411 = vcmask 1043456
  %v413 = vsel %vm411, %v313, 0
  %415 = vmatprep.subr.bf16.mxu0 0
  %416 = vmatpush1.bf16.msra.mxu0 0
  %417 = vmatprep.subr.bf16.mxu0 0
  %418 = vmatpush1.bf16.msra.mxu0 0
  %419 = vmatprep.subr.bf16.mxu0 0
  %420 = vmatpush1.bf16.msra.mxu0 0
  %421 = vmatprep.subr.bf16.mxu0 0
  %422 = vmatpush1.bf16.msra.mxu0 0
  %423 = vmatprep.subr.bf16.mxu0 0
  %424 = vmatpush1.bf16.msra.mxu0 0
  %425 = vmatprep.subr.bf16.mxu0 0
  %426 = vmatpush1.bf16.msra.mxu0 0
  %427 = vmatprep.subr.bf16.mxu0 0
  %428 = vmatpush1.bf16.msra.mxu0 0
  %429 = vmatprep.subr.bf16.mxu0 0
  %430 = vmatpush1.bf16.msra.mxu0 %v413
  %431 = vmatprep.subr.bf16.mxu0 0
  %432 = vmatpush2.bf16.msra.mxu0 0
  %433 = vmatprep.subr.bf16.mxu0 0
  %434 = vmatpush2.bf16.msra.mxu0 0
  %435 = vmatprep.subr.bf16.mxu0 0
  %436 = vmatpush2.bf16.msra.mxu0 0
  %437 = vmatprep.subr.bf16.mxu0 0
  %438 = vmatpush2.bf16.msra.mxu0 0
  %439 = vmatprep.subr.bf16.mxu0 0
  %440 = vmatpush2.bf16.msra.mxu0 0
  %441 = vmatprep.subr.bf16.mxu0 0
  %442 = vmatpush2.bf16.msra.mxu0 0
  %443 = vmatprep.subr.bf16.mxu0 0
  %444 = vmatpush2.bf16.msra.mxu0 0
  %445 = vmatprep.subr.bf16.mxu0 0
  %446 = vmatpush2.bf16.msra.mxu0 0
  %447 = vmatprep.mubr.bf16.mxu0 0
  %448 = vmatmul.mubr.bf16.gmra.mxu0 %v316
  %v449 = vpop.f32.mrf.mxu0
  %v450 = vadd.f32 0.0, %v449
  %v451 = vpop.f32.mrf.mxu0
  %v452 = vpop.f32.mrf.mxu0
  %v453 = vadd.f32 0.0, %v452
  %v454 = vpop.f32.mrf.mxu0
  %455 = vmatprep.mubr.bf16.mxu0 0
  %456 = vmatmul.mubr.bf16.gmra.mxu0 %v319
  %v457 = vpop.f32.mrf.mxu0
  %v458 = vadd.f32 0.0, %v457
  %v459 = vpop.f32.mrf.mxu0
  %v460 = vpop.f32.mrf.mxu0
  %v461 = vadd.f32 0.0, %v460
  %v462 = vpop.f32.mrf.mxu0
  %463 = vmatprep.mubr.bf16.mxu0 0
  %464 = vmatmul.mubr.bf16.gmra.mxu0 %v322
  %v465 = vpop.f32.mrf.mxu0
  %v466 = vadd.f32 0.0, %v465
  %v467 = vpop.f32.mrf.mxu0
  %v468 = vpop.f32.mrf.mxu0
  %v469 = vadd.f32 0.0, %v468
  %v470 = vpop.f32.mrf.mxu0
  %471 = vmatprep.mubr.bf16.mxu0 0
  %472 = vmatmul.mubr.bf16.gmra.mxu0 %v325
  %v473 = vpop.f32.mrf.mxu0
  %v474 = vadd.f32 0.0, %v473
  %v475 = vpop.f32.mrf.mxu0
  %v476 = vpop.f32.mrf.mxu0
  %v477 = vadd.f32 0.0, %v476
  %v478 = vpop.f32.mrf.mxu0
  %479 = vmatprep.mubr.bf16.mxu0 0
  %480 = vmatmul.mubr.bf16.gmra.mxu0 %v328
  %v481 = vpop.f32.mrf.mxu0
  %v482 = vadd.f32 0.0, %v481
  %v483 = vpop.f32.mrf.mxu0
  %v484 = vpop.f32.mrf.mxu0
  %v485 = vadd.f32 0.0, %v484
  %v486 = vpop.f32.mrf.mxu0
  %487 = vmatprep.mubr.bf16.mxu0 0
  %488 = vmatmul.mubr.bf16.gmra.mxu0 %v331
  %v489 = vpop.f32.mrf.mxu0
  %v490 = vadd.f32 0.0, %v489
  %v491 = vpop.f32.mrf.mxu0
  %v492 = vpop.f32.mrf.mxu0
  %v493 = vadd.f32 0.0, %v492
  %v494 = vpop.f32.mrf.mxu0
  %495 = vmatprep.mubr.bf16.mxu0 0
  %496 = vmatmul.mubr.bf16.gmra.mxu0 %v334
  %v497 = vpop.f32.mrf.mxu0
  %v498 = vadd.f32 0.0, %v497
  %v499 = vpop.f32.mrf.mxu0
  %v500 = vpop.f32.mrf.mxu0
  %v501 = vadd.f32 0.0, %v500
  %v502 = vpop.f32.mrf.mxu0
  %503 = vmatprep.mubr.bf16.mxu0 0
  %504 = vmatmul.mubr.bf16.gmra.mxu0 %v337
  %v505 = vpop.f32.mrf.mxu0
  %v506 = vadd.f32 0.0, %v505
  %v507 = vpop.f32.mrf.mxu0
  %v508 = vpop.f32.mrf.mxu0
  %v509 = vadd.f32 0.0, %v508
  %v510 = vpop.f32.mrf.mxu0
  %511 = vmatprep.mubr.bf16.mxu0 0
  %512 = vmatmul.mubr.bf16.gmra.mxu0 %v340
  %v513 = vpop.f32.mrf.mxu0
  %v514 = vadd.f32 0.0, %v513
  %v515 = vpop.f32.mrf.mxu0
  %v516 = vpop.f32.mrf.mxu0
  %v517 = vadd.f32 0.0, %v516
  %v518 = vpop.f32.mrf.mxu0
  %519 = vmatprep.mubr.bf16.mxu0 0
  %520 = vmatmul.mubr.bf16.gmra.mxu0 %v343
  %v521 = vpop.f32.mrf.mxu0
  %v522 = vadd.f32 0.0, %v521
  %v523 = vpop.f32.mrf.mxu0
  %v524 = vpop.f32.mrf.mxu0
  %v525 = vadd.f32 0.0, %v524
  %v526 = vpop.f32.mrf.mxu0
  %527 = vmatprep.mubr.bf16.mxu0 0
  %528 = vmatmul.mubr.bf16.gmra.mxu0 %v346
  %v529 = vpop.f32.mrf.mxu0
  %v530 = vadd.f32 0.0, %v529
  %v531 = vpop.f32.mrf.mxu0
  %v532 = vpop.f32.mrf.mxu0
  %v533 = vadd.f32 0.0, %v532
  %v534 = vpop.f32.mrf.mxu0
  %535 = vmatprep.mubr.bf16.mxu0 0
  %536 = vmatmul.mubr.bf16.gmra.mxu0 %v349
  %v537 = vpop.f32.mrf.mxu0
  %v538 = vadd.f32 0.0, %v537
  %v539 = vpop.f32.mrf.mxu0
  %v540 = vpop.f32.mrf.mxu0
  %v541 = vadd.f32 0.0, %v540
  %v542 = vpop.f32.mrf.mxu0
  %543 = vmatprep.mubr.bf16.mxu0 0
  %544 = vmatmul.mubr.bf16.gmra.mxu0 %v352
  %v545 = vpop.f32.mrf.mxu0
  %v546 = vadd.f32 0.0, %v545
  %v547 = vpop.f32.mrf.mxu0
  %v548 = vpop.f32.mrf.mxu0
  %v549 = vadd.f32 0.0, %v548
  %v550 = vpop.f32.mrf.mxu0
  %551 = vmatprep.mubr.bf16.mxu0 0
  %552 = vmatmul.mubr.bf16.gmra.mxu0 %v355
  %v553 = vpop.f32.mrf.mxu0
  %v554 = vadd.f32 0.0, %v553
  %v555 = vpop.f32.mrf.mxu0
  %v556 = vpop.f32.mrf.mxu0
  %v557 = vadd.f32 0.0, %v556
  %v558 = vpop.f32.mrf.mxu0
  %559 = vmatprep.mubr.bf16.mxu0 0
  %560 = vmatmul.mubr.bf16.gmra.mxu0 %v358
  %v561 = vpop.f32.mrf.mxu0
  %v562 = vadd.f32 0.0, %v561
  %v563 = vpop.f32.mrf.mxu0
  %v564 = vpop.f32.mrf.mxu0
  %v565 = vadd.f32 0.0, %v564
  %v566 = vpop.f32.mrf.mxu0
  %567 = vmatprep.mubr.bf16.mxu0 0
  %568 = vmatmul.mubr.bf16.gmra.mxu0 %v361
  %v569 = vpop.f32.mrf.mxu0
  %v570 = vadd.f32 0.0, %v569
  %v571 = vpop.f32.mrf.mxu0
  %v572 = vpop.f32.mrf.mxu0
  %v573 = vadd.f32 0.0, %v572
  %v574 = vpop.f32.mrf.mxu0
  %575 = vmatprep.mubr.bf16.mxu0 0
  %576 = vmatmul.mubr.bf16.gmra.mxu0 %v364
  %v577 = vpop.f32.mrf.mxu0
  %v578 = vadd.f32 0.0, %v577
  %v579 = vpop.f32.mrf.mxu0
  %v580 = vpop.f32.mrf.mxu0
  %v581 = vadd.f32 0.0, %v580
  %v582 = vpop.f32.mrf.mxu0
  %583 = vmatprep.mubr.bf16.mxu0 0
  %584 = vmatmul.mubr.bf16.gmra.mxu0 %v367
  %v585 = vpop.f32.mrf.mxu0
  %v586 = vadd.f32 0.0, %v585
  %v587 = vpop.f32.mrf.mxu0
  %v588 = vpop.f32.mrf.mxu0
  %v589 = vadd.f32 0.0, %v588
  %v590 = vpop.f32.mrf.mxu0
  %591 = vmatprep.mubr.bf16.mxu0 0
  %592 = vmatmul.mubr.bf16.gmra.mxu0 %v370
  %v593 = vpop.f32.mrf.mxu0
  %v594 = vadd.f32 0.0, %v593
  %v595 = vpop.f32.mrf.mxu0
  %v596 = vpop.f32.mrf.mxu0
  %v597 = vadd.f32 0.0, %v596
  %v598 = vpop.f32.mrf.mxu0
  %599 = vmatprep.mubr.bf16.mxu0 0
  %600 = vmatmul.mubr.bf16.gmra.mxu0 %v373
  %v601 = vpop.f32.mrf.mxu0
  %v602 = vadd.f32 0.0, %v601
  %v603 = vpop.f32.mrf.mxu0
  %v604 = vpop.f32.mrf.mxu0
  %v605 = vadd.f32 0.0, %v604
  %v606 = vpop.f32.mrf.mxu0
  %607 = vmatprep.mubr.bf16.mxu0 0
  %608 = vmatmul.mubr.bf16.gmra.mxu0 %v376
  %v609 = vpop.f32.mrf.mxu0
  %v610 = vadd.f32 0.0, %v609
  %v611 = vpop.f32.mrf.mxu0
  %v612 = vpop.f32.mrf.mxu0
  %v613 = vadd.f32 0.0, %v612
  %v614 = vpop.f32.mrf.mxu0
  %615 = vmatprep.mubr.bf16.mxu0 0
  %616 = vmatmul.mubr.bf16.gmra.mxu0 %v379
  %v617 = vpop.f32.mrf.mxu0
  %v618 = vadd.f32 0.0, %v617
  %v619 = vpop.f32.mrf.mxu0
  %v620 = vpop.f32.mrf.mxu0
  %v621 = vadd.f32 0.0, %v620
  %v622 = vpop.f32.mrf.mxu0
  %623 = vmatprep.mubr.bf16.mxu0 0
  %624 = vmatmul.mubr.bf16.gmra.mxu0 %v382
  %v625 = vpop.f32.mrf.mxu0
  %v626 = vadd.f32 0.0, %v625
  %v627 = vpop.f32.mrf.mxu0
  %v628 = vpop.f32.mrf.mxu0
  %v629 = vadd.f32 0.0, %v628
  %v630 = vpop.f32.mrf.mxu0
  %631 = vmatprep.mubr.bf16.mxu0 0
  %632 = vmatmul.mubr.bf16.gmra.mxu0 %v385
  %v633 = vpop.f32.mrf.mxu0
  %v634 = vadd.f32 0.0, %v633
  %v635 = vpop.f32.mrf.mxu0
  %v636 = vpop.f32.mrf.mxu0
  %v637 = vadd.f32 0.0, %v636
  %v638 = vpop.f32.mrf.mxu0
  %639 = vmatprep.mubr.bf16.mxu0 0
  %640 = vmatmul.mubr.bf16.gmra.mxu0 %v388
  %v641 = vpop.f32.mrf.mxu0
  %v642 = vadd.f32 0.0, %v641
  %v643 = vpop.f32.mrf.mxu0
  %v644 = vpop.f32.mrf.mxu0
  %v645 = vadd.f32 0.0, %v644
  %v646 = vpop.f32.mrf.mxu0
  %647 = vmatprep.mubr.bf16.mxu0 0
  %648 = vmatmul.mubr.bf16.gmra.mxu0 %v391
  %v649 = vpop.f32.mrf.mxu0
  %v650 = vadd.f32 0.0, %v649
  %v651 = vpop.f32.mrf.mxu0
  %v652 = vpop.f32.mrf.mxu0
  %v653 = vadd.f32 0.0, %v652
  %v654 = vpop.f32.mrf.mxu0
  %655 = vmatprep.mubr.bf16.mxu0 0
  %656 = vmatmul.mubr.bf16.gmra.mxu0 %v394
  %v657 = vpop.f32.mrf.mxu0
  %v658 = vadd.f32 0.0, %v657
  %v659 = vpop.f32.mrf.mxu0
  %v660 = vpop.f32.mrf.mxu0
  %v661 = vadd.f32 0.0, %v660
  %v662 = vpop.f32.mrf.mxu0
  %663 = vmatprep.mubr.bf16.mxu0 0
  %664 = vmatmul.mubr.bf16.gmra.mxu0 %v397
  %v665 = vpop.f32.mrf.mxu0
  %v666 = vadd.f32 0.0, %v665
  %v667 = vpop.f32.mrf.mxu0
  %v668 = vpop.f32.mrf.mxu0
  %v669 = vadd.f32 0.0, %v668
  %v670 = vpop.f32.mrf.mxu0
  %671 = vmatprep.mubr.bf16.mxu0 0
  %672 = vmatmul.mubr.bf16.gmra.mxu0 %v400
  %v673 = vpop.f32.mrf.mxu0
  %v674 = vadd.f32 0.0, %v673
  %v675 = vpop.f32.mrf.mxu0
  %v676 = vpop.f32.mrf.mxu0
  %v677 = vadd.f32 0.0, %v676
  %v678 = vpop.f32.mrf.mxu0
  %679 = vmatprep.mubr.bf16.mxu0 0
  %680 = vmatmul.mubr.bf16.gmra.mxu0 %v403
  %v681 = vpop.f32.mrf.mxu0
  %v682 = vadd.f32 0.0, %v681
  %v683 = vpop.f32.mrf.mxu0
  %v684 = vpop.f32.mrf.mxu0
  %v685 = vadd.f32 0.0, %v684
  %v686 = vpop.f32.mrf.mxu0
  %687 = vmatprep.mubr.bf16.mxu0 0
  %688 = vmatmul.mubr.bf16.gmra.mxu0 %v406
  %v689 = vpop.f32.mrf.mxu0
  %v690 = vadd.f32 0.0, %v689
  %v691 = vpop.f32.mrf.mxu0
  %v692 = vpop.f32.mrf.mxu0
  %v693 = vadd.f32 0.0, %v692
  %v694 = vpop.f32.mrf.mxu0
  %695 = vmatprep.mubr.bf16.mxu0 0
  %696 = vmatmul.mubr.bf16.gmra.mxu0 %v409
  %v697 = vpop.f32.mrf.mxu0
  %v698 = vadd.f32 0.0, %v697
  %v699 = vpop.f32.mrf.mxu0
  %v700 = vpop.f32.mrf.mxu0
  %v701 = vadd.f32 0.0, %v700
  %v702 = vpop.f32.mrf.mxu0
  %703 = vdwg.mxu0
  %vm704 = vcmask 392192
  %705 = vst.msk [vmem:[%s3] sm:$0xff] %vm704, %v450
  %706 = vst.msk [vmem:[%s3 + $0x8] sm:$0xff] %vm704, %v453
  %707 = vst.msk [vmem:[%s3 + $0x10] sm:$0xff] %vm704, %v458
  %708 = vst.msk [vmem:[%s3 + $0x18] sm:$0xff] %vm704, %v461
  %709 = vst.msk [vmem:[%s3 + $0x20] sm:$0xff] %vm704, %v466
  %710 = vst.msk [vmem:[%s3 + $0x28] sm:$0xff] %vm704, %v469
  %711 = vst.msk [vmem:[%s3 + $0x30] sm:$0xff] %vm704, %v474
  %712 = vst.msk [vmem:[%s3 + $0x38] sm:$0xff] %vm704, %v477
  %713 = vst.msk [vmem:[%s3 + $0x40] sm:$0xff] %vm704, %v482
  %714 = vst.msk [vmem:[%s3 + $0x48] sm:$0xff] %vm704, %v485
  %715 = vst.msk [vmem:[%s3 + $0x50] sm:$0xff] %vm704, %v490
  %716 = vst.msk [vmem:[%s3 + $0x58] sm:$0xff] %vm704, %v493
  %717 = vst.msk [vmem:[%s3 + $0x60] sm:$0xff] %vm704, %v498
  %718 = vst.msk [vmem:[%s3 + $0x68] sm:$0xff] %vm704, %v501
  %719 = vst.msk [vmem:[%s3 + $0x70] sm:$0xff] %vm704, %v506
  %720 = vst.msk [vmem:[%s3 + $0x78] sm:$0xff] %vm704, %v509
  %721 = vst.msk [vmem:[%s3 + $0x80] sm:$0xff] %vm704, %v514
  %722 = vst.msk [vmem:[%s3 + $0x88] sm:$0xff] %vm704, %v517
  %723 = vst.msk [vmem:[%s3 + $0x90] sm:$0xff] %vm704, %v522
  %724 = vst.msk [vmem:[%s3 + $0x98] sm:$0xff] %vm704, %v525
  %725 = vst.msk [vmem:[%s3 + $0xa0] sm:$0xff] %vm704, %v530
  %726 = vst.msk [vmem:[%s3 + $0xa8] sm:$0xff] %vm704, %v533
  %727 = vst.msk [vmem:[%s3 + $0xb0] sm:$0xff] %vm704, %v538
  %728 = vst.msk [vmem:[%s3 + $0xb8] sm:$0xff] %vm704, %v541
  %729 = vst.msk [vmem:[%s3 + $0xc0] sm:$0xff] %vm704, %v546
  %730 = vst.msk [vmem:[%s3 + $0xc8] sm:$0xff] %vm704, %v549
  %731 = vst.msk [vmem:[%s3 + $0xd0] sm:$0xff] %vm704, %v554
  %732 = vst.msk [vmem:[%s3 + $0xd8] sm:$0xff] %vm704, %v557
  %733 = vst.msk [vmem:[%s3 + $0xe0] sm:$0xff] %vm704, %v562
  %734 = vst.msk [vmem:[%s3 + $0xe8] sm:$0xff] %vm704, %v565
  %735 = vst.msk [vmem:[%s3 + $0xf0] sm:$0xff] %vm704, %v570
  %736 = vst.msk [vmem:[%s3 + $0xf8] sm:$0xff] %vm704, %v573
  %737 = vst.msk [vmem:[%s3 + $0x100] sm:$0xff] %vm704, %v578
  %738 = vst.msk [vmem:[%s3 + $0x108] sm:$0xff] %vm704, %v581
  %739 = vst.msk [vmem:[%s3 + $0x110] sm:$0xff] %vm704, %v586
  %740 = vst.msk [vmem:[%s3 + $0x118] sm:$0xff] %vm704, %v589
  %741 = vst.msk [vmem:[%s3 + $0x120] sm:$0xff] %vm704, %v594
  %742 = vst.msk [vmem:[%s3 + $0x128] sm:$0xff] %vm704, %v597
  %743 = vst.msk [vmem:[%s3 + $0x130] sm:$0xff] %vm704, %v602
  %744 = vst.msk [vmem:[%s3 + $0x138] sm:$0xff] %vm704, %v605
  %745 = vst.msk [vmem:[%s3 + $0x140] sm:$0xff] %vm704, %v610
  %746 = vst.msk [vmem:[%s3 + $0x148] sm:$0xff] %vm704, %v613
  %747 = vst.msk [vmem:[%s3 + $0x150] sm:$0xff] %vm704, %v618
  %748 = vst.msk [vmem:[%s3 + $0x158] sm:$0xff] %vm704, %v621
  %749 = vst.msk [vmem:[%s3 + $0x160] sm:$0xff] %vm704, %v626
  %750 = vst.msk [vmem:[%s3 + $0x168] sm:$0xff] %vm704, %v629
  %751 = vst.msk [vmem:[%s3 + $0x170] sm:$0xff] %vm704, %v634
  %752 = vst.msk [vmem:[%s3 + $0x178] sm:$0xff] %vm704, %v637
  %753 = vst.msk [vmem:[%s3 + $0x180] sm:$0xff] %vm704, %v642
  %754 = vst.msk [vmem:[%s3 + $0x188] sm:$0xff] %vm704, %v645
  %755 = vst.msk [vmem:[%s3 + $0x190] sm:$0xff] %vm704, %v650
  %756 = vst.msk [vmem:[%s3 + $0x198] sm:$0xff] %vm704, %v653
  %757 = vst.msk [vmem:[%s3 + $0x1a0] sm:$0xff] %vm704, %v658
  %758 = vst.msk [vmem:[%s3 + $0x1a8] sm:$0xff] %vm704, %v661
  %759 = vst.msk [vmem:[%s3 + $0x1b0] sm:$0xff] %vm704, %v666
  %760 = vst.msk [vmem:[%s3 + $0x1b8] sm:$0xff] %vm704, %v669
  %761 = vst.msk [vmem:[%s3 + $0x1c0] sm:$0xff] %vm704, %v674
  %762 = vst.msk [vmem:[%s3 + $0x1c8] sm:$0xff] %vm704, %v677
  %763 = vst.msk [vmem:[%s3 + $0x1d0] sm:$0xff] %vm704, %v682
  %764 = vst.msk [vmem:[%s3 + $0x1d8] sm:$0xff] %vm704, %v685
  %765 = vst.msk [vmem:[%s3 + $0x1e0] sm:$0xff] %vm704, %v690
  %766 = vst.msk [vmem:[%s3 + $0x1e8] sm:$0xff] %vm704, %v693
  %767 = vst.msk [vmem:[%s3 + $0x1f0] sm:$0xff] %vm704, %v698
  %768 = vst.msk [vmem:[%s3 + $0x1f8] sm:$0xff] %vm704, %v701
  // Predicated region
  $region14: #{can_generator_forward.13} parent=0 // pred_check
    _
  $region15: #{can_generator_forward.13} parent=0 // pred_check_branch
    %770 = sbr.rel (0) target = $region17
  $region16: #{can_generator_forward.13} parent=0 // pred_region
    _
  $region17: #{can_generator_forward.13} parent=0 // pred_fallthru
    _
  // Predicated region
  $region18: #{can_generator_forward.13} parent=0 // pred_check
    _
  $region19: #{can_generator_forward.13} parent=0 // pred_check_branch
    %772 = sbr.rel (0) target = $region21
  $region20: #{can_generator_forward.13} parent=0 // pred_region
    _
  $region21: #{can_generator_forward.13} parent=0 // pred_fallthru
    _

// kernel: tile.9
$region0: #{tile.9}
  %s0 = inlined_call_operand.vmem [shape: f32[2,32,3], index: 0, kind: input, shape index: {}]
  %s1 = inlined_call_operand.vmem [shape: f32[2,96], index: 1, kind: output, shape index: {}]
  $region1: #{tile.9} parent=0
    #allocation0 [shape = 'u8[4096]{0}', space=vmem, size = 0x1000, scoped, tag = 'scoped mem for output reshape']
    %v2 = vld [vmem:[%s0] sm:$0x1]
    %s3 = scalar_lea.vmem %s0, 31
    %v4 = vld [vmem:[%s3] sm:$0x2]
    %vm5 = vcmask 1041409
    %v6 = vsel %vm5, %v4, %v2
    %vm7 = vcmask 23552
    %8 = vst.msk [vmem:[#allocation0] sm:$0x3] %vm7, %v6
    %s9 = scalar_lea.vmem %s0, 31
    %v10 = vld [vmem:[%s9] sm:$0x1]
    %s11 = scalar_lea.vmem %s0, 62
    %v12 = vld [vmem:[%s11] sm:$0x2]
    %vm13 = vcmask 1041409
    %v14 = vsel %vm13, %v12, %v10
    %15 = vrot.lane.b32.xlu0 %v14, 93
    %v16 = vpop.permute.xlu0 %15
    %vm17 = vcmask 786152
    %18 = vst.msk [vmem:[#allocation0] sm:$0x3] %vm17, %v16
    %s19 = scalar_lea.vmem %s0, 30
    %v20 = vld [vmem:[%s19] sm:$0x1]
    %s21 = scalar_lea.vmem %s0, 61
    %v22 = vld [vmem:[%s21] sm:$0x2]
    %vm23 = vcmask 1041409
    %v24 = vsel %vm23, %v22, %v20
    %25 = vrot.lane.b32.xlu0 %v24, 90
    %v26 = vpop.permute.xlu0 %25
    %vm27 = vcmask 761552
    %28 = vst.msk [vmem:[#allocation0] sm:$0x3] %vm27, %v26
    %s29 = scalar_lea.vmem %s0, 29
    %v30 = vld [vmem:[%s29] sm:$0x1]
    %s31 = scalar_lea.vmem %s0, 60
    %v32 = vld [vmem:[%s31] sm:$0x2]
    %vm33 = vcmask 1041409
    %v34 = vsel %vm33, %v32, %v30
    %35 = vrot.lane.b32.xlu0 %v34, 87
    %v36 = vpop.permute.xlu0 %35
    %vm37 = vcmask 736952
    %38 = vst.msk [vmem:[#allocation0] sm:$0x3] %vm37, %v36
    %s39 = scalar_lea.vmem %s0, 28
    %v40 = vld [vmem:[%s39] sm:$0x1]
    %s41 = scalar_lea.vmem %s0, 59
    %v42 = vld [vmem:[%s41] sm:$0x2]
    %vm43 = vcmask 1041409
    %v44 = vsel %vm43, %v42, %v40
    %45 = vrot.lane.b32.xlu0 %v44, 84
    %v46 = vpop.permute.xlu0 %45
    %vm47 = vcmask 712352
    %48 = vst.msk [vmem:[#allocation0] sm:$0x3] %vm47, %v46
    %s49 = scalar_lea.vmem %s0, 27
    %v50 = vld [vmem:[%s49] sm:$0x1]
    %s51 = scalar_lea.vmem %s0, 58
    %v52 = vld [vmem:[%s51] sm:$0x2]
    %vm53 = vcmask 1041409
    %v54 = vsel %vm53, %v52, %v50
    %55 = vrot.lane.b32.xlu0 %v54, 81
    %v56 = vpop.permute.xlu0 %55
    %vm57 = vcmask 687752
    %58 = vst.msk [vmem:[#allocation0] sm:$0x3] %vm57, %v56
    %s59 = scalar_lea.vmem %s0, 26
    %v60 = vld [vmem:[%s59] sm:$0x1]
    %s61 = scalar_lea.vmem %s0, 57
    %v62 = vld [vmem:[%s61] sm:$0x2]
    %vm63 = vcmask 1041409
    %v64 = vsel %vm63, %v62, %v60
    %65 = vrot.lane.b32.xlu0 %v64, 78
    %v66 = vpop.permute.xlu0 %65
    %vm67 = vcmask 663152
    %68 = vst.msk [vmem:[#allocation0] sm:$0x3] %vm67, %v66
    %s69 = scalar_lea.vmem %s0, 25
    %v70 = vld [vmem:[%s69] sm:$0x1]
    %s71 = scalar_lea.vmem %s0, 56
    %v72 = vld [vmem:[%s71] sm:$0x2]
    %vm73 = vcmask 1041409
    %v74 = vsel %vm73, %v72, %v70
    %75 = vrot.lane.b32.xlu0 %v74, 75
    %v76 = vpop.permute.xlu0 %75
    %vm77 = vcmask 638552
    %78 = vst.msk [vmem:[#allocation0] sm:$0x3] %vm77, %v76
    %s79 = scalar_lea.vmem %s0, 24
    %v80 = vld [vmem:[%s79] sm:$0x1]
    %s81 = scalar_lea.vmem %s0, 55
    %v82 = vld [vmem:[%s81] sm:$0x2]
    %vm83 = vcmask 1041409
    %v84 = vsel %vm83, %v82, %v80
    %85 = vrot.lane.b32.xlu0 %v84, 72
    %v86 = vpop.permute.xlu0 %85
    %vm87 = vcmask 613952
    %88 = vst.msk [vmem:[#allocation0] sm:$0x3] %vm87, %v86
    %s89 = scalar_lea.vmem %s0, 23
    %v90 = vld [vmem:[%s89] sm:$0x1]
    %s91 = scalar_lea.vmem %s0, 54
    %v92 = vld [vmem:[%s91] sm:$0x2]
    %vm93 = vcmask 1041409
    %v94 = vsel %vm93, %v92, %v90
    %95 = vrot.lane.b32.xlu0 %v94, 69
    %v96 = vpop.permute.xlu0 %95
    %vm97 = vcmask 589352
    %98 = vst.msk [vmem:[#allocation0] sm:$0x3] %vm97, %v96
    %s99 = scalar_lea.vmem %s0, 22
    %v100 = vld [vmem:[%s99] sm:$0x1]
    %s101 = scalar_lea.vmem %s0, 53
    %v102 = vld [vmem:[%s101] sm:$0x2]
    %vm103 = vcmask 1041409
    %v104 = vsel %vm103, %v102, %v100
    %105 = vrot.lane.b32.xlu0 %v104, 66
    %v106 = vpop.permute.xlu0 %105
    %vm107 = vcmask 564752
    %108 = vst.msk [vmem:[#allocation0] sm:$0x3] %vm107, %v106
    %s109 = scalar_lea.vmem %s0, 21
    %v110 = vld [vmem:[%s109] sm:$0x1]
    %s111 = scalar_lea.vmem %s0, 52
    %v112 = vld [vmem:[%s111] sm:$0x2]
    %vm113 = vcmask 1041409
    %v114 = vsel %vm113, %v112, %v110
    %115 = vrot.lane.b32.xlu0 %v114, 63
    %v116 = vpop.permute.xlu0 %115
    %vm117 = vcmask 540152
    %118 = vst.msk [vmem:[#allocation0] sm:$0x3] %vm117, %v116
    %s119 = scalar_lea.vmem %s0, 20
    %v120 = vld [vmem:[%s119] sm:$0x1]
    %s121 = scalar_lea.vmem %s0, 51
    %v122 = vld [vmem:[%s121] sm:$0x2]
    %vm123 = vcmask 1041409
    %v124 = vsel %vm123, %v122, %v120
    %125 = vrot.lane.b32.xlu0 %v124, 60
    %v126 = vpop.permute.xlu0 %125
    %vm127 = vcmask 515552
    %128 = vst.msk [vmem:[#allocation0] sm:$0x3] %vm127, %v126
    %s129 = scalar_lea.vmem %s0, 19
    %v130 = vld [vmem:[%s129] sm:$0x1]
    %s131 = scalar_lea.vmem %s0, 50
    %v132 = vld [vmem:[%s131] sm:$0x2]
    %vm133 = vcmask 1041409
    %v134 = vsel %vm133, %v132, %v130
    %135 = vrot.lane.b32.xlu0 %v134, 57
    %v136 = vpop.permute.xlu0 %135
    %vm137 = vcmask 490952
    %138 = vst.msk [vmem:[#allocation0] sm:$0x3] %vm137, %v136
    %s139 = scalar_lea.vmem %s0, 18
    %v140 = vld [vmem:[%s139] sm:$0x1]
    %s141 = scalar_lea.vmem %s0, 49
    %v142 = vld [vmem:[%s141] sm:$0x2]
    %vm143 = vcmask 1041409
    %v144 = vsel %vm143, %v142, %v140
    %145 = vrot.lane.b32.xlu0 %v144, 54
    %v146 = vpop.permute.xlu0 %145
    %vm147 = vcmask 466352
    %148 = vst.msk [vmem:[#allocation0] sm:$0x3] %vm147, %v146
    %s149 = scalar_lea.vmem %s0, 17
    %v150 = vld [vmem:[%s149] sm:$0x1]
    %s151 = scalar_lea.vmem %s0, 48
    %v152 = vld [vmem:[%s151] sm:$0x2]
    %vm153 = vcmask 1041409
    %v154 = vsel %vm153, %v152, %v150
    %155 = vrot.lane.b32.xlu0 %v154, 51
    %v156 = vpop.permute.xlu0 %155
    %vm157 = vcmask 441752
    %158 = vst.msk [vmem:[#allocation0] sm:$0x3] %vm157, %v156
    %s159 = scalar_lea.vmem %s0, 16
    %v160 = vld [vmem:[%s159] sm:$0x1]
    %s161 = scalar_lea.vmem %s0, 47
    %v162 = vld [vmem:[%s161] sm:$0x2]
    %vm163 = vcmask 1041409
    %v164 = vsel %vm163, %v162, %v160
    %165 = vrot.lane.b32.xlu0 %v164, 48
    %v166 = vpop.permute.xlu0 %165
    %vm167 = vcmask 417152
    %168 = vst.msk [vmem:[#allocation0] sm:$0x3] %vm167, %v166
    %s169 = scalar_lea.vmem %s0, 15
    %v170 = vld [vmem:[%s169] sm:$0x1]
    %s171 = scalar_lea.vmem %s0, 46
    %v172 = vld [vmem:[%s171] sm:$0x2]
    %vm173 = vcmask 1041409
    %v174 = vsel %vm173, %v172, %v170
    %175 = vrot.lane.b32.xlu0 %v174, 45
    %v176 = vpop.permute.xlu0 %175
    %vm177 = vcmask 392552
    %178 = vst.msk [vmem:[#allocation0] sm:$0x3] %vm177, %v176
    %s179 = scalar_lea.vmem %s0, 14
    %v180 = vld [vmem:[%s179] sm:$0x1]
    %s181 = scalar_lea.vmem %s0, 45
    %v182 = vld [vmem:[%s181] sm:$0x2]
    %vm183 = vcmask 1041409
    %v184 = vsel %vm183, %v182, %v180
    %185 = vrot.lane.b32.xlu0 %v184, 42
    %v186 = vpop.permute.xlu0 %185
    %vm187 = vcmask 367952
    %188 = vst.msk [vmem:[#allocation0] sm:$0x3] %vm187, %v186
    %s189 = scalar_lea.vmem %s0, 13
    %v190 = vld [vmem:[%s189] sm:$0x1]
    %s191 = scalar_lea.vmem %s0, 44
    %v192 = vld [vmem:[%s191] sm:$0x2]
    %vm193 = vcmask 1041409
    %v194 = vsel %vm193, %v192, %v190
    %195 = vrot.lane.b32.xlu0 %v194, 39
    %v196 = vpop.permute.xlu0 %195
    %vm197 = vcmask 343352
    %198 = vst.msk [vmem:[#allocation0] sm:$0x3] %vm197, %v196
    %s199 = scalar_lea.vmem %s0, 12
    %v200 = vld [vmem:[%s199] sm:$0x1]
    %s201 = scalar_lea.vmem %s0, 43
    %v202 = vld [vmem:[%s201] sm:$0x2]
    %vm203 = vcmask 1041409
    %v204 = vsel %vm203, %v202, %v200
    %205 = vrot.lane.b32.xlu0 %v204, 36
    %v206 = vpop.permute.xlu0 %205
    %vm207 = vcmask 318752
    %208 = vst.msk [vmem:[#allocation0] sm:$0x3] %vm207, %v206
    %s209 = scalar_lea.vmem %s0, 11
    %v210 = vld [vmem:[%s209] sm:$0x1]
    %s211 = scalar_lea.vmem %s0, 42
    %v212 = vld [vmem:[%s211] sm:$0x2]
    %vm213 = vcmask 1041409
    %v214 = vsel %vm213, %v212, %v210
    %215 = vrot.lane.b32.xlu0 %v214, 33
    %v216 = vpop.permute.xlu0 %215
    %vm217 = vcmask 294152
    %218 = vst.msk [vmem:[#allocation0] sm:$0x3] %vm217, %v216
    %s219 = scalar_lea.vmem %s0, 10
    %v220 = vld [vmem:[%s219] sm:$0x1]
    %s221 = scalar_lea.vmem %s0, 41
    %v222 = vld [vmem:[%s221] sm:$0x2]
    %vm223 = vcmask 1041409
    %v224 = vsel %vm223, %v222, %v220
    %225 = vrot.lane.b32.xlu0 %v224, 30
    %v226 = vpop.permute.xlu0 %225
    %vm227 = vcmask 269552
    %228 = vst.msk [vmem:[#allocation0] sm:$0x3] %vm227, %v226
    %s229 = scalar_lea.vmem %s0, 9
    %v230 = vld [vmem:[%s229] sm:$0x1]
    %s231 = scalar_lea.vmem %s0, 40
    %v232 = vld [vmem:[%s231] sm:$0x2]
    %vm233 = vcmask 1041409
    %v234 = vsel %vm233, %v232, %v230
    %235 = vrot.lane.b32.xlu0 %v234, 27
    %v236 = vpop.permute.xlu0 %235
    %vm237 = vcmask 244952
    %238 = vst.msk [vmem:[#allocation0] sm:$0x3] %vm237, %v236
    %s239 = scalar_lea.vmem %s0, 8
    %v240 = vld [vmem:[%s239] sm:$0x1]
    %s241 = scalar_lea.vmem %s0, 39
    %v242 = vld [vmem:[%s241] sm:$0x2]
    %vm243 = vcmask 1041409
    %v244 = vsel %vm243, %v242, %v240
    %245 = vrot.lane.b32.xlu0 %v244, 24
    %v246 = vpop.permute.xlu0 %245
    %vm247 = vcmask 220352
    %248 = vst.msk [vmem:[#allocation0] sm:$0x3] %vm247, %v246
    %s249 = scalar_lea.vmem %s0, 7
    %v250 = vld [vmem:[%s249] sm:$0x1]
    %s251 = scalar_lea.vmem %s0, 38
    %v252 = vld [vmem:[%s251] sm:$0x2]
    %vm253 = vcmask 1041409
    %v254 = vsel %vm253, %v252, %v250
    %255 = vrot.lane.b32.xlu0 %v254, 21
    %v256 = vpop.permute.xlu0 %255
    %vm257 = vcmask 195752
    %258 = vst.msk [vmem:[#allocation0] sm:$0x3] %vm257, %v256
    %s259 = scalar_lea.vmem %s0, 6
    %v260 = vld [vmem:[%s259] sm:$0x1]
    %s261 = scalar_lea.vmem %s0, 37
    %v262 = vld [vmem:[%s261] sm:$0x2]
    %vm263 = vcmask 1041409
    %v264 = vsel %vm263, %v262, %v260
    %265 = vrot.lane.b32.xlu0 %v264, 18
    %v266 = vpop.permute.xlu0 %265
    %vm267 = vcmask 171152
    %268 = vst.msk [vmem:[#allocation0] sm:$0x3] %vm267, %v266
    %s269 = scalar_lea.vmem %s0, 5
    %v270 = vld [vmem:[%s269] sm:$0x1]
    %s271 = scalar_lea.vmem %s0, 36
    %v272 = vld [vmem:[%s271] sm:$0x2]
    %vm273 = vcmask 1041409
    %v274 = vsel %vm273, %v272, %v270
    %275 = vrot.lane.b32.xlu0 %v274, 15
    %v276 = vpop.permute.xlu0 %275
    %vm277 = vcmask 146552
    %278 = vst.msk [vmem:[#allocation0] sm:$0x3] %vm277, %v276
    %s279 = scalar_lea.vmem %s0, 4
    %v280 = vld [vmem:[%s279] sm:$0x1]
    %s281 = scalar_lea.vmem %s0, 35
    %v282 = vld [vmem:[%s281] sm:$0x2]
    %vm283 = vcmask 1041409
    %v284 = vsel %vm283, %v282, %v280
    %285 = vrot.lane.b32.xlu0 %v284, 12
    %v286 = vpop.permute.xlu0 %285
    %vm287 = vcmask 121952
    %288 = vst.msk [vmem:[#allocation0] sm:$0x3] %vm287, %v286
    %s289 = scalar_lea.vmem %s0, 3
    %v290 = vld [vmem:[%s289] sm:$0x1]
    %s291 = scalar_lea.vmem %s0, 34
    %v292 = vld [vmem:[%s291] sm:$0x2]
    %vm293 = vcmask 1041409
    %v294 = vsel %vm293, %v292, %v290
    %295 = vrot.lane.b32.xlu0 %v294, 9
    %v296 = vpop.permute.xlu0 %295
    %vm297 = vcmask 97352
    %298 = vst.msk [vmem:[#allocation0] sm:$0x3] %vm297, %v296
    %s299 = scalar_lea.vmem %s0, 2
    %v300 = vld [vmem:[%s299] sm:$0x1]
    %s301 = scalar_lea.vmem %s0, 33
    %v302 = vld [vmem:[%s301] sm:$0x2]
    %vm303 = vcmask 1041409
    %v304 = vsel %vm303, %v302, %v300
    %305 = vrot.lane.b32.xlu0 %v304, 6
    %v306 = vpop.permute.xlu0 %305
    %vm307 = vcmask 72752
    %308 = vst.msk [vmem:[#allocation0] sm:$0x3] %vm307, %v306
    %s309 = scalar_lea.vmem %s0, 1
    %v310 = vld [vmem:[%s309] sm:$0x1]
    %s311 = scalar_lea.vmem %s0, 32
    %v312 = vld [vmem:[%s311] sm:$0x2]
    %vm313 = vcmask 1041409
    %v314 = vsel %vm313, %v312, %v310
    %315 = vrot.lane.b32.xlu0 %v314, 3
    %v316 = vpop.permute.xlu0 %315
    %vm317 = vcmask 48152
    %318 = vst.msk [vmem:[#allocation0] sm:$0x3] %vm317, %v316
    %s320 = sshll.u32 1, 2
    %s321 = ssub.s32 %s320, 1
    %v323 = vld [vmem:[#allocation0] sm:%s321]
    %s324 = sshll.u32 1, 2
    %s325 = ssub.s32 %s324, 1
    %326 = vst [vmem:[%s1] sm:%s325] %v323

// kernel: can_generator_forward.15
$region0: #{can_generator_forward.15}
  #allocation0 [shape = 'u32[]', space=smem, size = 0x4, offset = 0x4, fixed_abs, tag = 'smem constant byte address 0x4 - core index']
  #allocation1 [shape = 'u32[144,128]{1,0:T(1,128)}', space=vmem, size = 0x12000, scoped, tag = 'internal scratch']
  %s0 = inlined_call_operand.vmem [shape: f32[64,96], index: 0, kind: input, shape index: {}]
  %s1 = inlined_call_operand.vmem [shape: f32[2,96], index: 1, kind: input, shape index: {}]
  %s2 = inlined_call_operand.vmem [shape: f32[64,96], index: 2, kind: output, shape index: {}]
  %s3 = sld [smem:[#allocation0]]
  $region18: #{can_generator_forward.15} parent=0
    _
  %s5 = ssub.s32 1, %s3
  %s6 = scalar_select 0, %s5, %s3
  // Predicated region
  $region2: #{can_generator_forward.15} parent=0 // pred_check
    _
  $region3: #{can_generator_forward.15} parent=0 // pred_check_branch
    %8 = sbr.rel (0) target = $region5
  $region4: #{can_generator_forward.15} parent=0 // pred_region
    _
  $region5: #{can_generator_forward.15} parent=0 // pred_fallthru
    _
  // Predicated region
  $region6: #{can_generator_forward.15} parent=0 // pred_check
    _
  $region7: #{can_generator_forward.15} parent=0 // pred_check_branch
    %10 = sbr.rel (0) target = $region9
  $region8: #{can_generator_forward.15} parent=0 // pred_region
    _
  $region9: #{can_generator_forward.15} parent=0 // pred_fallthru
    _
  %v11 = vld [vmem:[%s0] sm:$0xff]
  %v12 = vld [vmem:[%s0 + $0x8] sm:$0xff]
  %v13 = vld [vmem:[%s0 + $0x10] sm:$0xff]
  %v14 = vld [vmem:[%s0 + $0x18] sm:$0xff]
  %v15 = vld [vmem:[%s0 + $0x20] sm:$0xff]
  %v16 = vld [vmem:[%s0 + $0x28] sm:$0xff]
  %v17 = vld [vmem:[%s0 + $0x30] sm:$0xff]
  %v18 = vld [vmem:[%s0 + $0x38] sm:$0xff]
  %v19 = vld [vmem:[%s1] sm:$0x1]
  %v20 = vlaneseq
  %v21 = vshrl.u32 %v20, 7
  %v22 = vsub.s32 0, %v21
  %v23 = vrot.slane %v19, %v22
  %v24 = vmul.f32 %v11, %v23
  %v25 = vmul.f32 %v12, %v23
  %v26 = vmul.f32 %v13, %v23
  %v27 = vmul.f32 %v14, %v23
  %v28 = vmul.f32 %v15, %v23
  %v29 = vmul.f32 %v16, %v23
  %v30 = vmul.f32 %v17, %v23
  %v31 = vmul.f32 %v18, %v23
  %v32 = vld [vmem:[%s1 + $0x1] sm:$0x1]
  %v33 = vlaneseq
  %v34 = vshrl.u32 %v33, 7
  %v35 = vsub.s32 0, %v34
  %v36 = vrot.slane %v32, %v35
  %v37 = vadd.f32 %v24, %v36
  %v38 = vadd.f32 %v25, %v36
  %v39 = vadd.f32 %v26, %v36
  %v40 = vadd.f32 %v27, %v36
  %v41 = vadd.f32 %v28, %v36
  %v42 = vadd.f32 %v29, %v36
  %v43 = vadd.f32 %v30, %v36
  %v44 = vadd.f32 %v31, %v36
  %v45 = vtanh.pop %v37
  %v46 = vtanh.pop %v38
  %v47 = vtanh.pop %v39
  %v48 = vtanh.pop %v40
  %v49 = vtanh.pop %v41
  %v50 = vtanh.pop %v42
  %v51 = vtanh.pop %v43
  %v52 = vtanh.pop %v44
  %vm53 = vcmask 785408
  %54 = vst.msk [vmem:[%s2] sm:$0xff] %vm53, %v45
  %55 = vst.msk [vmem:[%s2 + $0x8] sm:$0xff] %vm53, %v46
  %56 = vst.msk [vmem:[%s2 + $0x10] sm:$0xff] %vm53, %v47
  %57 = vst.msk [vmem:[%s2 + $0x18] sm:$0xff] %vm53, %v48
  %58 = vst.msk [vmem:[%s2 + $0x20] sm:$0xff] %vm53, %v49
  %59 = vst.msk [vmem:[%s2 + $0x28] sm:$0xff] %vm53, %v50
  %60 = vst.msk [vmem:[%s2 + $0x30] sm:$0xff] %vm53, %v51
  %61 = vst.msk [vmem:[%s2 + $0x38] sm:$0xff] %vm53, %v52
  // Predicated region
  $region10: #{can_generator_forward.15} parent=0 // pred_check
    _
  $region11: #{can_generator_forward.15} parent=0 // pred_check_branch
    %63 = sbr.rel (0) target = $region13
  $region12: #{can_generator_forward.15} parent=0 // pred_region
    _
  $region13: #{can_generator_forward.15} parent=0 // pred_fallthru
    _
  // Predicated region
  $region14: #{can_generator_forward.15} parent=0 // pred_check
    _
  $region15: #{can_generator_forward.15} parent=0 // pred_check_branch
    %65 = sbr.rel (0) target = $region17
  $region16: #{can_generator_forward.15} parent=0 // pred_region
    _
  $region17: #{can_generator_forward.15} parent=0 // pred_fallthru
    _

// kernel: can_generator_forward.14
$region0: #{can_generator_forward.14}
  #allocation0 [shape = 'u32[]', space=smem, size = 0x4, offset = 0x4, fixed_abs, tag = 'smem constant byte address 0x4 - core index']
  #allocation1 [shape = 'u32[144,128]{1,0:T(1,128)}', space=vmem, size = 0x12000, scoped, tag = 'internal scratch']
  %s0 = inlined_call_operand.vmem [shape: f32[2048,3], index: 0, kind: input, shape index: {}]
  %s1 = inlined_call_operand.vmem [shape: f32[1,3], index: 1, kind: input, shape index: {}]
  %s2 = inlined_call_operand.vmem [shape: f32[1,3], index: 2, kind: input, shape index: {}]
  %s3 = inlined_call_operand.vmem [shape: f32[2,3], index: 3, kind: output, shape index: {}]
  %s4 = sld [smem:[#allocation0]]
  $region53: #{can_generator_forward.14} parent=0
    _
  %s6 = ssub.s32 1, %s4
  %s7 = scalar_select 0, %s6, %s4
  loop: start=0, step=1, limit=6
  $region2: #{can_generator_forward.14} parent=0 // loop_pre_header
    _
  $region3: #{can_generator_forward.14} parent=0 // loop_header
    %s9 = sphi 0, %s13
    %p10 = scmp.ge.s32.totalorder %s9, 6
    %s19 = sphi 0, %s21
    %s22 = sphi 0, %s19
    %s23 = sphi 0, %s22
    %s39 = sphi 0, %s23
    %s43 = sphi 0, %s43
    %s45 = sphi 0, %s43
    %s46 = sphi 0, %s45
    %s60 = sphi 0, %s46
    %s64 = sphi 0, %s64
    %s66 = sphi 0, %s64
    %s67 = sphi 0, %s66
    %s81 = sphi 0, %s67
    %s85 = sphi 0, %s85
    %s87 = sphi 0, %s85
    %s88 = sphi 0, %s87
    %s102 = sphi 0, %s88
  $region4: #{can_generator_forward.14} parent=0 // loop_header_branch
    %12 = sbr.rel (%p10) target = $region8
  $region5: #{can_generator_forward.14} parent=0 // loop_body
    %s14 = ssub.s32 %s9, 1
    %s15 = ssub.s32 %s9, 2
    %s16 = sadd.s32 %s9, 1
    %s17 = ssub.s32 %s9, %s16
    %p18 = scmp.eq.s32.totalorder %s17, 0
    %s20 = sadd.s32 %s19, 1
    %s21 = scalar_select %p18, %s19, %s20
    %p24 = pneg %p18
    %p25 = scmp.eq.s32.totalorder %s9, 3
    %p26 = por %p24, %p25
    %p27 = scmp.ne.s32.totalorder %s19, %s22
    %p28 = scmp.eq.s32.totalorder %s9, 0
    %p29 = por %p27, %p28
    %p30 = scmp.ne.s32.totalorder %s19, %s22
    %p31 = scmp.eq.s32.totalorder %s14, 3
    %p32 = por %p30, %p31
    %p33 = scmp.ne.s32.totalorder %s22, %s23
    %p34 = scmp.eq.s32.totalorder %s14, 0
    %p35 = por %p33, %p34
    %p36 = scmp.ne.s32.totalorder %s22, %s23
    %p37 = scmp.eq.s32.totalorder %s15, 3
    %p38 = por %p36, %p37
    %p40 = scmp.ne.s32.totalorder %s23, %s39
    %p41 = scmp.eq.s32.totalorder %s15, 0
    %p42 = por %p40, %p41
    %s44 = sadd.s32 %s43, 1
    %p47 = scmp.eq.s32.totalorder %s9, 3
    %p48 = scmp.ne.s32.totalorder %s43, %s45
    %p49 = scmp.eq.s32.totalorder %s9, 0
    %p50 = por %p48, %p49
    %p51 = scmp.ne.s32.totalorder %s43, %s45
    %p52 = scmp.eq.s32.totalorder %s14, 3
    %p53 = por %p51, %p52
    %p54 = scmp.ne.s32.totalorder %s45, %s46
    %p55 = scmp.eq.s32.totalorder %s14, 0
    %p56 = por %p54, %p55
    %p57 = scmp.ne.s32.totalorder %s45, %s46
    %p58 = scmp.eq.s32.totalorder %s15, 3
    %p59 = por %p57, %p58
    %p61 = scmp.ne.s32.totalorder %s46, %s60
    %p62 = scmp.eq.s32.totalorder %s15, 0
    %p63 = por %p61, %p62
    %s65 = sadd.s32 %s64, 1
    %p68 = scmp.eq.s32.totalorder %s9, 3
    %p69 = scmp.ne.s32.totalorder %s64, %s66
    %p70 = scmp.eq.s32.totalorder %s9, 0
    %p71 = por %p69, %p70
    %p72 = scmp.ne.s32.totalorder %s64, %s66
    %p73 = scmp.eq.s32.totalorder %s14, 3
    %p74 = por %p72, %p73
    %p75 = scmp.ne.s32.totalorder %s66, %s67
    %p76 = scmp.eq.s32.totalorder %s14, 0
    %p77 = por %p75, %p76
    %p78 = scmp.ne.s32.totalorder %s66, %s67
    %p79 = scmp.eq.s32.totalorder %s15, 3
    %p80 = por %p78, %p79
    %p82 = scmp.ne.s32.totalorder %s67, %s81
    %p83 = scmp.eq.s32.totalorder %s15, 0
    %p84 = por %p82, %p83
    %s86 = sadd.s32 %s85, 1
    %p89 = scmp.eq.s32.totalorder %s9, 3
    %p90 = scmp.ne.s32.totalorder %s85, %s87
    %p91 = scmp.eq.s32.totalorder %s9, 0
    %p92 = por %p90, %p91
    %p93 = scmp.ne.s32.totalorder %s85, %s87
    %p94 = scmp.eq.s32.totalorder %s14, 3
    %p95 = por %p93, %p94
    %p96 = scmp.ne.s32.totalorder %s87, %s88
    %p97 = scmp.eq.s32.totalorder %s14, 0
    %p98 = por %p96, %p97
    %p99 = scmp.ne.s32.totalorder %s87, %s88
    %p100 = scmp.eq.s32.totalorder %s15, 3
    %p101 = por %p99, %p100
    %p103 = scmp.ne.s32.totalorder %s88, %s102
    %p104 = scmp.eq.s32.totalorder %s15, 0
    %p105 = por %p103, %p104
    %p106 = scmp.le.s32.totalorder 1, %s9
    %p107 = scmp.lt.s32.totalorder %s9, 5
    %p108 = pnand %p106, %p107
    %p109 = pneg %p108
    // Predicated region
    $region9: #{can_generator_forward.14} parent=5 // pred_check
      _
    $region10: #{can_generator_forward.14} parent=5 // pred_check_branch
      %111 = sbr.rel (%p108) target = $region12
    $region11: #{can_generator_forward.14} parent=5 // pred_region
      %s112 = ssub.s32 %s9, 1
      // Predicated region
      $region13: #{can_generator_forward.14} parent=11 // pred_check
        %p113 = pneg %p56
      $region14: #{can_generator_forward.14} parent=11 // pred_check_branch
        %115 = sbr.rel (%p113) target = $region16
      $region15: #{can_generator_forward.14} parent=11 // pred_region
        _
      $region16: #{can_generator_forward.14} parent=11 // pred_fallthru
        _
      // Predicated region
      $region17: #{can_generator_forward.14} parent=11 // pred_check
        %p116 = pneg %p77
      $region18: #{can_generator_forward.14} parent=11 // pred_check_branch
        %118 = sbr.rel (%p116) target = $region20
      $region19: #{can_generator_forward.14} parent=11 // pred_region
        _
      $region20: #{can_generator_forward.14} parent=11 // pred_fallthru
        _
    $region12: #{can_generator_forward.14} parent=5 // pred_fallthru
      _
    %p119 = scmp.lt.s32.totalorder %s9, 4
    // Predicated region
    $region21: #{can_generator_forward.14} parent=5 // pred_check
      %p120 = pneg %p119
    $region22: #{can_generator_forward.14} parent=5 // pred_check_branch
      %122 = sbr.rel (%p120) target = $region24
    $region23: #{can_generator_forward.14} parent=5 // pred_region
      // Predicated region
      $region25: #{can_generator_forward.14} parent=23 // pred_check
        %p123 = pneg %p29
      $region26: #{can_generator_forward.14} parent=23 // pred_check_branch
        %125 = sbr.rel (%p123) target = $region28
      $region27: #{can_generator_forward.14} parent=23 // pred_region
        %s126 = smul.u32 64, %s9
        %p127 = scmp.lt.s32.totalorder %s126, 255
        %s128 = scalar_select %p127, %s126, 255
        %s129 = smul.addr %s128, 8
        %s130 = scalar_lea.vmem %s0, %s129
        %s131 = smul.u32 64, %s9
      $region28: #{can_generator_forward.14} parent=23 // pred_fallthru
        _
    $region24: #{can_generator_forward.14} parent=5 // pred_fallthru
      _
    %p132 = scmp.le.s32.totalorder 1, %s9
    %p133 = scmp.lt.s32.totalorder %s9, 5
    %p134 = pnand %p132, %p133
    %p135 = pneg %p134
    // Predicated region
    $region29: #{can_generator_forward.14} parent=5 // pred_check
      _
    $region30: #{can_generator_forward.14} parent=5 // pred_check_branch
      %137 = sbr.rel (%p134) target = $region32
    $region31: #{can_generator_forward.14} parent=5 // pred_region
      %s138 = ssub.s32 %s9, 1
      %s139 = smul.u32 64, %s14
      %p140 = scmp.lt.s32.totalorder %s139, 255
      %s141 = scalar_select %p140, %s139, 255
      %s142 = smul.addr %s141, 8
      %s143 = scalar_lea.vmem %s0, %s142
      %p144 = pneg %p35
      %p145 = pneg %p32
      %p146 = pneg %p56
      %p147 = pneg %p53
      %p148 = pneg %p77
      %p149 = pneg %p74
      %p150 = pneg %p98
      %p151 = pneg %p95
      %s152 = smul.u32 64, %s14
      %p153 = scmp.lt.s32.totalorder %s152, 255
      %s154 = scalar_select %p153, %s152, 255
      %s155 = smul.addr %s154, 8
      %s156 = scalar_lea.vmem %s0, %s155
      %s157 = smul.u32 64, %s14
      %p158 = scmp.eq.s32.totalorder %s14, 0
      // Predicated region
      $region33: #{can_generator_forward.14} parent=31 // pred_check
        %p159 = pneg %p158
      $region34: #{can_generator_forward.14} parent=31 // pred_check_branch
        %161 = sbr.rel (%p159) target = $region36
      $region35: #{can_generator_forward.14} parent=31 // pred_region
        %vm162 = vcmask 17408
        %163 = vst.msk [vmem:[%s3] sm:$0x3] %vm162, 0.0
      $region36: #{can_generator_forward.14} parent=31 // pred_fallthru
        _
      %v164 = vld [vmem:[%s156] sm:$0xff]
      %v165 = vld [vmem:[%s156 + $0x8] sm:$0xff]
      %v166 = vld [vmem:[%s156 + $0x10] sm:$0xff]
      %v167 = vld [vmem:[%s156 + $0x18] sm:$0xff]
      %v168 = vld [vmem:[%s156 + $0x20] sm:$0xff]
      %v169 = vld [vmem:[%s156 + $0x28] sm:$0xff]
      %v170 = vld [vmem:[%s156 + $0x30] sm:$0xff]
      %v171 = vld [vmem:[%s156 + $0x38] sm:$0xff]
      %v172 = vld [vmem:[%s156 + $0x40] sm:$0xff]
      %v173 = vld [vmem:[%s156 + $0x48] sm:$0xff]
      %v174 = vld [vmem:[%s156 + $0x50] sm:$0xff]
      %v175 = vld [vmem:[%s156 + $0x58] sm:$0xff]
      %v176 = vld [vmem:[%s156 + $0x60] sm:$0xff]
      %v177 = vld [vmem:[%s156 + $0x68] sm:$0xff]
      %v178 = vld [vmem:[%s156 + $0x70] sm:$0xff]
      %v179 = vld [vmem:[%s156 + $0x78] sm:$0xff]
      %v180 = vld [vmem:[%s156 + $0x80] sm:$0xff]
      %v181 = vld [vmem:[%s156 + $0x88] sm:$0xff]
      %v182 = vld [vmem:[%s156 + $0x90] sm:$0xff]
      %v183 = vld [vmem:[%s156 + $0x98] sm:$0xff]
      %v184 = vld [vmem:[%s156 + $0xa0] sm:$0xff]
      %v185 = vld [vmem:[%s156 + $0xa8] sm:$0xff]
      %v186 = vld [vmem:[%s156 + $0xb0] sm:$0xff]
      %v187 = vld [vmem:[%s156 + $0xb8] sm:$0xff]
      %v188 = vld [vmem:[%s156 + $0xc0] sm:$0xff]
      %v189 = vld [vmem:[%s156 + $0xc8] sm:$0xff]
      %v190 = vld [vmem:[%s156 + $0xd0] sm:$0xff]
      %v191 = vld [vmem:[%s156 + $0xd8] sm:$0xff]
      %v192 = vld [vmem:[%s156 + $0xe0] sm:$0xff]
      %v193 = vld [vmem:[%s156 + $0xe8] sm:$0xff]
      %v194 = vld [vmem:[%s156 + $0xf0] sm:$0xff]
      %v195 = vld [vmem:[%s156 + $0xf8] sm:$0xff]
      %v196 = vld [vmem:[%s156 + $0x100] sm:$0xff]
      %v197 = vld [vmem:[%s156 + $0x108] sm:$0xff]
      %v198 = vld [vmem:[%s156 + $0x110] sm:$0xff]
      %v199 = vld [vmem:[%s156 + $0x118] sm:$0xff]
      %v200 = vld [vmem:[%s156 + $0x120] sm:$0xff]
      %v201 = vld [vmem:[%s156 + $0x128] sm:$0xff]
      %v202 = vld [vmem:[%s156 + $0x130] sm:$0xff]
      %v203 = vld [vmem:[%s156 + $0x138] sm:$0xff]
      %v204 = vld [vmem:[%s156 + $0x140] sm:$0xff]
      %v205 = vld [vmem:[%s156 + $0x148] sm:$0xff]
      %v206 = vld [vmem:[%s156 + $0x150] sm:$0xff]
      %v207 = vld [vmem:[%s156 + $0x158] sm:$0xff]
      %v208 = vld [vmem:[%s156 + $0x160] sm:$0xff]
      %v209 = vld [vmem:[%s156 + $0x168] sm:$0xff]
      %v210 = vld [vmem:[%s156 + $0x170] sm:$0xff]
      %v211 = vld [vmem:[%s156 + $0x178] sm:$0xff]
      %v212 = vld [vmem:[%s156 + $0x180] sm:$0xff]
      %v213 = vld [vmem:[%s156 + $0x188] sm:$0xff]
      %v214 = vld [vmem:[%s156 + $0x190] sm:$0xff]
      %v215 = vld [vmem:[%s156 + $0x198] sm:$0xff]
      %v216 = vld [vmem:[%s156 + $0x1a0] sm:$0xff]
      %v217 = vld [vmem:[%s156 + $0x1a8] sm:$0xff]
      %v218 = vld [vmem:[%s156 + $0x1b0] sm:$0xff]
      %v219 = vld [vmem:[%s156 + $0x1b8] sm:$0xff]
      %v220 = vld [vmem:[%s156 + $0x1c0] sm:$0xff]
      %v221 = vld [vmem:[%s156 + $0x1c8] sm:$0xff]
      %v222 = vld [vmem:[%s156 + $0x1d0] sm:$0xff]
      %v223 = vld [vmem:[%s156 + $0x1d8] sm:$0xff]
      %v224 = vld [vmem:[%s156 + $0x1e0] sm:$0xff]
      %v225 = vld [vmem:[%s156 + $0x1e8] sm:$0xff]
      %v226 = vld [vmem:[%s156 + $0x1f0] sm:$0xff]
      %v227 = vld [vmem:[%s156 + $0x1f8] sm:$0xff]
      %v228 = vld [vmem:[%s3] sm:$0x1]
      %vm229 = vcmask 23552
      %v230 = vsel %vm229, %v164, 0.0
      %v231 = vsel %vm229, %v165, 0.0
      %v232 = vadd.f32 %v230, %v231
      %v233 = vsel %vm229, %v166, 0.0
      %v234 = vadd.f32 %v232, %v233
      %v235 = vsel %vm229, %v167, 0.0
      %v236 = vadd.f32 %v234, %v235
      %v237 = vsel %vm229, %v168, 0.0
      %v238 = vadd.f32 %v236, %v237
      %v239 = vsel %vm229, %v169, 0.0
      %v240 = vadd.f32 %v238, %v239
      %v241 = vsel %vm229, %v170, 0.0
      %v242 = vadd.f32 %v240, %v241
      %v243 = vsel %vm229, %v171, 0.0
      %v244 = vadd.f32 %v242, %v243
      %v245 = vsel %vm229, %v172, 0.0
      %v246 = vadd.f32 %v244, %v245
      %v247 = vsel %vm229, %v173, 0.0
      %v248 = vadd.f32 %v246, %v247
      %v249 = vsel %vm229, %v174, 0.0
      %v250 = vadd.f32 %v248, %v249
      %v251 = vsel %vm229, %v175, 0.0
      %v252 = vadd.f32 %v250, %v251
      %v253 = vsel %vm229, %v176, 0.0
      %v254 = vadd.f32 %v252, %v253
      %v255 = vsel %vm229, %v177, 0.0
      %v256 = vadd.f32 %v254, %v255
      %v257 = vsel %vm229, %v178, 0.0
      %v258 = vadd.f32 %v256, %v257
      %v259 = vsel %vm229, %v179, 0.0
      %v260 = vadd.f32 %v258, %v259
      %v261 = vsel %vm229, %v180, 0.0
      %v262 = vadd.f32 %v260, %v261
      %v263 = vsel %vm229, %v181, 0.0
      %v264 = vadd.f32 %v262, %v263
      %v265 = vsel %vm229, %v182, 0.0
      %v266 = vadd.f32 %v264, %v265
      %v267 = vsel %vm229, %v183, 0.0
      %v268 = vadd.f32 %v266, %v267
      %v269 = vsel %vm229, %v184, 0.0
      %v270 = vadd.f32 %v268, %v269
      %v271 = vsel %vm229, %v185, 0.0
      %v272 = vadd.f32 %v270, %v271
      %v273 = vsel %vm229, %v186, 0.0
      %v274 = vadd.f32 %v272, %v273
      %v275 = vsel %vm229, %v187, 0.0
      %v276 = vadd.f32 %v274, %v275
      %v277 = vsel %vm229, %v188, 0.0
      %v278 = vadd.f32 %v276, %v277
      %v279 = vsel %vm229, %v189, 0.0
      %v280 = vadd.f32 %v278, %v279
      %v281 = vsel %vm229, %v190, 0.0
      %v282 = vadd.f32 %v280, %v281
      %v283 = vsel %vm229, %v191, 0.0
      %v284 = vadd.f32 %v282, %v283
      %v285 = vsel %vm229, %v192, 0.0
      %v286 = vadd.f32 %v284, %v285
      %v287 = vsel %vm229, %v193, 0.0
      %v288 = vadd.f32 %v286, %v287
      %v289 = vsel %vm229, %v194, 0.0
      %v290 = vadd.f32 %v288, %v289
      %v291 = vsel %vm229, %v195, 0.0
      %v292 = vadd.f32 %v290, %v291
      %v293 = vsel %vm229, %v196, 0.0
      %v294 = vadd.f32 %v292, %v293
      %v295 = vsel %vm229, %v197, 0.0
      %v296 = vadd.f32 %v294, %v295
      %v297 = vsel %vm229, %v198, 0.0
      %v298 = vadd.f32 %v296, %v297
      %v299 = vsel %vm229, %v199, 0.0
      %v300 = vadd.f32 %v298, %v299
      %v301 = vsel %vm229, %v200, 0.0
      %v302 = vadd.f32 %v300, %v301
      %v303 = vsel %vm229, %v201, 0.0
      %v304 = vadd.f32 %v302, %v303
      %v305 = vsel %vm229, %v202, 0.0
      %v306 = vadd.f32 %v304, %v305
      %v307 = vsel %vm229, %v203, 0.0
      %v308 = vadd.f32 %v306, %v307
      %v309 = vsel %vm229, %v204, 0.0
      %v310 = vadd.f32 %v308, %v309
      %v311 = vsel %vm229, %v205, 0.0
      %v312 = vadd.f32 %v310, %v311
      %v313 = vsel %vm229, %v206, 0.0
      %v314 = vadd.f32 %v312, %v313
      %v315 = vsel %vm229, %v207, 0.0
      %v316 = vadd.f32 %v314, %v315
      %v317 = vsel %vm229, %v208, 0.0
      %v318 = vadd.f32 %v316, %v317
      %v319 = vsel %vm229, %v209, 0.0
      %v320 = vadd.f32 %v318, %v319
      %v321 = vsel %vm229, %v210, 0.0
      %v322 = vadd.f32 %v320, %v321
      %v323 = vsel %vm229, %v211, 0.0
      %v324 = vadd.f32 %v322, %v323
      %v325 = vsel %vm229, %v212, 0.0
      %v326 = vadd.f32 %v324, %v325
      %v327 = vsel %vm229, %v213, 0.0
      %v328 = vadd.f32 %v326, %v327
      %v329 = vsel %vm229, %v214, 0.0
      %v330 = vadd.f32 %v328, %v329
      %v331 = vsel %vm229, %v215, 0.0
      %v332 = vadd.f32 %v330, %v331
      %v333 = vsel %vm229, %v216, 0.0
      %v334 = vadd.f32 %v332, %v333
      %v335 = vsel %vm229, %v217, 0.0
      %v336 = vadd.f32 %v334, %v335
      %v337 = vsel %vm229, %v218, 0.0
      %v338 = vadd.f32 %v336, %v337
      %v339 = vsel %vm229, %v219, 0.0
      %v340 = vadd.f32 %v338, %v339
      %v341 = vsel %vm229, %v220, 0.0
      %v342 = vadd.f32 %v340, %v341
      %v343 = vsel %vm229, %v221, 0.0
      %v344 = vadd.f32 %v342, %v343
      %v345 = vsel %vm229, %v222, 0.0
      %v346 = vadd.f32 %v344, %v345
      %v347 = vsel %vm229, %v223, 0.0
      %v348 = vadd.f32 %v346, %v347
      %v349 = vsel %vm229, %v224, 0.0
      %v350 = vadd.f32 %v348, %v349
      %v351 = vsel %vm229, %v225, 0.0
      %v352 = vadd.f32 %v350, %v351
      %v353 = vsel %vm229, %v226, 0.0
      %v354 = vadd.f32 %v352, %v353
      %v355 = vsel %vm229, %v227, 0.0
      %v356 = vadd.f32 %v354, %v355
      %v357 = vrot.slane %v356, 4
      %v358 = vadd.f32 %v356, %v357
      %v359 = vrot.slane %v358, 2
      %v360 = vadd.f32 %v358, %v359
      %v361 = vrot.slane %v360, 1
      %v362 = vadd.f32 %v360, %v361
      %v363 = vadd.f32 %v228, %v362
      %vm364 = vcmask 16384
      %365 = vst.msk [vmem:[%s3] sm:$0x1] %vm364, %v363
      %v366 = vld [vmem:[%s3 + $0x1] sm:$0x1]
      %v367 = vmul.f32 %v164, %v164
      %v368 = vmul.f32 %v165, %v165
      %v369 = vmul.f32 %v166, %v166
      %v370 = vmul.f32 %v167, %v167
      %v371 = vmul.f32 %v168, %v168
      %v372 = vmul.f32 %v169, %v169
      %v373 = vmul.f32 %v170, %v170
      %v374 = vmul.f32 %v171, %v171
      %v375 = vmul.f32 %v172, %v172
      %v376 = vmul.f32 %v173, %v173
      %v377 = vmul.f32 %v174, %v174
      %v378 = vmul.f32 %v175, %v175
      %v379 = vmul.f32 %v176, %v176
      %v380 = vmul.f32 %v177, %v177
      %v381 = vmul.f32 %v178, %v178
      %v382 = vmul.f32 %v179, %v179
      %v383 = vmul.f32 %v180, %v180
      %v384 = vmul.f32 %v181, %v181
      %v385 = vmul.f32 %v182, %v182
      %v386 = vmul.f32 %v183, %v183
      %v387 = vmul.f32 %v184, %v184
      %v388 = vmul.f32 %v185, %v185
      %v389 = vmul.f32 %v186, %v186
      %v390 = vmul.f32 %v187, %v187
      %v391 = vmul.f32 %v188, %v188
      %v392 = vmul.f32 %v189, %v189
      %v393 = vmul.f32 %v190, %v190
      %v394 = vmul.f32 %v191, %v191
      %v395 = vmul.f32 %v192, %v192
      %v396 = vmul.f32 %v193, %v193
      %v397 = vmul.f32 %v194, %v194
      %v398 = vmul.f32 %v195, %v195
      %v399 = vmul.f32 %v196, %v196
      %v400 = vmul.f32 %v197, %v197
      %v401 = vmul.f32 %v198, %v198
      %v402 = vmul.f32 %v199, %v199
      %v403 = vmul.f32 %v200, %v200
      %v404 = vmul.f32 %v201, %v201
      %v405 = vmul.f32 %v202, %v202
      %v406 = vmul.f32 %v203, %v203
      %v407 = vmul.f32 %v204, %v204
      %v408 = vmul.f32 %v205, %v205
      %v409 = vmul.f32 %v206, %v206
      %v410 = vmul.f32 %v207, %v207
      %v411 = vmul.f32 %v208, %v208
      %v412 = vmul.f32 %v209, %v209
      %v413 = vmul.f32 %v210, %v210
      %v414 = vmul.f32 %v211, %v211
      %v415 = vmul.f32 %v212, %v212
      %v416 = vmul.f32 %v213, %v213
      %v417 = vmul.f32 %v214, %v214
      %v418 = vmul.f32 %v215, %v215
      %v419 = vmul.f32 %v216, %v216
      %v420 = vmul.f32 %v217, %v217
      %v421 = vmul.f32 %v218, %v218
      %v422 = vmul.f32 %v219, %v219
      %v423 = vmul.f32 %v220, %v220
      %v424 = vmul.f32 %v221, %v221
      %v425 = vmul.f32 %v222, %v222
      %v426 = vmul.f32 %v223, %v223
      %v427 = vmul.f32 %v224, %v224
      %v428 = vmul.f32 %v225, %v225
      %v429 = vmul.f32 %v226, %v226
      %v430 = vmul.f32 %v227, %v227
      %v431 = vsel %vm229, %v367, 0.0
      %v432 = vsel %vm229, %v368, 0.0
      %v433 = vadd.f32 %v431, %v432
      %v434 = vsel %vm229, %v369, 0.0
      %v435 = vadd.f32 %v433, %v434
      %v436 = vsel %vm229, %v370, 0.0
      %v437 = vadd.f32 %v435, %v436
      %v438 = vsel %vm229, %v371, 0.0
      %v439 = vadd.f32 %v437, %v438
      %v440 = vsel %vm229, %v372, 0.0
      %v441 = vadd.f32 %v439, %v440
      %v442 = vsel %vm229, %v373, 0.0
      %v443 = vadd.f32 %v441, %v442
      %v444 = vsel %vm229, %v374, 0.0
      %v445 = vadd.f32 %v443, %v444
      %v446 = vsel %vm229, %v375, 0.0
      %v447 = vadd.f32 %v445, %v446
      %v448 = vsel %vm229, %v376, 0.0
      %v449 = vadd.f32 %v447, %v448
      %v450 = vsel %vm229, %v377, 0.0
      %v451 = vadd.f32 %v449, %v450
      %v452 = vsel %vm229, %v378, 0.0
      %v453 = vadd.f32 %v451, %v452
      %v454 = vsel %vm229, %v379, 0.0
      %v455 = vadd.f32 %v453, %v454
      %v456 = vsel %vm229, %v380, 0.0
      %v457 = vadd.f32 %v455, %v456
      %v458 = vsel %vm229, %v381, 0.0
      %v459 = vadd.f32 %v457, %v458
      %v460 = vsel %vm229, %v382, 0.0
      %v461 = vadd.f32 %v459, %v460
      %v462 = vsel %vm229, %v383, 0.0
      %v463 = vadd.f32 %v461, %v462
      %v464 = vsel %vm229, %v384, 0.0
      %v465 = vadd.f32 %v463, %v464
      %v466 = vsel %vm229, %v385, 0.0
      %v467 = vadd.f32 %v465, %v466
      %v468 = vsel %vm229, %v386, 0.0
      %v469 = vadd.f32 %v467, %v468
      %v470 = vsel %vm229, %v387, 0.0
      %v471 = vadd.f32 %v469, %v470
      %v472 = vsel %vm229, %v388, 0.0
      %v473 = vadd.f32 %v471, %v472
      %v474 = vsel %vm229, %v389, 0.0
      %v475 = vadd.f32 %v473, %v474
      %v476 = vsel %vm229, %v390, 0.0
      %v477 = vadd.f32 %v475, %v476
      %v478 = vsel %vm229, %v391, 0.0
      %v479 = vadd.f32 %v477, %v478
      %v480 = vsel %vm229, %v392, 0.0
      %v481 = vadd.f32 %v479, %v480
      %v482 = vsel %vm229, %v393, 0.0
      %v483 = vadd.f32 %v481, %v482
      %v484 = vsel %vm229, %v394, 0.0
      %v485 = vadd.f32 %v483, %v484
      %v486 = vsel %vm229, %v395, 0.0
      %v487 = vadd.f32 %v485, %v486
      %v488 = vsel %vm229, %v396, 0.0
      %v489 = vadd.f32 %v487, %v488
      %v490 = vsel %vm229, %v397, 0.0
      %v491 = vadd.f32 %v489, %v490
      %v492 = vsel %vm229, %v398, 0.0
      %v493 = vadd.f32 %v491, %v492
      %v494 = vsel %vm229, %v399, 0.0
      %v495 = vadd.f32 %v493, %v494
      %v496 = vsel %vm229, %v400, 0.0
      %v497 = vadd.f32 %v495, %v496
      %v498 = vsel %vm229, %v401, 0.0
      %v499 = vadd.f32 %v497, %v498
      %v500 = vsel %vm229, %v402, 0.0
      %v501 = vadd.f32 %v499, %v500
      %v502 = vsel %vm229, %v403, 0.0
      %v503 = vadd.f32 %v501, %v502
      %v504 = vsel %vm229, %v404, 0.0
      %v505 = vadd.f32 %v503, %v504
      %v506 = vsel %vm229, %v405, 0.0
      %v507 = vadd.f32 %v505, %v506
      %v508 = vsel %vm229, %v406, 0.0
      %v509 = vadd.f32 %v507, %v508
      %v510 = vsel %vm229, %v407, 0.0
      %v511 = vadd.f32 %v509, %v510
      %v512 = vsel %vm229, %v408, 0.0
      %v513 = vadd.f32 %v511, %v512
      %v514 = vsel %vm229, %v409, 0.0
      %v515 = vadd.f32 %v513, %v514
      %v516 = vsel %vm229, %v410, 0.0
      %v517 = vadd.f32 %v515, %v516
      %v518 = vsel %vm229, %v411, 0.0
      %v519 = vadd.f32 %v517, %v518
      %v520 = vsel %vm229, %v412, 0.0
      %v521 = vadd.f32 %v519, %v520
      %v522 = vsel %vm229, %v413, 0.0
      %v523 = vadd.f32 %v521, %v522
      %v524 = vsel %vm229, %v414, 0.0
      %v525 = vadd.f32 %v523, %v524
      %v526 = vsel %vm229, %v415, 0.0
      %v527 = vadd.f32 %v525, %v526
      %v528 = vsel %vm229, %v416, 0.0
      %v529 = vadd.f32 %v527, %v528
      %v530 = vsel %vm229, %v417, 0.0
      %v531 = vadd.f32 %v529, %v530
      %v532 = vsel %vm229, %v418, 0.0
      %v533 = vadd.f32 %v531, %v532
      %v534 = vsel %vm229, %v419, 0.0
      %v535 = vadd.f32 %v533, %v534
      %v536 = vsel %vm229, %v420, 0.0
      %v537 = vadd.f32 %v535, %v536
      %v538 = vsel %vm229, %v421, 0.0
      %v539 = vadd.f32 %v537, %v538
      %v540 = vsel %vm229, %v422, 0.0
      %v541 = vadd.f32 %v539, %v540
      %v542 = vsel %vm229, %v423, 0.0
      %v543 = vadd.f32 %v541, %v542
      %v544 = vsel %vm229, %v424, 0.0
      %v545 = vadd.f32 %v543, %v544
      %v546 = vsel %vm229, %v425, 0.0
      %v547 = vadd.f32 %v545, %v546
      %v548 = vsel %vm229, %v426, 0.0
      %v549 = vadd.f32 %v547, %v548
      %v550 = vsel %vm229, %v427, 0.0
      %v551 = vadd.f32 %v549, %v550
      %v552 = vsel %vm229, %v428, 0.0
      %v553 = vadd.f32 %v551, %v552
      %v554 = vsel %vm229, %v429, 0.0
      %v555 = vadd.f32 %v553, %v554
      %v556 = vsel %vm229, %v430, 0.0
      %v557 = vadd.f32 %v555, %v556
      %v558 = vrot.slane %v557, 4
      %v559 = vadd.f32 %v557, %v558
      %v560 = vrot.slane %v559, 2
      %v561 = vadd.f32 %v559, %v560
      %v562 = vrot.slane %v561, 1
      %v563 = vadd.f32 %v561, %v562
      %v564 = vadd.f32 %v366, %v563
      %565 = vst.msk [vmem:[%s3 + $0x1] sm:$0x1] %vm364, %v564
      %p566 = scmp.eq.s32.totalorder %s14, 3
      // Predicated region
      $region37: #{can_generator_forward.14} parent=31 // pred_check
        %p567 = pneg %p566
      $region38: #{can_generator_forward.14} parent=31 // pred_check_branch
        %569 = sbr.rel (%p567) target = $region40
      $region39: #{can_generator_forward.14} parent=31 // pred_region
        %v570 = vld [vmem:[%s3] sm:$0x1]
        %v571 = vmul.f32 %v570, 0.00048828125
        %v572 = vld [vmem:[%s3 + $0x1] sm:$0x1]
        %v573 = vmul.f32 %v572, 0.00048828125
        %v574 = vmul.f32 %v571, %v571
        %v575 = vsub.f32 %v573, %v574
        %v576 = vld [vmem:[%s1] sm:$0x1]
        %v577 = vadd.f32 %v575, 1e-05
        %v578 = vrsqrt.pop %v577
        %v579 = vmul.f32 %v576, %v578
        %580 = vst.msk [vmem:[%s3] sm:$0x1] %vm364, %v579
        %v581 = vld [vmem:[%s2] sm:$0x1]
        %v582 = vmul.f32 %v571, %v579
        %v583 = vsub.f32 %v581, %v582
        %584 = vst.msk [vmem:[%s3 + $0x1] sm:$0x1] %vm364, %v583
      $region40: #{can_generator_forward.14} parent=31 // pred_fallthru
        _
      // Predicated region
      $region41: #{can_generator_forward.14} parent=31 // pred_check
        %p585 = pneg %p95
      $region42: #{can_generator_forward.14} parent=31 // pred_check_branch
        %587 = sbr.rel (%p585) target = $region44
      $region43: #{can_generator_forward.14} parent=31 // pred_region
        _
      $region44: #{can_generator_forward.14} parent=31 // pred_fallthru
        _
      // Predicated region
      $region45: #{can_generator_forward.14} parent=31 // pred_check
        %p588 = pneg %p95
      $region46: #{can_generator_forward.14} parent=31 // pred_check_branch
        %590 = sbr.rel (%p588) target = $region48
      $region47: #{can_generator_forward.14} parent=31 // pred_region
        _
      $region48: #{can_generator_forward.14} parent=31 // pred_fallthru
        _
    $region32: #{can_generator_forward.14} parent=5 // pred_fallthru
      _
    %p591 = scmp.le.s32.totalorder 2, %s9
    // Predicated region
    $region49: #{can_generator_forward.14} parent=5 // pred_check
      %p592 = pneg %p591
    $region50: #{can_generator_forward.14} parent=5 // pred_check_branch
      %594 = sbr.rel (%p592) target = $region52
    $region51: #{can_generator_forward.14} parent=5 // pred_region
      %s595 = ssub.s32 %s9, 2
    $region52: #{can_generator_forward.14} parent=5 // pred_fallthru
      _
  $region6: #{can_generator_forward.14} parent=0 // loop_footer
    %s13 = sadd.s32 1, %s9
  $region7: #{can_generator_forward.14} parent=0 // loop_footer_branch
    %8 = sbr.rel target = $region3
  $region8: #{can_generator_forward.14} parent=0 // loop_exit
    _

</llo_original>
